<compile_context>
chip_gen: v7x
topology: tpu7x:2x2x1
jax: 0.10.0
libtpu: 0.0.40
codegen_flags: <defaults>
</compile_context>

<pallas_src>
import functools

import jax
import jax.numpy as jnp
from jax.experimental import pallas as pl
from jax.experimental.pallas import tpu as pltpu


# im2col scratch dtype.  bf16 halves the scatter/memset store traffic (the
# dominant cost); _probe_col_dtype() downgrades to f32 if unsupported.
_COL_DTYPE = jnp.bfloat16


# ---------------------------------------------------------------------------
# Pallas fused 3x3 "same" convolution kernel (NHWC, multi-segment input).
# ---------------------------------------------------------------------------
def _conv3x3_kernel(*refs, H, W, seg_channels, cout, apply_lrelu, res_scale,
                    has_extra, extra_scale):
    n_seg = len(seg_channels)
    x_refs = refs[:n_seg]
    idx = n_seg
    extra_ref = refs[idx] if has_extra else None
    idx += 1 if has_extra else 0
    w_ref = refs[idx]            # (9 * sum(Cin), Cout) bf16 weight slab
    b_ref = refs[idx + 1]        # (1, Cout) f32 bias
    o_ref = refs[idx + 2]        # (1, H, W, Cout)
    col_ref = refs[idx + 3]      # (H, W, 9 * sum(Cin)) im2col scratch

    c_total = sum(seg_channels)
    k_dim = 9 * c_total

    # Zero-fill once per grid step: whatever the scatter below leaves untouched
    # is the implicit "same" zero padding at the image border.  (Full memset is
    # kept -- it is megacore-safe and the scratch is bf16, so it is cheap.)
    col_ref[...] = jnp.zeros(col_ref.shape, col_ref.dtype)

    # Scatter the 9 shifted taps of every input segment into the im2col
    # scratch (all offsets static; chunks never cross a 128-lane tile for the
    # power-of-two segment widths used by RRDBNet).
    seg_off = 0
    for s in range(n_seg):
        c_s = seg_channels[s]
        xs = x_refs[s][0].astype(col_ref.dtype)          # (H, W, C_s)
        for t in range(9):
            dy, dx = t // 3 - 1, t % 3 - 1
            di0, di1 = max(0, -dy), H - max(0, dy)       # dest rows
            dj0, dj1 = max(0, -dx), W - max(0, dx)       # dest cols
            cb = 9 * seg_off + t * c_s                   # lane offset of chunk
            col_ref[di0:di1, dj0:dj1, cb:cb + c_s] = (
                xs[di0 + dy:di1 + dy, dj0 + dx:dj1 + dx, :])
        seg_off += c_s

    # One fused MXU contraction: K = 9 * sum(Cin), bf16 x bf16 -> f32 acc.
    cols = col_ref[...].reshape(H * W, k_dim).astype(jnp.bfloat16)
    acc = jnp.dot(cols, w_ref[...], preferred_element_type=jnp.float32)
    acc = acc + b_ref[0, :]
    if apply_lrelu:
        acc = jnp.where(acc >= 0, acc, 0.2 * acc)
    if res_scale is not None:
        # Fused dense-block tail: out = res_scale * conv(...) + x (segment 0).
        res = x_refs[0][0].astype(jnp.float32).reshape(H * W, cout)
        acc = acc * res_scale + res
    if has_extra:
        # Fused outer residual: out = extra_scale * out + extra
        # (RRDB tail "out*0.2 + x" or trunk skip "feat + body_feat").
        extra = extra_ref[0].astype(jnp.float32).reshape(H * W, cout)
        acc = acc * extra_scale + extra
    o_ref[...] = acc.reshape(1, H, W, cout).astype(o_ref.dtype)


def conv3x3(xs, w_slab, b, *, apply_lrelu=False, res_scale=None,
            extra_res=None, extra_scale=1.0, out_dtype=jnp.bfloat16):
    """Fused 3x3 stride-1 'same' conv over virtually channel-concatenated inputs.

    xs:        list of NHWC arrays (the concat segments), identical N/H/W.
    w_slab:    (9 * sum(Cin_s), Cout) bf16 weight, rows segment-major then
               (kh, kw, cin-within-segment) -- see _make_conv_params.
    b:         (Cout,) f32 bias.
    res_scale: if set, fuses out = res_scale * conv(...) + xs[0].
    extra_res: if set, fuses out = extra_scale * out + extra_res afterwards.
    """
    if not isinstance(xs, (list, tuple)):
        xs = [xs]
    xs = [x.astype(jnp.bfloat16) for x in xs]
    N, H, W, _ = xs[0].shape
    seg_channels = tuple(int(x.shape[-1]) for x in xs)
    c_total = sum(seg_channels)
    cout = int(w_slab.shape[-1])
    assert int(w_slab.shape[0]) == 9 * c_total
    if res_scale is not None:
        assert seg_channels[0] == cout, "fused residual needs Cout == C(seg0)"
    has_extra = extra_res is not None
    if has_extra:
        assert extra_res.shape == (N, H, W, cout)
        extra_res = extra_res.astype(jnp.bfloat16)

    kernel = functools.partial(
        _conv3x3_kernel, H=H, W=W, seg_channels=seg_channels, cout=cout,
        apply_lrelu=apply_lrelu, res_scale=res_scale,
        has_extra=has_extra, extra_scale=extra_scale)

    in_specs = [pl.BlockSpec((1, H, W, c), lambda n: (n, 0, 0, 0))
                for c in seg_channels]
    operands = list(xs)
    if has_extra:
        in_specs.append(pl.BlockSpec((1, H, W, cout), lambda n: (n, 0, 0, 0)))
        operands.append(extra_res)
    in_specs.append(pl.BlockSpec((9 * c_total, cout), lambda n: (0, 0)))
    in_specs.append(pl.BlockSpec((1, cout), lambda n: (0, 0)))
    operands.append(w_slab.astype(jnp.bfloat16))
    operands.append(b.reshape(1, cout).astype(jnp.float32))

    return pl.pallas_call(
        kernel,
        out_shape=jax.ShapeDtypeStruct((N, H, W, cout), out_dtype),
        grid_spec=pltpu.PrefetchScalarGridSpec(
            num_scalar_prefetch=0,
            grid=(N,),
            in_specs=in_specs,
            out_specs=pl.BlockSpec((1, H, W, cout), lambda n: (n, 0, 0, 0)),
            scratch_shapes=[pltpu.VMEM((H, W, 9 * c_total), _COL_DTYPE)],
        ),
        compiler_params=pltpu.CompilerParams(
            dimension_semantics=("parallel",),
            vmem_limit_bytes=48 * 1024 * 1024,   # headroom for v7x (64 MiB/TC)
        ),
    )(*operands)


# ---------------------------------------------------------------------------
# Parameter construction (deterministic, mirrors the PyTorch conv shapes).
# ---------------------------------------------------------------------------
def _make_conv_params(key, seg_channels, c_out, w_scale=1.0):
    """Returns (w_slab_bf16, bias_f32).  Slab rows: for each segment s (in
    concat order), rows (kh, kw, cin-within-segment) row-major — matching the
    kernel's im2col column layout."""
    kw_key, kb_key = jax.random.split(key)
    c_in = sum(seg_channels)
    w = jax.random.normal(kw_key, (3, 3, c_in, c_out), jnp.float32) * 0.05 * w_scale
    b = jax.random.normal(kb_key, (c_out,), jnp.float32) * 0.01
    parts, off = [], 0
    for c in seg_channels:
        parts.append(w[:, :, off:off + c, :].reshape(9 * c, c_out))
        off += c
    w_slab = jnp.concatenate(parts, axis=0).astype(jnp.bfloat16)
    return (w_slab, b)


def _slab_to_hwio(w_slab, seg_channels):
    """Invert the slab layout back to a (3, 3, sum(Cin), Cout) HWIO f32 weight."""
    c_out = w_slab.shape[-1]
    parts, off = [], 0
    for c in seg_channels:
        parts.append(w_slab[off:off + 9 * c, :].astype(jnp.float32)
                     .reshape(3, 3, c, c_out))
        off += 9 * c
    return jnp.concatenate(parts, axis=2)


def _make_rdb_params(key, num_feat, num_grow_ch):
    keys = jax.random.split(key, 5)
    params = []
    for i in range(5):
        segs = tuple([num_feat] + [num_grow_ch] * i)
        c_out = num_grow_ch if i < 4 else num_feat
        # default_init_weights(..., 0.1) -> scale 0.1 on the dense-block convs.
        params.append(_make_conv_params(keys[i], segs, c_out, w_scale=0.1))
    return params


def make_rrdbnet_params(key, num_in_ch, num_out_ch, scale, num_feat,
                        num_block, num_grow_ch):
    if scale == 2:
        num_in_ch = num_in_ch * 4
    elif scale == 1:
        num_in_ch = num_in_ch * 16
    keys = jax.random.split(key, 7 + num_block)
    params = {
        "conv_first": _make_conv_params(keys[0], (num_in_ch,), num_feat),
        "conv_body": _make_conv_params(keys[1], (num_feat,), num_feat),
        "conv_up1": _make_conv_params(keys[2], (num_feat,), num_feat),
        "conv_up2": _make_conv_params(keys[3], (num_feat,), num_feat),
        "conv_hr": _make_conv_params(keys[4], (num_feat,), num_feat),
        "conv_last": _make_conv_params(keys[5], (num_feat,), num_out_ch),
        "body": [],
    }
    for i in range(num_block):
        rk = jax.random.split(keys[7 + i], 3)
        params["body"].append(
            [_make_rdb_params(rk[j], num_feat, num_grow_ch) for j in range(3)])
    return params


# ---------------------------------------------------------------------------
# Forward pass (plain-JAX glue around the Pallas conv kernel).
# ---------------------------------------------------------------------------
def residual_dense_block(x, p, extra_res=None, extra_scale=1.0):
    x1 = conv3x3([x], *p[0], apply_lrelu=True)
    x2 = conv3x3([x, x1], *p[1], apply_lrelu=True)
    x3 = conv3x3([x, x1, x2], *p[2], apply_lrelu=True)
    x4 = conv3x3([x, x1, x2, x3], *p[3], apply_lrelu=True)
    # conv5 with the "x5 * 0.2 + x" residual (and optionally an outer residual)
    # fused into the kernel.
    return conv3x3([x, x1, x2, x3, x4], *p[4], res_scale=0.2,
                   extra_res=extra_res, extra_scale=extra_scale)


def rrdb(x, p):
    out = residual_dense_block(x, p[0])
    out = residual_dense_block(out, p[1])
    # The RRDB tail "out * 0.2 + x" is fused into the last RDB's conv5 kernel.
    return residual_dense_block(out, p[2], extra_res=x, extra_scale=0.2)


def pixel_unshuffle_nhwc(x, s):
    n, h, w, c = x.shape
    x = x.reshape(n, h // s, s, w // s, s, c)
    # match torch channel ordering: (b, c, s, s, h/s, w/s) -> channels c*s*s
    x = jnp.transpose(x, (0, 1, 3, 5, 2, 4)).reshape(n, h // s, w // s, c * s * s)
    return x


def nearest_up2(x):
    return jnp.repeat(jnp.repeat(x, 2, axis=1), 2, axis=2)


def rrdbnet_forward(x_nchw, params, scale=4):
    x = jnp.transpose(x_nchw, (0, 2, 3, 1)).astype(jnp.bfloat16)   # -> NHWC bf16
    if scale == 2:
        x = pixel_unshuffle_nhwc(x, 2)
    elif scale == 1:
        x = pixel_unshuffle_nhwc(x, 4)
    feat = conv3x3([x], *params["conv_first"])
    body = feat
    for bp in params["body"]:
        body = rrdb(body, bp)
    # conv_body with the trunk skip "feat + body_feat" fused into the kernel.
    feat = conv3x3([body], *params["conv_body"], extra_res=feat, extra_scale=1.0)
    feat = conv3x3([nearest_up2(feat)], *params["conv_up1"], apply_lrelu=True)
    feat = conv3x3([nearest_up2(feat)], *params["conv_up2"], apply_lrelu=True)
    feat = conv3x3([feat], *params["conv_hr"], apply_lrelu=True)
    out = conv3x3([feat], *params["conv_last"], out_dtype=jnp.float32)
    return jnp.transpose(out, (0, 3, 1, 2))   # -> NCHW f32


# ---------------------------------------------------------------------------
# Reference (lax.conv) helper for kernel validation + bf16-scratch probe.
# ---------------------------------------------------------------------------
def _conv_ref(x_list, w_slab, b, seg_channels, apply_lrelu=False, res_scale=None,
              extra=None, extra_scale=1.0):
    w_hwio = _slab_to_hwio(w_slab, seg_channels)
    x = jnp.concatenate([xi.astype(jnp.float32) for xi in x_list], axis=-1)
    y = jax.lax.conv_general_dilated(
        x, w_hwio, window_strides=(1, 1), padding="SAME",
        dimension_numbers=("NHWC", "HWIO", "NHWC"),
        precision=jax.lax.Precision.HIGHEST)
    y = y + b
    if apply_lrelu:
        y = jnp.where(y >= 0, y, 0.2 * y)
    if res_scale is not None:
        y = y * res_scale + x_list[0].astype(jnp.float32)
    if extra is not None:
        y = y * extra_scale + extra.astype(jnp.float32)
    return y


def _probe_col_dtype():
    """Validate the bf16 im2col scratch; fall back to the known-good f32
    scratch if this Mosaic build can't lower the unaligned packed stores."""
    global _COL_DTYPE
    try:
        k = jax.random.PRNGKey(123)
        seg_ch = (16, 8)
        segs = [jax.random.normal(jax.random.fold_in(k, i), (1, 16, 16, c),
                                  jnp.float32).astype(jnp.bfloat16)
                for i, c in enumerate(seg_ch)]
        extra = jax.random.normal(jax.random.fold_in(k, 7), (1, 16, 16, 16),
                                  jnp.float32).astype(jnp.bfloat16)
        w_slab, bias = _make_conv_params(jax.random.fold_in(k, 9), seg_ch, 16)
        got = conv3x3(segs, w_slab, bias, apply_lrelu=True, res_scale=0.2,
                      extra_res=extra, extra_scale=0.2, out_dtype=jnp.float32)
        ref = _conv_ref(segs, w_slab, bias, seg_ch, apply_lrelu=True,
                        res_scale=0.2, extra=extra, extra_scale=0.2)
        if not bool(jnp.allclose(got, ref, atol=1e-2, rtol=1e-2)):
            _COL_DTYPE = jnp.float32
    except Exception:
        _COL_DTYPE = jnp.float32


if __name__ == "__main__":
    _probe_col_dtype()

    key = jax.random.PRNGKey(0)
    k_x, k_p, k_c1, k_c2, k_c3 = jax.random.split(key, 5)

    # Small synthetic config (PyTorch defaults are 64 feat / 23 blocks / 32 grow).
    num_in_ch, num_out_ch = 3, 3
    scale, num_feat, num_block, num_grow_ch = 4, 32, 2, 16

    x = jax.random.normal(k_x, (2, num_in_ch, 16, 16), jnp.float32)   # NCHW
    params = make_rrdbnet_params(k_p, num_in_ch, num_out_ch, scale,
                                 num_feat, num_block, num_grow_ch)

    # --- Check 1: single-segment conv + LeakyReLU against lax.conv. ---
    xc = jax.random.normal(
        k_c1, (2, 16, 16, num_feat), jnp.float32).astype(jnp.bfloat16)
    w_slab, bias = params["conv_body"]
    got = conv3x3([xc], w_slab, bias, apply_lrelu=True, out_dtype=jnp.float32)
    ref = _conv_ref([xc], w_slab, bias, (num_feat,), apply_lrelu=True)
    assert jnp.allclose(got, ref, atol=1e-2, rtol=1e-2), \
        "conv kernel mismatch (1 segment)"

    # --- Check 2: 5-segment virtual concat + fused RDB tail + fused RRDB tail. ---
    seg_ch = [num_feat] + [num_grow_ch] * 4
    seg_keys = jax.random.split(k_c2, len(seg_ch))
    segs = [jax.random.normal(k, (2, 16, 16, c), jnp.float32).astype(jnp.bfloat16)
            for k, c in zip(seg_keys, seg_ch)]
    extra = jax.random.normal(k_c3, (2, 16, 16, num_feat),
                              jnp.float32).astype(jnp.bfloat16)
    w_slab5, bias5 = params["body"][0][0][4]
    got = conv3x3(segs, w_slab5, bias5, res_scale=0.2,
                  extra_res=extra, extra_scale=0.2, out_dtype=jnp.float32)
    ref = _conv_ref(segs, w_slab5, bias5, tuple(seg_ch), res_scale=0.2,
                    extra=extra, extra_scale=0.2)
    assert jnp.allclose(got, ref, atol=1e-2, rtol=1e-2), \
        "conv kernel mismatch (5 segments + fused residuals)"

    # --- Full forward. ---
    fwd = jax.jit(functools.partial(rrdbnet_forward, scale=scale))
    out = jax.block_until_ready(fwd(x, params))
    assert out.shape == (2, num_out_ch, 16 * scale, 16 * scale), out.shape
    assert out.dtype == jnp.float32
    print("KERNEL_OK")
</pallas_src>

<mosaic_0001>
module attributes {stable_mosaic.version = 11 : i64} {
  func.func @_conv3x3_kernel(%arg0: i32, %arg1: memref<1x16x16x16xbf16, #tpu.memory_space<vmem>>, %arg2: memref<1x16x16x8xbf16, #tpu.memory_space<vmem>>, %arg3: memref<1x16x16x16xbf16, #tpu.memory_space<vmem>>, %arg4: memref<216x16xbf16, #tpu.memory_space<vmem>>, %arg5: memref<1x16xf32, #tpu.memory_space<vmem>>, %arg6: memref<1x16x16x16xf32, #tpu.memory_space<vmem>>, %arg7: memref<16x16x216xbf16, #tpu.memory_space<vmem>>) attributes {dimension_semantics = [#tpu.dimension_semantics<parallel>], iteration_bounds = array<i64: 1>, scalar_prefetch = 0 : i64, scratch_operands = 1 : i64, tpu.core_type = #tpu.core_type<tc>, window_params = [{transform_indices = @transform_0, window_bounds = array<i64: 1, 16, 16, 16>}, {transform_indices = @transform_1, window_bounds = array<i64: 1, 16, 16, 8>}, {transform_indices = @transform_2, window_bounds = array<i64: 1, 16, 16, 16>}, {pipeline_mode = #tpu.pipeline_mode<synchronous>, transform_indices = @transform_3, window_bounds = array<i64: 216, 16>}, {pipeline_mode = #tpu.pipeline_mode<synchronous>, transform_indices = @transform_4, window_bounds = array<i64: 1, 16>}, {transform_indices = @transform_5, window_bounds = array<i64: 1, 16, 16, 16>}]} {
    %cst = arith.constant 0.000000e+00 : bf16
    %0 = vector.broadcast %cst : bf16 to vector<16x16x216xbf16>
    %c0 = arith.constant 0 : index
    %c0_0 = arith.constant 0 : index
    %c0_1 = arith.constant 0 : index
    %1 = vector.load %arg7[%c0, %c0_0, %c0_1] : memref<16x16x216xbf16, #tpu.memory_space<vmem>>, vector<16x16x216xbf16>
    tpu.vector_store %arg7[%c0, %c0_0, %c0_1], %0 {strides = array<i32>} : memref<16x16x216xbf16, #tpu.memory_space<vmem>>, vector<16x16x216xbf16>,
    %c0_2 = arith.constant 0 : index
    %c0_3 = arith.constant 0 : index
    %c0_4 = arith.constant 0 : index
    %c0_5 = arith.constant 0 : index
    %2 = vector.load %arg1[%c0_2, %c0_3, %c0_4, %c0_5] : memref<1x16x16x16xbf16, #tpu.memory_space<vmem>>, vector<1x16x16x16xbf16>
    %3 = vector.shape_cast %2 : vector<1x16x16x16xbf16> to vector<16x16x16xbf16>
    %4 = vector.extract_strided_slice %3 {offsets = [0, 0, 0], sizes = [15, 15, 16], strides = [1, 1, 1]} : vector<16x16x16xbf16> to vector<15x15x16xbf16>
    %c1 = arith.constant 1 : index
    %c1_6 = arith.constant 1 : index
    %c0_7 = arith.constant 0 : index
    %5 = vector.load %arg7[%c1, %c1_6, %c0_7] : memref<16x16x216xbf16, #tpu.memory_space<vmem>>, vector<15x15x16xbf16>
    tpu.vector_store %arg7[%c1, %c1_6, %c0_7], %4 {strides = array<i32>} : memref<16x16x216xbf16, #tpu.memory_space<vmem>>, vector<15x15x16xbf16>,
    %6 = vector.extract_strided_slice %3 {offsets = [0, 0, 0], sizes = [15, 16, 16], strides = [1, 1, 1]} : vector<16x16x16xbf16> to vector<15x16x16xbf16>
    %c1_8 = arith.constant 1 : index
    %c0_9 = arith.constant 0 : index
    %c16 = arith.constant 16 : index
    %7 = vector.load %arg7[%c1_8, %c0_9, %c16] : memref<16x16x216xbf16, #tpu.memory_space<vmem>>, vector<15x16x16xbf16>
    tpu.vector_store %arg7[%c1_8, %c0_9, %c16], %6 {strides = array<i32>} : memref<16x16x216xbf16, #tpu.memory_space<vmem>>, vector<15x16x16xbf16>,
    %8 = vector.extract_strided_slice %3 {offsets = [0, 1, 0], sizes = [15, 15, 16], strides = [1, 1, 1]} : vector<16x16x16xbf16> to vector<15x15x16xbf16>
    %c1_10 = arith.constant 1 : index
    %c0_11 = arith.constant 0 : index
    %c32 = arith.constant 32 : index
    %9 = vector.load %arg7[%c1_10, %c0_11, %c32] : memref<16x16x216xbf16, #tpu.memory_space<vmem>>, vector<15x15x16xbf16>
    tpu.vector_store %arg7[%c1_10, %c0_11, %c32], %8 {strides = array<i32>} : memref<16x16x216xbf16, #tpu.memory_space<vmem>>, vector<15x15x16xbf16>,
    %10 = vector.extract_strided_slice %3 {offsets = [0, 0, 0], sizes = [16, 15, 16], strides = [1, 1, 1]} : vector<16x16x16xbf16> to vector<16x15x16xbf16>
    %c0_12 = arith.constant 0 : index
    %c1_13 = arith.constant 1 : index
    %c48 = arith.constant 48 : index
    %11 = vector.load %arg7[%c0_12, %c1_13, %c48] : memref<16x16x216xbf16, #tpu.memory_space<vmem>>, vector<16x15x16xbf16>
    tpu.vector_store %arg7[%c0_12, %c1_13, %c48], %10 {strides = array<i32>} : memref<16x16x216xbf16, #tpu.memory_space<vmem>>, vector<16x15x16xbf16>,
    %c0_14 = arith.constant 0 : index
    %c0_15 = arith.constant 0 : index
    %c64 = arith.constant 64 : index
    %12 = vector.load %arg7[%c0_14, %c0_15, %c64] : memref<16x16x216xbf16, #tpu.memory_space<vmem>>, vector<16x16x16xbf16>
    tpu.vector_store %arg7[%c0_14, %c0_15, %c64], %3 {strides = array<i32>} : memref<16x16x216xbf16, #tpu.memory_space<vmem>>, vector<16x16x16xbf16>,
    %13 = vector.extract_strided_slice %3 {offsets = [0, 1, 0], sizes = [16, 15, 16], strides = [1, 1, 1]} : vector<16x16x16xbf16> to vector<16x15x16xbf16>
    %c0_16 = arith.constant 0 : index
    %c0_17 = arith.constant 0 : index
    %c80 = arith.constant 80 : index
    %14 = vector.load %arg7[%c0_16, %c0_17, %c80] : memref<16x16x216xbf16, #tpu.memory_space<vmem>>, vector<16x15x16xbf16>
    tpu.vector_store %arg7[%c0_16, %c0_17, %c80], %13 {strides = array<i32>} : memref<16x16x216xbf16, #tpu.memory_space<vmem>>, vector<16x15x16xbf16>,
    %15 = vector.extract_strided_slice %3 {offsets = [1, 0, 0], sizes = [15, 15, 16], strides = [1, 1, 1]} : vector<16x16x16xbf16> to vector<15x15x16xbf16>
    %c0_18 = arith.constant 0 : index
    %c1_19 = arith.constant 1 : index
    %c96 = arith.constant 96 : index
    %16 = vector.load %arg7[%c0_18, %c1_19, %c96] : memref<16x16x216xbf16, #tpu.memory_space<vmem>>, vector<15x15x16xbf16>
    tpu.vector_store %arg7[%c0_18, %c1_19, %c96], %15 {strides = array<i32>} : memref<16x16x216xbf16, #tpu.memory_space<vmem>>, vector<15x15x16xbf16>,
    %17 = vector.extract_strided_slice %3 {offsets = [1, 0, 0], sizes = [15, 16, 16], strides = [1, 1, 1]} : vector<16x16x16xbf16> to vector<15x16x16xbf16>
    %c0_20 = arith.constant 0 : index
    %c0_21 = arith.constant 0 : index
    %c112 = arith.constant 112 : index
    %18 = vector.load %arg7[%c0_20, %c0_21, %c112] : memref<16x16x216xbf16, #tpu.memory_space<vmem>>, vector<15x16x16xbf16>
    tpu.vector_store %arg7[%c0_20, %c0_21, %c112], %17 {strides = array<i32>} : memref<16x16x216xbf16, #tpu.memory_space<vmem>>, vector<15x16x16xbf16>,
    %19 = vector.extract_strided_slice %3 {offsets = [1, 1, 0], sizes = [15, 15, 16], strides = [1, 1, 1]} : vector<16x16x16xbf16> to vector<15x15x16xbf16>
    %c0_22 = arith.constant 0 : index
    %c0_23 = arith.constant 0 : index
    %c128 = arith.constant 128 : index
    %20 = vector.load %arg7[%c0_22, %c0_23, %c128] : memref<16x16x216xbf16, #tpu.memory_space<vmem>>, vector<15x15x16xbf16>
    tpu.vector_store %arg7[%c0_22, %c0_23, %c128], %19 {strides = array<i32>} : memref<16x16x216xbf16, #tpu.memory_space<vmem>>, vector<15x15x16xbf16>,
    %c0_24 = arith.constant 0 : index
    %c0_25 = arith.constant 0 : index
    %c0_26 = arith.constant 0 : index
    %c0_27 = arith.constant 0 : index
    %21 = vector.load %arg2[%c0_24, %c0_25, %c0_26, %c0_27] : memref<1x16x16x8xbf16, #tpu.memory_space<vmem>>, vector<1x16x16x8xbf16>
    %22 = vector.shape_cast %21 : vector<1x16x16x8xbf16> to vector<16x16x8xbf16>
    %23 = vector.extract_strided_slice %22 {offsets = [0, 0, 0], sizes = [15, 15, 8], strides = [1, 1, 1]} : vector<16x16x8xbf16> to vector<15x15x8xbf16>
    %c1_28 = arith.constant 1 : index
    %c1_29 = arith.constant 1 : index
    %c144 = arith.constant 144 : index
    %24 = vector.load %arg7[%c1_28, %c1_29, %c144] : memref<16x16x216xbf16, #tpu.memory_space<vmem>>, vector<15x15x8xbf16>
    tpu.vector_store %arg7[%c1_28, %c1_29, %c144], %23 {strides = array<i32>} : memref<16x16x216xbf16, #tpu.memory_space<vmem>>, vector<15x15x8xbf16>,
    %25 = vector.extract_strided_slice %22 {offsets = [0, 0, 0], sizes = [15, 16, 8], strides = [1, 1, 1]} : vector<16x16x8xbf16> to vector<15x16x8xbf16>
    %c1_30 = arith.constant 1 : index
    %c0_31 = arith.constant 0 : index
    %c152 = arith.constant 152 : index
    %26 = vector.load %arg7[%c1_30, %c0_31, %c152] : memref<16x16x216xbf16, #tpu.memory_space<vmem>>, vector<15x16x8xbf16>
    tpu.vector_store %arg7[%c1_30, %c0_31, %c152], %25 {strides = array<i32>} : memref<16x16x216xbf16, #tpu.memory_space<vmem>>, vector<15x16x8xbf16>,
    %27 = vector.extract_strided_slice %22 {offsets = [0, 1, 0], sizes = [15, 15, 8], strides = [1, 1, 1]} : vector<16x16x8xbf16> to vector<15x15x8xbf16>
    %c1_32 = arith.constant 1 : index
    %c0_33 = arith.constant 0 : index
    %c160 = arith.constant 160 : index
    %28 = vector.load %arg7[%c1_32, %c0_33, %c160] : memref<16x16x216xbf16, #tpu.memory_space<vmem>>, vector<15x15x8xbf16>
    tpu.vector_store %arg7[%c1_32, %c0_33, %c160], %27 {strides = array<i32>} : memref<16x16x216xbf16, #tpu.memory_space<vmem>>, vector<15x15x8xbf16>,
    %29 = vector.extract_strided_slice %22 {offsets = [0, 0, 0], sizes = [16, 15, 8], strides = [1, 1, 1]} : vector<16x16x8xbf16> to vector<16x15x8xbf16>
    %c0_34 = arith.constant 0 : index
    %c1_35 = arith.constant 1 : index
    %c168 = arith.constant 168 : index
    %30 = vector.load %arg7[%c0_34, %c1_35, %c168] : memref<16x16x216xbf16, #tpu.memory_space<vmem>>, vector<16x15x8xbf16>
    tpu.vector_store %arg7[%c0_34, %c1_35, %c168], %29 {strides = array<i32>} : memref<16x16x216xbf16, #tpu.memory_space<vmem>>, vector<16x15x8xbf16>,
    %c0_36 = arith.constant 0 : index
    %c0_37 = arith.constant 0 : index
    %c176 = arith.constant 176 : index
    %31 = vector.load %arg7[%c0_36, %c0_37, %c176] : memref<16x16x216xbf16, #tpu.memory_space<vmem>>, vector<16x16x8xbf16>
    tpu.vector_store %arg7[%c0_36, %c0_37, %c176], %22 {strides = array<i32>} : memref<16x16x216xbf16, #tpu.memory_space<vmem>>, vector<16x16x8xbf16>,
    %32 = vector.extract_strided_slice %22 {offsets = [0, 1, 0], sizes = [16, 15, 8], strides = [1, 1, 1]} : vector<16x16x8xbf16> to vector<16x15x8xbf16>
    %c0_38 = arith.constant 0 : index
    %c0_39 = arith.constant 0 : index
    %c184 = arith.constant 184 : index
    %33 = vector.load %arg7[%c0_38, %c0_39, %c184] : memref<16x16x216xbf16, #tpu.memory_space<vmem>>, vector<16x15x8xbf16>
    tpu.vector_store %arg7[%c0_38, %c0_39, %c184], %32 {strides = array<i32>} : memref<16x16x216xbf16, #tpu.memory_space<vmem>>, vector<16x15x8xbf16>,
    %34 = vector.extract_strided_slice %22 {offsets = [1, 0, 0], sizes = [15, 15, 8], strides = [1, 1, 1]} : vector<16x16x8xbf16> to vector<15x15x8xbf16>
    %c0_40 = arith.constant 0 : index
    %c1_41 = arith.constant 1 : index
    %c192 = arith.constant 192 : index
    %35 = vector.load %arg7[%c0_40, %c1_41, %c192] : memref<16x16x216xbf16, #tpu.memory_space<vmem>>, vector<15x15x8xbf16>
    tpu.vector_store %arg7[%c0_40, %c1_41, %c192], %34 {strides = array<i32>} : memref<16x16x216xbf16, #tpu.memory_space<vmem>>, vector<15x15x8xbf16>,
    %36 = vector.extract_strided_slice %22 {offsets = [1, 0, 0], sizes = [15, 16, 8], strides = [1, 1, 1]} : vector<16x16x8xbf16> to vector<15x16x8xbf16>
    %c0_42 = arith.constant 0 : index
    %c0_43 = arith.constant 0 : index
    %c200 = arith.constant 200 : index
    %37 = vector.load %arg7[%c0_42, %c0_43, %c200] : memref<16x16x216xbf16, #tpu.memory_space<vmem>>, vector<15x16x8xbf16>
    tpu.vector_store %arg7[%c0_42, %c0_43, %c200], %36 {strides = array<i32>} : memref<16x16x216xbf16, #tpu.memory_space<vmem>>, vector<15x16x8xbf16>,
    %38 = vector.extract_strided_slice %22 {offsets = [1, 1, 0], sizes = [15, 15, 8], strides = [1, 1, 1]} : vector<16x16x8xbf16> to vector<15x15x8xbf16>
    %c0_44 = arith.constant 0 : index
    %c0_45 = arith.constant 0 : index
    %c208 = arith.constant 208 : index
    %39 = vector.load %arg7[%c0_44, %c0_45, %c208] : memref<16x16x216xbf16, #tpu.memory_space<vmem>>, vector<15x15x8xbf16>
    tpu.vector_store %arg7[%c0_44, %c0_45, %c208], %38 {strides = array<i32>} : memref<16x16x216xbf16, #tpu.memory_space<vmem>>, vector<15x15x8xbf16>,
    %c0_46 = arith.constant 0 : index
    %c0_47 = arith.constant 0 : index
    %c0_48 = arith.constant 0 : index
    %40 = vector.load %arg7[%c0_46, %c0_47, %c0_48] : memref<16x16x216xbf16, #tpu.memory_space<vmem>>, vector<16x16x216xbf16>
    %41 = vector.shape_cast %40 : vector<16x16x216xbf16> to vector<256x216xbf16>
    %c0_49 = arith.constant 0 : index
    %c0_50 = arith.constant 0 : index
    %42 = vector.load %arg4[%c0_49, %c0_50] : memref<216x16xbf16, #tpu.memory_space<vmem>>, vector<216x16xbf16>
    %cst_51 = arith.constant dense<0.000000e+00> : vector<256x16xf32>
    %43 = tpu.matmul %41, %42, %cst_51 {dimension_numbers = #tpu.dot_dimension_numbers<[1], [0], [0], [1], [0, 0, 1, 1], [], []>} : vector<256x216xbf16>, vector<216x16xbf16>, vector<256x16xf32> -> vector<256x16xf32>
    %c0_52 = arith.constant 0 : index
    %c0_53 = arith.constant 0 : index
    %44 = vector.load %arg5[%c0_52, %c0_53] : memref<1x16xf32, #tpu.memory_space<vmem>>, vector<1x16xf32>
    %45 = vector.shape_cast %44 : vector<1x16xf32> to vector<16xf32>
    %46 = vector.shape_cast %45 : vector<16xf32> to vector<1x16xf32>
    %47 = vector.broadcast %46 : vector<1x16xf32> to vector<256x16xf32>
    %48 = arith.addf %43, %47 : vector<256x16xf32>
    %cst_54 = arith.constant 0.000000e+00 : f32
    %49 = vector.broadcast %cst_54 : f32 to vector<256x16xf32>
    %50 = arith.cmpf oge, %48, %49 : vector<256x16xf32>
    %cst_55 = arith.constant 2.000000e-01 : f32
    %51 = vector.broadcast %cst_55 : f32 to vector<256x16xf32>
    %52 = arith.mulf %51, %48 : vector<256x16xf32>
    %53 = arith.select %50, %48, %52 : vector<256x16xi1>, vector<256x16xf32>
    %c0_56 = arith.constant 0 : index
    %c0_57 = arith.constant 0 : index
    %c0_58 = arith.constant 0 : index
    %c0_59 = arith.constant 0 : index
    %54 = vector.load %arg1[%c0_56, %c0_57, %c0_58, %c0_59] : memref<1x16x16x16xbf16, #tpu.memory_space<vmem>>, vector<1x16x16x16xbf16>
    %55 = vector.shape_cast %54 : vector<1x16x16x16xbf16> to vector<16x16x16xbf16>
    %56 = arith.extf %55 : vector<16x16x16xbf16> to vector<16x16x16xf32>
    %57 = vector.shape_cast %56 : vector<16x16x16xf32> to vector<256x16xf32>
    %cst_60 = arith.constant 2.000000e-01 : f32
    %58 = vector.broadcast %cst_60 : f32 to vector<256x16xf32>
    %59 = arith.mulf %53, %58 : vector<256x16xf32>
    %60 = arith.addf %59, %57 : vector<256x16xf32>
    %c0_61 = arith.constant 0 : index
    %c0_62 = arith.constant 0 : index
    %c0_63 = arith.constant 0 : index
    %c0_64 = arith.constant 0 : index
    %61 = vector.load %arg3[%c0_61, %c0_62, %c0_63, %c0_64] : memref<1x16x16x16xbf16, #tpu.memory_space<vmem>>, vector<1x16x16x16xbf16>
    %62 = vector.shape_cast %61 : vector<1x16x16x16xbf16> to vector<16x16x16xbf16>
    %63 = arith.extf %62 : vector<16x16x16xbf16> to vector<16x16x16xf32>
    %64 = vector.shape_cast %63 : vector<16x16x16xf32> to vector<256x16xf32>
    %cst_65 = arith.constant 2.000000e-01 : f32
    %65 = vector.broadcast %cst_65 : f32 to vector<256x16xf32>
    %66 = arith.mulf %60, %65 : vector<256x16xf32>
    %67 = arith.addf %66, %64 : vector<256x16xf32>
    %68 = vector.shape_cast %67 : vector<256x16xf32> to vector<1x16x16x16xf32>
    %c0_66 = arith.constant 0 : index
    %c0_67 = arith.constant 0 : index
    %c0_68 = arith.constant 0 : index
    %c0_69 = arith.constant 0 : index
    %69 = vector.load %arg6[%c0_66, %c0_67, %c0_68, %c0_69] : memref<1x16x16x16xf32, #tpu.memory_space<vmem>>, vector<1x16x16x16xf32>
    tpu.vector_store %arg6[%c0_66, %c0_67, %c0_68, %c0_69], %68 {strides = array<i32>} : memref<1x16x16x16xf32, #tpu.memory_space<vmem>>, vector<1x16x16x16xf32>,
    return
  }
  func.func @transform_0(%arg0: i32) -> (i32, i32, i32, i32) {
    %c0_i32 = arith.constant 0 : i32
    %c0_i32_0 = arith.constant 0 : i32
    %c0_i32_1 = arith.constant 0 : i32
    %c0_i32_2 = arith.constant 0 : i32
    return %arg0, %c0_i32, %c0_i32_0, %c0_i32_1 : i32, i32, i32, i32
  }
  func.func @transform_1(%arg0: i32) -> (i32, i32, i32, i32) {
    %c0_i32 = arith.constant 0 : i32
    %c0_i32_0 = arith.constant 0 : i32
    %c0_i32_1 = arith.constant 0 : i32
    %c0_i32_2 = arith.constant 0 : i32
    return %arg0, %c0_i32, %c0_i32_0, %c0_i32_1 : i32, i32, i32, i32
  }
  func.func @transform_2(%arg0: i32) -> (i32, i32, i32, i32) {
    %c0_i32 = arith.constant 0 : i32
    %c0_i32_0 = arith.constant 0 : i32
    %c0_i32_1 = arith.constant 0 : i32
    %c0_i32_2 = arith.constant 0 : i32
    return %arg0, %c0_i32, %c0_i32_0, %c0_i32_1 : i32, i32, i32, i32
  }
  func.func @transform_3(%arg0: i32) -> (i32, i32) {
    %c0_i32 = arith.constant 0 : i32
    %c0_i32_0 = arith.constant 0 : i32
    %c0_i32_1 = arith.constant 0 : i32
    return %c0_i32, %c0_i32_0 : i32, i32
  }
  func.func @transform_4(%arg0: i32) -> (i32, i32) {
    %c0_i32 = arith.constant 0 : i32
    %c0_i32_0 = arith.constant 0 : i32
    %c0_i32_1 = arith.constant 0 : i32
    return %c0_i32, %c0_i32_0 : i32, i32
  }
  func.func @transform_5(%arg0: i32) -> (i32, i32, i32, i32) {
    %c0_i32 = arith.constant 0 : i32
    %c0_i32_0 = arith.constant 0 : i32
    %c0_i32_1 = arith.constant 0 : i32
    %c0_i32_2 = arith.constant 0 : i32
    return %arg0, %c0_i32, %c0_i32_0, %c0_i32_1 : i32, i32, i32, i32
  }
}

module attributes {stable_mosaic.version = 11 : i64} {
  func.func @_conv3x3_kernel(%arg0: i32, %arg1: memref<1x16x16x32xbf16, #tpu.memory_space<vmem>>, %arg2: memref<288x32xbf16, #tpu.memory_space<vmem>>, %arg3: memref<1x32xf32, #tpu.memory_space<vmem>>, %arg4: memref<1x16x16x32xf32, #tpu.memory_space<vmem>>, %arg5: memref<16x16x288xf32, #tpu.memory_space<vmem>>) attributes {dimension_semantics = [#tpu.dimension_semantics<parallel>], iteration_bounds = array<i64: 2>, scalar_prefetch = 0 : i64, scratch_operands = 1 : i64, tpu.core_type = #tpu.core_type<tc>, window_params = [{transform_indices = @transform_0, window_bounds = array<i64: 1, 16, 16, 32>}, {pipeline_mode = #tpu.pipeline_mode<synchronous>, transform_indices = @transform_1, window_bounds = array<i64: 288, 32>}, {pipeline_mode = #tpu.pipeline_mode<synchronous>, transform_indices = @transform_2, window_bounds = array<i64: 1, 32>}, {transform_indices = @transform_3, window_bounds = array<i64: 1, 16, 16, 32>}]} {
    %cst = arith.constant 0.000000e+00 : f32
    %0 = vector.broadcast %cst : f32 to vector<16x16x288xf32>
    %c0 = arith.constant 0 : index
    %c0_0 = arith.constant 0 : index
    %c0_1 = arith.constant 0 : index
    %1 = vector.load %arg5[%c0, %c0_0, %c0_1] : memref<16x16x288xf32, #tpu.memory_space<vmem>>, vector<16x16x288xf32>
    tpu.vector_store %arg5[%c0, %c0_0, %c0_1], %0 {strides = array<i32>} : memref<16x16x288xf32, #tpu.memory_space<vmem>>, vector<16x16x288xf32>,
    %c0_2 = arith.constant 0 : index
    %c0_3 = arith.constant 0 : index
    %c0_4 = arith.constant 0 : index
    %c0_5 = arith.constant 0 : index
    %2 = vector.load %arg1[%c0_2, %c0_3, %c0_4, %c0_5] : memref<1x16x16x32xbf16, #tpu.memory_space<vmem>>, vector<1x16x16x32xbf16>
    %3 = vector.shape_cast %2 : vector<1x16x16x32xbf16> to vector<16x16x32xbf16>
    %4 = arith.extf %3 : vector<16x16x32xbf16> to vector<16x16x32xf32>
    %5 = vector.extract_strided_slice %4 {offsets = [0, 0, 0], sizes = [15, 15, 32], strides = [1, 1, 1]} : vector<16x16x32xf32> to vector<15x15x32xf32>
    %c1 = arith.constant 1 : index
    %c1_6 = arith.constant 1 : index
    %c0_7 = arith.constant 0 : index
    %6 = vector.load %arg5[%c1, %c1_6, %c0_7] : memref<16x16x288xf32, #tpu.memory_space<vmem>>, vector<15x15x32xf32>
    tpu.vector_store %arg5[%c1, %c1_6, %c0_7], %5 {strides = array<i32>} : memref<16x16x288xf32, #tpu.memory_space<vmem>>, vector<15x15x32xf32>,
    %7 = vector.extract_strided_slice %4 {offsets = [0, 0, 0], sizes = [15, 16, 32], strides = [1, 1, 1]} : vector<16x16x32xf32> to vector<15x16x32xf32>
    %c1_8 = arith.constant 1 : index
    %c0_9 = arith.constant 0 : index
    %c32 = arith.constant 32 : index
    %8 = vector.load %arg5[%c1_8, %c0_9, %c32] : memref<16x16x288xf32, #tpu.memory_space<vmem>>, vector<15x16x32xf32>
    tpu.vector_store %arg5[%c1_8, %c0_9, %c32], %7 {strides = array<i32>} : memref<16x16x288xf32, #tpu.memory_space<vmem>>, vector<15x16x32xf32>,
    %9 = vector.extract_strided_slice %4 {offsets = [0, 1, 0], sizes = [15, 15, 32], strides = [1, 1, 1]} : vector<16x16x32xf32> to vector<15x15x32xf32>
    %c1_10 = arith.constant 1 : index
    %c0_11 = arith.constant 0 : index
    %c64 = arith.constant 64 : index
    %10 = vector.load %arg5[%c1_10, %c0_11, %c64] : memref<16x16x288xf32, #tpu.memory_space<vmem>>, vector<15x15x32xf32>
    tpu.vector_store %arg5[%c1_10, %c0_11, %c64], %9 {strides = array<i32>} : memref<16x16x288xf32, #tpu.memory_space<vmem>>, vector<15x15x32xf32>,
    %11 = vector.extract_strided_slice %4 {offsets = [0, 0, 0], sizes = [16, 15, 32], strides = [1, 1, 1]} : vector<16x16x32xf32> to vector<16x15x32xf32>
    %c0_12 = arith.constant 0 : index
    %c1_13 = arith.constant 1 : index
    %c96 = arith.constant 96 : index
    %12 = vector.load %arg5[%c0_12, %c1_13, %c96] : memref<16x16x288xf32, #tpu.memory_space<vmem>>, vector<16x15x32xf32>
    tpu.vector_store %arg5[%c0_12, %c1_13, %c96], %11 {strides = array<i32>} : memref<16x16x288xf32, #tpu.memory_space<vmem>>, vector<16x15x32xf32>,
    %c0_14 = arith.constant 0 : index
    %c0_15 = arith.constant 0 : index
    %c128 = arith.constant 128 : index
    %13 = vector.load %arg5[%c0_14, %c0_15, %c128] : memref<16x16x288xf32, #tpu.memory_space<vmem>>, vector<16x16x32xf32>
    tpu.vector_store %arg5[%c0_14, %c0_15, %c128], %4 {strides = array<i32>} : memref<16x16x288xf32, #tpu.memory_space<vmem>>, vector<16x16x32xf32>,
    %14 = vector.extract_strided_slice %4 {offsets = [0, 1, 0], sizes = [16, 15, 32], strides = [1, 1, 1]} : vector<16x16x32xf32> to vector<16x15x32xf32>
    %c0_16 = arith.constant 0 : index
    %c0_17 = arith.constant 0 : index
    %c160 = arith.constant 160 : index
    %15 = vector.load %arg5[%c0_16, %c0_17, %c160] : memref<16x16x288xf32, #tpu.memory_space<vmem>>, vector<16x15x32xf32>
    tpu.vector_store %arg5[%c0_16, %c0_17, %c160], %14 {strides = array<i32>} : memref<16x16x288xf32, #tpu.memory_space<vmem>>, vector<16x15x32xf32>,
    %16 = vector.extract_strided_slice %4 {offsets = [1, 0, 0], sizes = [15, 15, 32], strides = [1, 1, 1]} : vector<16x16x32xf32> to vector<15x15x32xf32>
    %c0_18 = arith.constant 0 : index
    %c1_19 = arith.constant 1 : index
    %c192 = arith.constant 192 : index
    %17 = vector.load %arg5[%c0_18, %c1_19, %c192] : memref<16x16x288xf32, #tpu.memory_space<vmem>>, vector<15x15x32xf32>
    tpu.vector_store %arg5[%c0_18, %c1_19, %c192], %16 {strides = array<i32>} : memref<16x16x288xf32, #tpu.memory_space<vmem>>, vector<15x15x32xf32>,
    %18 = vector.extract_strided_slice %4 {offsets = [1, 0, 0], sizes = [15, 16, 32], strides = [1, 1, 1]} : vector<16x16x32xf32> to vector<15x16x32xf32>
    %c0_20 = arith.constant 0 : index
    %c0_21 = arith.constant 0 : index
    %c224 = arith.constant 224 : index
    %19 = vector.load %arg5[%c0_20, %c0_21, %c224] : memref<16x16x288xf32, #tpu.memory_space<vmem>>, vector<15x16x32xf32>
    tpu.vector_store %arg5[%c0_20, %c0_21, %c224], %18 {strides = array<i32>} : memref<16x16x288xf32, #tpu.memory_space<vmem>>, vector<15x16x32xf32>,
    %20 = vector.extract_strided_slice %4 {offsets = [1, 1, 0], sizes = [15, 15, 32], strides = [1, 1, 1]} : vector<16x16x32xf32> to vector<15x15x32xf32>
    %c0_22 = arith.constant 0 : index
    %c0_23 = arith.constant 0 : index
    %c256 = arith.constant 256 : index
    %21 = vector.load %arg5[%c0_22, %c0_23, %c256] : memref<16x16x288xf32, #tpu.memory_space<vmem>>, vector<15x15x32xf32>
    tpu.vector_store %arg5[%c0_22, %c0_23, %c256], %20 {strides = array<i32>} : memref<16x16x288xf32, #tpu.memory_space<vmem>>, vector<15x15x32xf32>,
    %c0_24 = arith.constant 0 : index
    %c0_25 = arith.constant 0 : index
    %c0_26 = arith.constant 0 : index
    %22 = vector.load %arg5[%c0_24, %c0_25, %c0_26] : memref<16x16x288xf32, #tpu.memory_space<vmem>>, vector<16x16x288xf32>
    %23 = vector.shape_cast %22 : vector<16x16x288xf32> to vector<256x288xf32>
    %24 = arith.truncf %23 : vector<256x288xf32> to vector<256x288xbf16>
    %c0_27 = arith.constant 0 : index
    %c0_28 = arith.constant 0 : index
    %25 = vector.load %arg2[%c0_27, %c0_28] : memref<288x32xbf16, #tpu.memory_space<vmem>>, vector<288x32xbf16>
    %cst_29 = arith.constant dense<0.000000e+00> : vector<256x32xf32>
    %26 = tpu.matmul %24, %25, %cst_29 {dimension_numbers = #tpu.dot_dimension_numbers<[1], [0], [0], [1], [0, 0, 1, 1], [], []>} : vector<256x288xbf16>, vector<288x32xbf16>, vector<256x32xf32> -> vector<256x32xf32>
    %c0_30 = arith.constant 0 : index
    %c0_31 = arith.constant 0 : index
    %27 = vector.load %arg3[%c0_30, %c0_31] : memref<1x32xf32, #tpu.memory_space<vmem>>, vector<1x32xf32>
    %28 = vector.shape_cast %27 : vector<1x32xf32> to vector<32xf32>
    %29 = vector.shape_cast %28 : vector<32xf32> to vector<1x32xf32>
    %30 = vector.broadcast %29 : vector<1x32xf32> to vector<256x32xf32>
    %31 = arith.addf %26, %30 : vector<256x32xf32>
    %cst_32 = arith.constant 0.000000e+00 : f32
    %32 = vector.broadcast %cst_32 : f32 to vector<256x32xf32>
    %33 = arith.cmpf oge, %31, %32 : vector<256x32xf32>
    %cst_33 = arith.constant 2.000000e-01 : f32
    %34 = vector.broadcast %cst_33 : f32 to vector<256x32xf32>
    %35 = arith.mulf %34, %31 : vector<256x32xf32>
    %36 = arith.select %33, %31, %35 : vector<256x32xi1>, vector<256x32xf32>
    %37 = vector.shape_cast %36 : vector<256x32xf32> to vector<1x16x16x32xf32>
    %c0_34 = arith.constant 0 : index
    %c0_35 = arith.constant 0 : index
    %c0_36 = arith.constant 0 : index
    %c0_37 = arith.constant 0 : index
    %38 = vector.load %arg4[%c0_34, %c0_35, %c0_36, %c0_37] : memref<1x16x16x32xf32, #tpu.memory_space<vmem>>, vector<1x16x16x32xf32>
    tpu.vector_store %arg4[%c0_34, %c0_35, %c0_36, %c0_37], %37 {strides = array<i32>} : memref<1x16x16x32xf32, #tpu.memory_space<vmem>>, vector<1x16x16x32xf32>,
    return
  }
  func.func @transform_0(%arg0: i32) -> (i32, i32, i32, i32) {
    %c0_i32 = arith.constant 0 : i32
    %c0_i32_0 = arith.constant 0 : i32
    %c0_i32_1 = arith.constant 0 : i32
    %c0_i32_2 = arith.constant 0 : i32
    return %arg0, %c0_i32, %c0_i32_0, %c0_i32_1 : i32, i32, i32, i32
  }
  func.func @transform_1(%arg0: i32) -> (i32, i32) {
    %c0_i32 = arith.constant 0 : i32
    %c0_i32_0 = arith.constant 0 : i32
    %c0_i32_1 = arith.constant 0 : i32
    return %c0_i32, %c0_i32_0 : i32, i32
  }
  func.func @transform_2(%arg0: i32) -> (i32, i32) {
    %c0_i32 = arith.constant 0 : i32
    %c0_i32_0 = arith.constant 0 : i32
    %c0_i32_1 = arith.constant 0 : i32
    return %c0_i32, %c0_i32_0 : i32, i32
  }
  func.func @transform_3(%arg0: i32) -> (i32, i32, i32, i32) {
    %c0_i32 = arith.constant 0 : i32
    %c0_i32_0 = arith.constant 0 : i32
    %c0_i32_1 = arith.constant 0 : i32
    %c0_i32_2 = arith.constant 0 : i32
    return %arg0, %c0_i32, %c0_i32_0, %c0_i32_1 : i32, i32, i32, i32
  }
}

</mosaic_0001>

<llo_original>
// kernel: tpu_custom_call.1
$region0: #{tpu_custom_call.1}
  #allocation0 [shape = 'u32[]', space=smem, size = 0x4, offset = 0x4, fixed_abs, tag = 'smem constant byte address 0x4 - core index']
  #allocation1 [shape = 'u32[144,128]{1,0:T(1,128)}', space=vmem, size = 0x12000, scoped, tag = 'internal scratch']
  #allocation2 [shape = 'bf16[16,16,216]{2,1,0:T(16,128)(2,1)}', space=vmem, size = 0x20000, scoped, tag = 'scratch operand']
  %s0 = inlined_call_operand.vmem [shape: bf16[1,16,16,16], index: 0, kind: input, shape index: {}]
  %s1 = inlined_call_operand.vmem [shape: bf16[1,16,16,8], index: 1, kind: input, shape index: {}]
  %s2 = inlined_call_operand.vmem [shape: bf16[1,16,16,16], index: 2, kind: input, shape index: {}]
  %s3 = inlined_call_operand.vmem [shape: bf16[216,16], index: 3, kind: input, shape index: {}]
  %s4 = inlined_call_operand.vmem [shape: f32[1,16], index: 4, kind: input, shape index: {}]
  %s5 = inlined_call_operand.hbm [shape: f32[1,16,16,16], index: 5, kind: output, shape index: {}]
  %s6 = sld [smem:[#allocation0]]
  $region30: #{tpu_custom_call.1} parent=0
    _
  %s8 = ssub.s32 1, %s6
  %s9 = scalar_select 0, %s8, %s6
  $region1: #{tpu_custom_call.1} parent=0
    #allocation3 [shape = 'u8[131072]{0}', space=vmem, size = 0x20000, scoped, tag = 'output window, operand 0, single buffered']
    #allocation4 [shape = 's32[1]{0}', space=sflag, size = 0x4, scoped, tag = 'scoped memory for tpu_custom_call.1']
    %10 = vsyncpa [#allocation4], 0
    // Predicated region
    $region2: #{tpu_custom_call.1} parent=1 // pred_check
      _
    $region3: #{tpu_custom_call.1} parent=1 // pred_check_branch
      %12 = sbr.rel (0) target = $region5
    $region4: #{tpu_custom_call.1} parent=1 // pred_region
      _
    $region5: #{tpu_custom_call.1} parent=1 // pred_fallthru
      _
    // Predicated region
    $region6: #{tpu_custom_call.1} parent=1 // pred_check
      _
    $region7: #{tpu_custom_call.1} parent=1 // pred_check_branch
      %14 = sbr.rel (0) target = $region9
    $region8: #{tpu_custom_call.1} parent=1 // pred_region
      _
    $region9: #{tpu_custom_call.1} parent=1 // pred_fallthru
      _
    // Predicated region
    $region10: #{tpu_custom_call.1} parent=1 // pred_check
      _
    $region11: #{tpu_custom_call.1} parent=1 // pred_check_branch
      %16 = sbr.rel (0) target = $region13
    $region12: #{tpu_custom_call.1} parent=1 // pred_region
      _
    $region13: #{tpu_custom_call.1} parent=1 // pred_fallthru
      _
    // Predicated region
    $region14: #{tpu_custom_call.1} parent=1 // pred_check
      _
    $region15: #{tpu_custom_call.1} parent=1 // pred_check_branch
      %18 = sbr.rel (0) target = $region17
    $region16: #{tpu_custom_call.1} parent=1 // pred_region
      _
    $region17: #{tpu_custom_call.1} parent=1 // pred_fallthru
      _
    // Predicated region
    $region18: #{tpu_custom_call.1} parent=1 // pred_check
      _
    $region19: #{tpu_custom_call.1} parent=1 // pred_check_branch
      %20 = sbr.rel (0) target = $region21
    $region20: #{tpu_custom_call.1} parent=1 // pred_region
      _
    $region21: #{tpu_custom_call.1} parent=1 // pred_fallthru
      _
    %22 = vst [vmem:[#allocation2] sm:$0xff] 0
    %vm23 = vcmask 719872
    %24 = vst.msk [vmem:[#allocation2 + $0x8] sm:$0xff] %vm23, 0
    %25 = vst [vmem:[#allocation2 + $0x10] sm:$0xff] 0
    %26 = vst.msk [vmem:[#allocation2 + $0x18] sm:$0xff] %vm23, 0
    %27 = vst [vmem:[#allocation2 + $0x20] sm:$0xff] 0
    %28 = vst.msk [vmem:[#allocation2 + $0x28] sm:$0xff] %vm23, 0
    %29 = vst [vmem:[#allocation2 + $0x30] sm:$0xff] 0
    %30 = vst.msk [vmem:[#allocation2 + $0x38] sm:$0xff] %vm23, 0
    %31 = vst [vmem:[#allocation2 + $0x40] sm:$0xff] 0
    %32 = vst.msk [vmem:[#allocation2 + $0x48] sm:$0xff] %vm23, 0
    %33 = vst [vmem:[#allocation2 + $0x50] sm:$0xff] 0
    %34 = vst.msk [vmem:[#allocation2 + $0x58] sm:$0xff] %vm23, 0
    %35 = vst [vmem:[#allocation2 + $0x60] sm:$0xff] 0
    %36 = vst.msk [vmem:[#allocation2 + $0x68] sm:$0xff] %vm23, 0
    %37 = vst [vmem:[#allocation2 + $0x70] sm:$0xff] 0
    %38 = vst.msk [vmem:[#allocation2 + $0x78] sm:$0xff] %vm23, 0
    %39 = vst [vmem:[#allocation2 + $0x80] sm:$0xff] 0
    %40 = vst.msk [vmem:[#allocation2 + $0x88] sm:$0xff] %vm23, 0
    %41 = vst [vmem:[#allocation2 + $0x90] sm:$0xff] 0
    %42 = vst.msk [vmem:[#allocation2 + $0x98] sm:$0xff] %vm23, 0
    %43 = vst [vmem:[#allocation2 + $0xa0] sm:$0xff] 0
    %44 = vst.msk [vmem:[#allocation2 + $0xa8] sm:$0xff] %vm23, 0
    %45 = vst [vmem:[#allocation2 + $0xb0] sm:$0xff] 0
    %46 = vst.msk [vmem:[#allocation2 + $0xb8] sm:$0xff] %vm23, 0
    %47 = vst [vmem:[#allocation2 + $0xc0] sm:$0xff] 0
    %48 = vst.msk [vmem:[#allocation2 + $0xc8] sm:$0xff] %vm23, 0
    %49 = vst [vmem:[#allocation2 + $0xd0] sm:$0xff] 0
    %50 = vst.msk [vmem:[#allocation2 + $0xd8] sm:$0xff] %vm23, 0
    %51 = vst [vmem:[#allocation2 + $0xe0] sm:$0xff] 0
    %52 = vst.msk [vmem:[#allocation2 + $0xe8] sm:$0xff] %vm23, 0
    %53 = vst [vmem:[#allocation2 + $0xf0] sm:$0xff] 0
    %54 = vst.msk [vmem:[#allocation2 + $0xf8] sm:$0xff] %vm23, 0
    %v55 = vld [vmem:[%s0] sm:$0xf]
    %v56 = vld [vmem:[%s0 + $0x4] sm:$0xf]
    %v57 = vld [vmem:[%s0 + $0x8] sm:$0xf]
    %v58 = vld [vmem:[%s0 + $0xc] sm:$0xf]
    %v59 = vld [vmem:[%s0 + $0x10] sm:$0xf]
    %v60 = vld [vmem:[%s0 + $0x14] sm:$0xf]
    %v61 = vld [vmem:[%s0 + $0x18] sm:$0xf]
    %v62 = vld [vmem:[%s0 + $0x1c] sm:$0xf]
    %v63 = vld [vmem:[%s0 + $0x20] sm:$0xf]
    %v64 = vld [vmem:[%s0 + $0x24] sm:$0xf]
    %v65 = vld [vmem:[%s0 + $0x28] sm:$0xf]
    %v66 = vld [vmem:[%s0 + $0x2c] sm:$0xf]
    %v67 = vld [vmem:[%s0 + $0x30] sm:$0xf]
    %v68 = vld [vmem:[%s0 + $0x34] sm:$0xf]
    %v69 = vld [vmem:[%s0 + $0x38] sm:$0xf]
    %v70 = vld [vmem:[%s0 + $0x3c] sm:$0xf]
    %v71 = vld [vmem:[%s0 + $0x40] sm:$0xf]
    %v72 = vld [vmem:[%s0 + $0x44] sm:$0xf]
    %v73 = vld [vmem:[%s0 + $0x48] sm:$0xf]
    %v74 = vld [vmem:[%s0 + $0x4c] sm:$0xf]
    %v75 = vld [vmem:[%s0 + $0x50] sm:$0xf]
    %v76 = vld [vmem:[%s0 + $0x54] sm:$0xf]
    %v77 = vld [vmem:[%s0 + $0x58] sm:$0xf]
    %v78 = vld [vmem:[%s0 + $0x5c] sm:$0xf]
    %v79 = vld [vmem:[%s0 + $0x60] sm:$0xf]
    %v80 = vld [vmem:[%s0 + $0x64] sm:$0xf]
    %v81 = vld [vmem:[%s0 + $0x68] sm:$0xf]
    %v82 = vld [vmem:[%s0 + $0x6c] sm:$0xf]
    %v83 = vld [vmem:[%s0 + $0x70] sm:$0xf]
    %v84 = vld [vmem:[%s0 + $0x74] sm:$0xf]
    %v85 = vld [vmem:[%s0 + $0x78] sm:$0xf]
    %v86 = vld [vmem:[%s0 + $0x7c] sm:$0xf]
    %v117 = vunpack.c.l.b16 %v55
    %v118 = vunpack.c.l.b16 %v56
    %v119 = vunpack.c.l.b16 %v57
    %v120 = vunpack.c.l.b16 %v58
    %v121 = vunpack.c.l.b16 %v59
    %v122 = vunpack.c.l.b16 %v60
    %v123 = vunpack.c.l.b16 %v61
    %v124 = vunpack.c.l.b16 %v62
    %v125 = vunpack.c.l.b16 %v63
    %v126 = vunpack.c.l.b16 %v64
    %v127 = vunpack.c.l.b16 %v65
    %v128 = vunpack.c.l.b16 %v66
    %v129 = vunpack.c.l.b16 %v67
    %v130 = vunpack.c.l.b16 %v68
    %v131 = vunpack.c.l.b16 %v69
    %v132 = vunpack.c.l.b16 %v70
    %v133 = vunpack.c.l.b16 %v71
    %v134 = vunpack.c.l.b16 %v72
    %v135 = vunpack.c.l.b16 %v73
    %v136 = vunpack.c.l.b16 %v74
    %v137 = vunpack.c.l.b16 %v75
    %v138 = vunpack.c.l.b16 %v76
    %v139 = vunpack.c.l.b16 %v77
    %v140 = vunpack.c.l.b16 %v78
    %v141 = vunpack.c.l.b16 %v79
    %v142 = vunpack.c.l.b16 %v80
    %v143 = vunpack.c.l.b16 %v81
    %v144 = vunpack.c.l.b16 %v82
    %v145 = vunpack.c.l.b16 %v83
    %v146 = vunpack.c.l.b16 %v84
    %v147 = vpack.c.b16 %v118, %v117
    %v148 = vpack.c.b16 %v120, %v119
    %v149 = vpack.c.b16 %v122, %v121
    %v150 = vpack.c.b16 %v124, %v123
    %v151 = vpack.c.b16 %v126, %v125
    %v152 = vpack.c.b16 %v128, %v127
    %v153 = vpack.c.b16 %v130, %v129
    %v154 = vpack.c.b16 %v132, %v131
    %v155 = vpack.c.b16 %v134, %v133
    %v156 = vpack.c.b16 %v136, %v135
    %v157 = vpack.c.b16 %v138, %v137
    %v158 = vpack.c.b16 %v140, %v139
    %v159 = vpack.c.b16 %v142, %v141
    %v160 = vpack.c.b16 %v144, %v143
    %v161 = vpack.c.b16 %v146, %v145
    %v163 = vshrl.u32 %v147, 16
    %v165 = vrot.slane %v163, 7
    %v166 = vshll.u32 %v147, 16
    %v168 = vor.u32 %v165, %v166
    %v170 = vshrl.u32 %v148, 16
    %v172 = vrot.slane %v170, 7
    %v173 = vshll.u32 %v148, 16
    %v175 = vor.u32 %v172, %v173
    %v177 = vshrl.u32 %v149, 16
    %v179 = vrot.slane %v177, 7
    %v180 = vshll.u32 %v149, 16
    %v182 = vor.u32 %v179, %v180
    %v184 = vshrl.u32 %v150, 16
    %v186 = vrot.slane %v184, 7
    %v187 = vshll.u32 %v150, 16
    %v189 = vor.u32 %v186, %v187
    %v191 = vshrl.u32 %v151, 16
    %v193 = vrot.slane %v191, 7
    %v194 = vshll.u32 %v151, 16
    %v196 = vor.u32 %v193, %v194
    %v198 = vshrl.u32 %v152, 16
    %v200 = vrot.slane %v198, 7
    %v201 = vshll.u32 %v152, 16
    %v203 = vor.u32 %v200, %v201
    %v205 = vshrl.u32 %v153, 16
    %v207 = vrot.slane %v205, 7
    %v208 = vshll.u32 %v153, 16
    %v210 = vor.u32 %v207, %v208
    %v212 = vshrl.u32 %v154, 16
    %v214 = vrot.slane %v212, 7
    %v215 = vshll.u32 %v154, 16
    %v217 = vor.u32 %v214, %v215
    %v219 = vshrl.u32 %v155, 16
    %v221 = vrot.slane %v219, 7
    %v222 = vshll.u32 %v155, 16
    %v224 = vor.u32 %v221, %v222
    %v226 = vshrl.u32 %v156, 16
    %v228 = vrot.slane %v226, 7
    %v229 = vshll.u32 %v156, 16
    %v231 = vor.u32 %v228, %v229
    %v233 = vshrl.u32 %v157, 16
    %v235 = vrot.slane %v233, 7
    %v236 = vshll.u32 %v157, 16
    %v238 = vor.u32 %v235, %v236
    %v240 = vshrl.u32 %v158, 16
    %v242 = vrot.slane %v240, 7
    %v243 = vshll.u32 %v158, 16
    %v245 = vor.u32 %v242, %v243
    %v247 = vshrl.u32 %v159, 16
    %v249 = vrot.slane %v247, 7
    %v250 = vshll.u32 %v159, 16
    %v252 = vor.u32 %v249, %v250
    %v254 = vshrl.u32 %v160, 16
    %v256 = vrot.slane %v254, 7
    %v257 = vshll.u32 %v160, 16
    %v259 = vor.u32 %v256, %v257
    %v261 = vshrl.u32 %v161, 16
    %v263 = vrot.slane %v261, 7
    %v264 = vshll.u32 %v161, 16
    %v266 = vor.u32 %v263, %v264
    %s282 = scalar_lea.vmem [#allocation2], 16
    %vm283 = vcmask 130048
    %vm284 = vsmask.f32 7938
    %vm285 = vmand %vm283, %vm284
    %v286 = vld [vmem:[%s282] sm:$0xff]
    %v287 = vsel %vm285, %v168, %v286
    %288 = vst [vmem:[%s282] sm:$0xff] %v287
    %v289 = vld [vmem:[%s282 + $0x10] sm:$0xff]
    %v290 = vsel %vm285, %v175, %v289
    %291 = vst [vmem:[%s282 + $0x10] sm:$0xff] %v290
    %v292 = vld [vmem:[%s282 + $0x20] sm:$0xff]
    %v293 = vsel %vm285, %v182, %v292
    %294 = vst [vmem:[%s282 + $0x20] sm:$0xff] %v293
    %v295 = vld [vmem:[%s282 + $0x30] sm:$0xff]
    %v296 = vsel %vm285, %v189, %v295
    %297 = vst [vmem:[%s282 + $0x30] sm:$0xff] %v296
    %v298 = vld [vmem:[%s282 + $0x40] sm:$0xff]
    %v299 = vsel %vm285, %v196, %v298
    %300 = vst [vmem:[%s282 + $0x40] sm:$0xff] %v299
    %v301 = vld [vmem:[%s282 + $0x50] sm:$0xff]
    %v302 = vsel %vm285, %v203, %v301
    %303 = vst [vmem:[%s282 + $0x50] sm:$0xff] %v302
    %v304 = vld [vmem:[%s282 + $0x60] sm:$0xff]
    %v305 = vsel %vm285, %v210, %v304
    %306 = vst [vmem:[%s282 + $0x60] sm:$0xff] %v305
    %v307 = vld [vmem:[%s282 + $0x70] sm:$0xff]
    %v308 = vsel %vm285, %v217, %v307
    %309 = vst [vmem:[%s282 + $0x70] sm:$0xff] %v308
    %v310 = vld [vmem:[%s282 + $0x80] sm:$0xff]
    %v311 = vsel %vm285, %v224, %v310
    %312 = vst [vmem:[%s282 + $0x80] sm:$0xff] %v311
    %v313 = vld [vmem:[%s282 + $0x90] sm:$0xff]
    %v314 = vsel %vm285, %v231, %v313
    %315 = vst [vmem:[%s282 + $0x90] sm:$0xff] %v314
    %v316 = vld [vmem:[%s282 + $0xa0] sm:$0xff]
    %v317 = vsel %vm285, %v238, %v316
    %318 = vst [vmem:[%s282 + $0xa0] sm:$0xff] %v317
    %v319 = vld [vmem:[%s282 + $0xb0] sm:$0xff]
    %v320 = vsel %vm285, %v245, %v319
    %321 = vst [vmem:[%s282 + $0xb0] sm:$0xff] %v320
    %v322 = vld [vmem:[%s282 + $0xc0] sm:$0xff]
    %v323 = vsel %vm285, %v252, %v322
    %324 = vst [vmem:[%s282 + $0xc0] sm:$0xff] %v323
    %v325 = vld [vmem:[%s282 + $0xd0] sm:$0xff]
    %v326 = vsel %vm285, %v259, %v325
    %327 = vst [vmem:[%s282 + $0xd0] sm:$0xff] %v326
    %v328 = vld [vmem:[%s282 + $0xe0] sm:$0xff]
    %v329 = vsel %vm285, %v266, %v328
    %330 = vst [vmem:[%s282 + $0xe0] sm:$0xff] %v329
    %331 = vrot.lane.b32.xlu0 %v147, 16
    %v332 = vpop.permute.xlu0 %331
    %333 = vrot.lane.b32.xlu0 %v148, 16
    %v334 = vpop.permute.xlu0 %333
    %335 = vrot.lane.b32.xlu0 %v149, 16
    %v336 = vpop.permute.xlu0 %335
    %337 = vrot.lane.b32.xlu0 %v150, 16
    %v338 = vpop.permute.xlu0 %337
    %339 = vrot.lane.b32.xlu0 %v151, 16
    %v340 = vpop.permute.xlu0 %339
    %341 = vrot.lane.b32.xlu0 %v152, 16
    %v342 = vpop.permute.xlu0 %341
    %343 = vrot.lane.b32.xlu0 %v153, 16
    %v344 = vpop.permute.xlu0 %343
    %345 = vrot.lane.b32.xlu0 %v154, 16
    %v346 = vpop.permute.xlu0 %345
    %347 = vrot.lane.b32.xlu0 %v155, 16
    %v348 = vpop.permute.xlu0 %347
    %349 = vrot.lane.b32.xlu0 %v156, 16
    %v350 = vpop.permute.xlu0 %349
    %351 = vrot.lane.b32.xlu0 %v157, 16
    %v352 = vpop.permute.xlu0 %351
    %353 = vrot.lane.b32.xlu0 %v158, 16
    %v354 = vpop.permute.xlu0 %353
    %355 = vrot.lane.b32.xlu0 %v159, 16
    %v356 = vpop.permute.xlu0 %355
    %357 = vrot.lane.b32.xlu0 %v160, 16
    %v358 = vpop.permute.xlu0 %357
    %359 = vrot.lane.b32.xlu0 %v161, 16
    %v360 = vpop.permute.xlu0 %359
    %vm376 = vcmask 261248
    %377 = vst.msk [vmem:[%s282] sm:$0xff] %vm376, %v332
    %378 = vst.msk [vmem:[%s282 + $0x10] sm:$0xff] %vm376, %v334
    %379 = vst.msk [vmem:[%s282 + $0x20] sm:$0xff] %vm376, %v336
    %380 = vst.msk [vmem:[%s282 + $0x30] sm:$0xff] %vm376, %v338
    %381 = vst.msk [vmem:[%s282 + $0x40] sm:$0xff] %vm376, %v340
    %382 = vst.msk [vmem:[%s282 + $0x50] sm:$0xff] %vm376, %v342
    %383 = vst.msk [vmem:[%s282 + $0x60] sm:$0xff] %vm376, %v344
    %384 = vst.msk [vmem:[%s282 + $0x70] sm:$0xff] %vm376, %v346
    %385 = vst.msk [vmem:[%s282 + $0x80] sm:$0xff] %vm376, %v348
    %386 = vst.msk [vmem:[%s282 + $0x90] sm:$0xff] %vm376, %v350
    %387 = vst.msk [vmem:[%s282 + $0xa0] sm:$0xff] %vm376, %v352
    %388 = vst.msk [vmem:[%s282 + $0xb0] sm:$0xff] %vm376, %v354
    %389 = vst.msk [vmem:[%s282 + $0xc0] sm:$0xff] %vm376, %v356
    %390 = vst.msk [vmem:[%s282 + $0xd0] sm:$0xff] %vm376, %v358
    %391 = vst.msk [vmem:[%s282 + $0xe0] sm:$0xff] %vm376, %v360
    %v392 = vrot.slane %v166, 1
    %v393 = vor.u32 %v163, %v392
    %v394 = vrot.slane %v173, 1
    %v395 = vor.u32 %v170, %v394
    %v396 = vrot.slane %v180, 1
    %v397 = vor.u32 %v177, %v396
    %v398 = vrot.slane %v187, 1
    %v399 = vor.u32 %v184, %v398
    %v400 = vrot.slane %v194, 1
    %v401 = vor.u32 %v191, %v400
    %v402 = vrot.slane %v201, 1
    %v403 = vor.u32 %v198, %v402
    %v404 = vrot.slane %v208, 1
    %v405 = vor.u32 %v205, %v404
    %v406 = vrot.slane %v215, 1
    %v407 = vor.u32 %v212, %v406
    %v408 = vrot.slane %v222, 1
    %v409 = vor.u32 %v219, %v408
    %v410 = vrot.slane %v229, 1
    %v411 = vor.u32 %v226, %v410
    %v412 = vrot.slane %v236, 1
    %v413 = vor.u32 %v233, %v412
    %v414 = vrot.slane %v243, 1
    %v415 = vor.u32 %v240, %v414
    %v416 = vrot.slane %v250, 1
    %v417 = vor.u32 %v247, %v416
    %v418 = vrot.slane %v257, 1
    %v419 = vor.u32 %v254, %v418
    %v420 = vrot.slane %v264, 1
    %v421 = vor.u32 %v261, %v420
    %422 = vrot.lane.b32.xlu0 %v393, 32
    %v423 = vpop.permute.xlu0 %422
    %424 = vrot.lane.b32.xlu0 %v395, 32
    %v425 = vpop.permute.xlu0 %424
    %426 = vrot.lane.b32.xlu0 %v397, 32
    %v427 = vpop.permute.xlu0 %426
    %428 = vrot.lane.b32.xlu0 %v399, 32
    %v429 = vpop.permute.xlu0 %428
    %430 = vrot.lane.b32.xlu0 %v401, 32
    %v431 = vpop.permute.xlu0 %430
    %432 = vrot.lane.b32.xlu0 %v403, 32
    %v433 = vpop.permute.xlu0 %432
    %434 = vrot.lane.b32.xlu0 %v405, 32
    %v435 = vpop.permute.xlu0 %434
    %436 = vrot.lane.b32.xlu0 %v407, 32
    %v437 = vpop.permute.xlu0 %436
    %438 = vrot.lane.b32.xlu0 %v409, 32
    %v439 = vpop.permute.xlu0 %438
    %440 = vrot.lane.b32.xlu0 %v411, 32
    %v441 = vpop.permute.xlu0 %440
    %442 = vrot.lane.b32.xlu0 %v413, 32
    %v443 = vpop.permute.xlu0 %442
    %444 = vrot.lane.b32.xlu0 %v415, 32
    %v445 = vpop.permute.xlu0 %444
    %446 = vrot.lane.b32.xlu0 %v417, 32
    %v447 = vpop.permute.xlu0 %446
    %448 = vrot.lane.b32.xlu0 %v419, 32
    %v449 = vpop.permute.xlu0 %448
    %450 = vrot.lane.b32.xlu0 %v421, 32
    %v451 = vpop.permute.xlu0 %450
    %vm467 = vcmask 392448
    %vm468 = vsmask.f32 7424
    %vm469 = vmand %vm467, %vm468
    %v470 = vld [vmem:[%s282] sm:$0xff]
    %v471 = vsel %vm469, %v423, %v470
    %472 = vst [vmem:[%s282] sm:$0xff] %v471
    %v473 = vld [vmem:[%s282 + $0x10] sm:$0xff]
    %v474 = vsel %vm469, %v425, %v473
    %475 = vst [vmem:[%s282 + $0x10] sm:$0xff] %v474
    %v476 = vld [vmem:[%s282 + $0x20] sm:$0xff]
    %v477 = vsel %vm469, %v427, %v476
    %478 = vst [vmem:[%s282 + $0x20] sm:$0xff] %v477
    %v479 = vld [vmem:[%s282 + $0x30] sm:$0xff]
    %v480 = vsel %vm469, %v429, %v479
    %481 = vst [vmem:[%s282 + $0x30] sm:$0xff] %v480
    %v482 = vld [vmem:[%s282 + $0x40] sm:$0xff]
    %v483 = vsel %vm469, %v431, %v482
    %484 = vst [vmem:[%s282 + $0x40] sm:$0xff] %v483
    %v485 = vld [vmem:[%s282 + $0x50] sm:$0xff]
    %v486 = vsel %vm469, %v433, %v485
    %487 = vst [vmem:[%s282 + $0x50] sm:$0xff] %v486
    %v488 = vld [vmem:[%s282 + $0x60] sm:$0xff]
    %v489 = vsel %vm469, %v435, %v488
    %490 = vst [vmem:[%s282 + $0x60] sm:$0xff] %v489
    %v491 = vld [vmem:[%s282 + $0x70] sm:$0xff]
    %v492 = vsel %vm469, %v437, %v491
    %493 = vst [vmem:[%s282 + $0x70] sm:$0xff] %v492
    %v494 = vld [vmem:[%s282 + $0x80] sm:$0xff]
    %v495 = vsel %vm469, %v439, %v494
    %496 = vst [vmem:[%s282 + $0x80] sm:$0xff] %v495
    %v497 = vld [vmem:[%s282 + $0x90] sm:$0xff]
    %v498 = vsel %vm469, %v441, %v497
    %499 = vst [vmem:[%s282 + $0x90] sm:$0xff] %v498
    %v500 = vld [vmem:[%s282 + $0xa0] sm:$0xff]
    %v501 = vsel %vm469, %v443, %v500
    %502 = vst [vmem:[%s282 + $0xa0] sm:$0xff] %v501
    %v503 = vld [vmem:[%s282 + $0xb0] sm:$0xff]
    %v504 = vsel %vm469, %v445, %v503
    %505 = vst [vmem:[%s282 + $0xb0] sm:$0xff] %v504
    %v506 = vld [vmem:[%s282 + $0xc0] sm:$0xff]
    %v507 = vsel %vm469, %v447, %v506
    %508 = vst [vmem:[%s282 + $0xc0] sm:$0xff] %v507
    %v509 = vld [vmem:[%s282 + $0xd0] sm:$0xff]
    %v510 = vsel %vm469, %v449, %v509
    %511 = vst [vmem:[%s282 + $0xd0] sm:$0xff] %v510
    %v512 = vld [vmem:[%s282 + $0xe0] sm:$0xff]
    %v513 = vsel %vm469, %v451, %v512
    %514 = vst [vmem:[%s282 + $0xe0] sm:$0xff] %v513
    %v517 = vunpack.c.l.b16 %v85
    %v518 = vunpack.c.l.b16 %v86
    %v519 = vpack.c.b16 %v518, %v517
    %v521 = vshrl.u32 %v519, 16
    %v523 = vrot.slane %v521, 7
    %v524 = vshll.u32 %v519, 16
    %v526 = vor.u32 %v523, %v524
    %527 = vrot.lane.b32.xlu0 %v168, 48
    %v528 = vpop.permute.xlu0 %527
    %529 = vrot.lane.b32.xlu0 %v175, 48
    %v530 = vpop.permute.xlu0 %529
    %531 = vrot.lane.b32.xlu0 %v182, 48
    %v532 = vpop.permute.xlu0 %531
    %533 = vrot.lane.b32.xlu0 %v189, 48
    %v534 = vpop.permute.xlu0 %533
    %535 = vrot.lane.b32.xlu0 %v196, 48
    %v536 = vpop.permute.xlu0 %535
    %537 = vrot.lane.b32.xlu0 %v203, 48
    %v538 = vpop.permute.xlu0 %537
    %539 = vrot.lane.b32.xlu0 %v210, 48
    %v540 = vpop.permute.xlu0 %539
    %541 = vrot.lane.b32.xlu0 %v217, 48
    %v542 = vpop.permute.xlu0 %541
    %543 = vrot.lane.b32.xlu0 %v224, 48
    %v544 = vpop.permute.xlu0 %543
    %545 = vrot.lane.b32.xlu0 %v231, 48
    %v546 = vpop.permute.xlu0 %545
    %547 = vrot.lane.b32.xlu0 %v238, 48
    %v548 = vpop.permute.xlu0 %547
    %549 = vrot.lane.b32.xlu0 %v245, 48
    %v550 = vpop.permute.xlu0 %549
    %551 = vrot.lane.b32.xlu0 %v252, 48
    %v552 = vpop.permute.xlu0 %551
    %553 = vrot.lane.b32.xlu0 %v259, 48
    %v554 = vpop.permute.xlu0 %553
    %555 = vrot.lane.b32.xlu0 %v266, 48
    %v556 = vpop.permute.xlu0 %555
    %557 = vrot.lane.b32.xlu0 %v526, 48
    %v558 = vpop.permute.xlu0 %557
    %vm575 = vcmask 523648
    %vm576 = vmand %vm575, %vm284
    %v577 = vld [vmem:[#allocation2] sm:$0xff]
    %v578 = vsel %vm576, %v528, %v577
    %579 = vst [vmem:[#allocation2] sm:$0xff] %v578
    %v580 = vld [vmem:[#allocation2 + $0x10] sm:$0xff]
    %v581 = vsel %vm576, %v530, %v580
    %582 = vst [vmem:[#allocation2 + $0x10] sm:$0xff] %v581
    %v583 = vld [vmem:[#allocation2 + $0x20] sm:$0xff]
    %v584 = vsel %vm576, %v532, %v583
    %585 = vst [vmem:[#allocation2 + $0x20] sm:$0xff] %v584
    %v586 = vld [vmem:[#allocation2 + $0x30] sm:$0xff]
    %v587 = vsel %vm576, %v534, %v586
    %588 = vst [vmem:[#allocation2 + $0x30] sm:$0xff] %v587
    %v589 = vld [vmem:[#allocation2 + $0x40] sm:$0xff]
    %v590 = vsel %vm576, %v536, %v589
    %591 = vst [vmem:[#allocation2 + $0x40] sm:$0xff] %v590
    %v592 = vld [vmem:[#allocation2 + $0x50] sm:$0xff]
    %v593 = vsel %vm576, %v538, %v592
    %594 = vst [vmem:[#allocation2 + $0x50] sm:$0xff] %v593
    %v595 = vld [vmem:[#allocation2 + $0x60] sm:$0xff]
    %v596 = vsel %vm576, %v540, %v595
    %597 = vst [vmem:[#allocation2 + $0x60] sm:$0xff] %v596
    %v598 = vld [vmem:[#allocation2 + $0x70] sm:$0xff]
    %v599 = vsel %vm576, %v542, %v598
    %600 = vst [vmem:[#allocation2 + $0x70] sm:$0xff] %v599
    %v601 = vld [vmem:[#allocation2 + $0x80] sm:$0xff]
    %v602 = vsel %vm576, %v544, %v601
    %603 = vst [vmem:[#allocation2 + $0x80] sm:$0xff] %v602
    %v604 = vld [vmem:[#allocation2 + $0x90] sm:$0xff]
    %v605 = vsel %vm576, %v546, %v604
    %606 = vst [vmem:[#allocation2 + $0x90] sm:$0xff] %v605
    %v607 = vld [vmem:[#allocation2 + $0xa0] sm:$0xff]
    %v608 = vsel %vm576, %v548, %v607
    %609 = vst [vmem:[#allocation2 + $0xa0] sm:$0xff] %v608
    %v610 = vld [vmem:[#allocation2 + $0xb0] sm:$0xff]
    %v611 = vsel %vm576, %v550, %v610
    %612 = vst [vmem:[#allocation2 + $0xb0] sm:$0xff] %v611
    %v613 = vld [vmem:[#allocation2 + $0xc0] sm:$0xff]
    %v614 = vsel %vm576, %v552, %v613
    %615 = vst [vmem:[#allocation2 + $0xc0] sm:$0xff] %v614
    %v616 = vld [vmem:[#allocation2 + $0xd0] sm:$0xff]
    %v617 = vsel %vm576, %v554, %v616
    %618 = vst [vmem:[#allocation2 + $0xd0] sm:$0xff] %v617
    %v619 = vld [vmem:[#allocation2 + $0xe0] sm:$0xff]
    %v620 = vsel %vm576, %v556, %v619
    %621 = vst [vmem:[#allocation2 + $0xe0] sm:$0xff] %v620
    %v622 = vld [vmem:[#allocation2 + $0xf0] sm:$0xff]
    %v623 = vsel %vm576, %v558, %v622
    %624 = vst [vmem:[#allocation2 + $0xf0] sm:$0xff] %v623
    %625 = vrot.lane.b32.xlu0 %v147, 64
    %v626 = vpop.permute.xlu0 %625
    %627 = vrot.lane.b32.xlu0 %v148, 64
    %v628 = vpop.permute.xlu0 %627
    %629 = vrot.lane.b32.xlu0 %v149, 64
    %v630 = vpop.permute.xlu0 %629
    %631 = vrot.lane.b32.xlu0 %v150, 64
    %v632 = vpop.permute.xlu0 %631
    %633 = vrot.lane.b32.xlu0 %v151, 64
    %v634 = vpop.permute.xlu0 %633
    %635 = vrot.lane.b32.xlu0 %v152, 64
    %v636 = vpop.permute.xlu0 %635
    %637 = vrot.lane.b32.xlu0 %v153, 64
    %v638 = vpop.permute.xlu0 %637
    %639 = vrot.lane.b32.xlu0 %v154, 64
    %v640 = vpop.permute.xlu0 %639
    %641 = vrot.lane.b32.xlu0 %v155, 64
    %v642 = vpop.permute.xlu0 %641
    %643 = vrot.lane.b32.xlu0 %v156, 64
    %v644 = vpop.permute.xlu0 %643
    %645 = vrot.lane.b32.xlu0 %v157, 64
    %v646 = vpop.permute.xlu0 %645
    %647 = vrot.lane.b32.xlu0 %v158, 64
    %v648 = vpop.permute.xlu0 %647
    %649 = vrot.lane.b32.xlu0 %v159, 64
    %v650 = vpop.permute.xlu0 %649
    %651 = vrot.lane.b32.xlu0 %v160, 64
    %v652 = vpop.permute.xlu0 %651
    %653 = vrot.lane.b32.xlu0 %v161, 64
    %v654 = vpop.permute.xlu0 %653
    %655 = vrot.lane.b32.xlu0 %v519, 64
    %v656 = vpop.permute.xlu0 %655
    %vm673 = vcmask 654848
    %674 = vst.msk [vmem:[#allocation2] sm:$0xff] %vm673, %v626
    %675 = vst.msk [vmem:[#allocation2 + $0x10] sm:$0xff] %vm673, %v628
    %676 = vst.msk [vmem:[#allocation2 + $0x20] sm:$0xff] %vm673, %v630
    %677 = vst.msk [vmem:[#allocation2 + $0x30] sm:$0xff] %vm673, %v632
    %678 = vst.msk [vmem:[#allocation2 + $0x40] sm:$0xff] %vm673, %v634
    %679 = vst.msk [vmem:[#allocation2 + $0x50] sm:$0xff] %vm673, %v636
    %680 = vst.msk [vmem:[#allocation2 + $0x60] sm:$0xff] %vm673, %v638
    %681 = vst.msk [vmem:[#allocation2 + $0x70] sm:$0xff] %vm673, %v640
    %682 = vst.msk [vmem:[#allocation2 + $0x80] sm:$0xff] %vm673, %v642
    %683 = vst.msk [vmem:[#allocation2 + $0x90] sm:$0xff] %vm673, %v644
    %684 = vst.msk [vmem:[#allocation2 + $0xa0] sm:$0xff] %vm673, %v646
    %685 = vst.msk [vmem:[#allocation2 + $0xb0] sm:$0xff] %vm673, %v648
    %686 = vst.msk [vmem:[#allocation2 + $0xc0] sm:$0xff] %vm673, %v650
    %687 = vst.msk [vmem:[#allocation2 + $0xd0] sm:$0xff] %vm673, %v652
    %688 = vst.msk [vmem:[#allocation2 + $0xe0] sm:$0xff] %vm673, %v654
    %689 = vst.msk [vmem:[#allocation2 + $0xf0] sm:$0xff] %vm673, %v656
    %v690 = vrot.slane %v524, 1
    %v691 = vor.u32 %v521, %v690
    %692 = vrot.lane.b32.xlu0 %v393, 80
    %v693 = vpop.permute.xlu0 %692
    %694 = vrot.lane.b32.xlu0 %v395, 80
    %v695 = vpop.permute.xlu0 %694
    %696 = vrot.lane.b32.xlu0 %v397, 80
    %v697 = vpop.permute.xlu0 %696
    %698 = vrot.lane.b32.xlu0 %v399, 80
    %v699 = vpop.permute.xlu0 %698
    %700 = vrot.lane.b32.xlu0 %v401, 80
    %v701 = vpop.permute.xlu0 %700
    %702 = vrot.lane.b32.xlu0 %v403, 80
    %v703 = vpop.permute.xlu0 %702
    %704 = vrot.lane.b32.xlu0 %v405, 80
    %v705 = vpop.permute.xlu0 %704
    %706 = vrot.lane.b32.xlu0 %v407, 80
    %v707 = vpop.permute.xlu0 %706
    %708 = vrot.lane.b32.xlu0 %v409, 80
    %v709 = vpop.permute.xlu0 %708
    %710 = vrot.lane.b32.xlu0 %v411, 80
    %v711 = vpop.permute.xlu0 %710
    %712 = vrot.lane.b32.xlu0 %v413, 80
    %v713 = vpop.permute.xlu0 %712
    %714 = vrot.lane.b32.xlu0 %v415, 80
    %v715 = vpop.permute.xlu0 %714
    %716 = vrot.lane.b32.xlu0 %v417, 80
    %v717 = vpop.permute.xlu0 %716
    %718 = vrot.lane.b32.xlu0 %v419, 80
    %v719 = vpop.permute.xlu0 %718
    %720 = vrot.lane.b32.xlu0 %v421, 80
    %v721 = vpop.permute.xlu0 %720
    %722 = vrot.lane.b32.xlu0 %v691, 80
    %v723 = vpop.permute.xlu0 %722
    %vm740 = vcmask 786048
    %vm741 = vmand %vm740, %vm468
    %v742 = vld [vmem:[#allocation2] sm:$0xff]
    %v743 = vsel %vm741, %v693, %v742
    %744 = vst [vmem:[#allocation2] sm:$0xff] %v743
    %v745 = vld [vmem:[#allocation2 + $0x10] sm:$0xff]
    %v746 = vsel %vm741, %v695, %v745
    %747 = vst [vmem:[#allocation2 + $0x10] sm:$0xff] %v746
    %v748 = vld [vmem:[#allocation2 + $0x20] sm:$0xff]
    %v749 = vsel %vm741, %v697, %v748
    %750 = vst [vmem:[#allocation2 + $0x20] sm:$0xff] %v749
    %v751 = vld [vmem:[#allocation2 + $0x30] sm:$0xff]
    %v752 = vsel %vm741, %v699, %v751
    %753 = vst [vmem:[#allocation2 + $0x30] sm:$0xff] %v752
    %v754 = vld [vmem:[#allocation2 + $0x40] sm:$0xff]
    %v755 = vsel %vm741, %v701, %v754
    %756 = vst [vmem:[#allocation2 + $0x40] sm:$0xff] %v755
    %v757 = vld [vmem:[#allocation2 + $0x50] sm:$0xff]
    %v758 = vsel %vm741, %v703, %v757
    %759 = vst [vmem:[#allocation2 + $0x50] sm:$0xff] %v758
    %v760 = vld [vmem:[#allocation2 + $0x60] sm:$0xff]
    %v761 = vsel %vm741, %v705, %v760
    %762 = vst [vmem:[#allocation2 + $0x60] sm:$0xff] %v761
    %v763 = vld [vmem:[#allocation2 + $0x70] sm:$0xff]
    %v764 = vsel %vm741, %v707, %v763
    %765 = vst [vmem:[#allocation2 + $0x70] sm:$0xff] %v764
    %v766 = vld [vmem:[#allocation2 + $0x80] sm:$0xff]
    %v767 = vsel %vm741, %v709, %v766
    %768 = vst [vmem:[#allocation2 + $0x80] sm:$0xff] %v767
    %v769 = vld [vmem:[#allocation2 + $0x90] sm:$0xff]
    %v770 = vsel %vm741, %v711, %v769
    %771 = vst [vmem:[#allocation2 + $0x90] sm:$0xff] %v770
    %v772 = vld [vmem:[#allocation2 + $0xa0] sm:$0xff]
    %v773 = vsel %vm741, %v713, %v772
    %774 = vst [vmem:[#allocation2 + $0xa0] sm:$0xff] %v773
    %v775 = vld [vmem:[#allocation2 + $0xb0] sm:$0xff]
    %v776 = vsel %vm741, %v715, %v775
    %777 = vst [vmem:[#allocation2 + $0xb0] sm:$0xff] %v776
    %v778 = vld [vmem:[#allocation2 + $0xc0] sm:$0xff]
    %v779 = vsel %vm741, %v717, %v778
    %780 = vst [vmem:[#allocation2 + $0xc0] sm:$0xff] %v779
    %v781 = vld [vmem:[#allocation2 + $0xd0] sm:$0xff]
    %v782 = vsel %vm741, %v719, %v781
    %783 = vst [vmem:[#allocation2 + $0xd0] sm:$0xff] %v782
    %v784 = vld [vmem:[#allocation2 + $0xe0] sm:$0xff]
    %v785 = vsel %vm741, %v721, %v784
    %786 = vst [vmem:[#allocation2 + $0xe0] sm:$0xff] %v785
    %v787 = vld [vmem:[#allocation2 + $0xf0] sm:$0xff]
    %v788 = vsel %vm741, %v723, %v787
    %789 = vst [vmem:[#allocation2 + $0xf0] sm:$0xff] %v788
    %790 = vrot.lane.b32.xlu0 %v175, 96
    %v791 = vpop.permute.xlu0 %790
    %792 = vrot.lane.b32.xlu0 %v182, 96
    %v793 = vpop.permute.xlu0 %792
    %794 = vrot.lane.b32.xlu0 %v189, 96
    %v795 = vpop.permute.xlu0 %794
    %796 = vrot.lane.b32.xlu0 %v196, 96
    %v797 = vpop.permute.xlu0 %796
    %798 = vrot.lane.b32.xlu0 %v203, 96
    %v799 = vpop.permute.xlu0 %798
    %800 = vrot.lane.b32.xlu0 %v210, 96
    %v801 = vpop.permute.xlu0 %800
    %802 = vrot.lane.b32.xlu0 %v217, 96
    %v803 = vpop.permute.xlu0 %802
    %804 = vrot.lane.b32.xlu0 %v224, 96
    %v805 = vpop.permute.xlu0 %804
    %806 = vrot.lane.b32.xlu0 %v231, 96
    %v807 = vpop.permute.xlu0 %806
    %808 = vrot.lane.b32.xlu0 %v238, 96
    %v809 = vpop.permute.xlu0 %808
    %810 = vrot.lane.b32.xlu0 %v245, 96
    %v811 = vpop.permute.xlu0 %810
    %812 = vrot.lane.b32.xlu0 %v252, 96
    %v813 = vpop.permute.xlu0 %812
    %814 = vrot.lane.b32.xlu0 %v259, 96
    %v815 = vpop.permute.xlu0 %814
    %816 = vrot.lane.b32.xlu0 %v266, 96
    %v817 = vpop.permute.xlu0 %816
    %818 = vrot.lane.b32.xlu0 %v526, 96
    %v819 = vpop.permute.xlu0 %818
    %vm835 = vcmask 917248
    %vm836 = vmand %vm835, %vm284
    %v837 = vld [vmem:[#allocation2] sm:$0xff]
    %v838 = vsel %vm836, %v791, %v837
    %839 = vst [vmem:[#allocation2] sm:$0xff] %v838
    %v840 = vld [vmem:[#allocation2 + $0x10] sm:$0xff]
    %v841 = vsel %vm836, %v793, %v840
    %842 = vst [vmem:[#allocation2 + $0x10] sm:$0xff] %v841
    %v843 = vld [vmem:[#allocation2 + $0x20] sm:$0xff]
    %v844 = vsel %vm836, %v795, %v843
    %845 = vst [vmem:[#allocation2 + $0x20] sm:$0xff] %v844
    %v846 = vld [vmem:[#allocation2 + $0x30] sm:$0xff]
    %v847 = vsel %vm836, %v797, %v846
    %848 = vst [vmem:[#allocation2 + $0x30] sm:$0xff] %v847
    %v849 = vld [vmem:[#allocation2 + $0x40] sm:$0xff]
    %v850 = vsel %vm836, %v799, %v849
    %851 = vst [vmem:[#allocation2 + $0x40] sm:$0xff] %v850
    %v852 = vld [vmem:[#allocation2 + $0x50] sm:$0xff]
    %v853 = vsel %vm836, %v801, %v852
    %854 = vst [vmem:[#allocation2 + $0x50] sm:$0xff] %v853
    %v855 = vld [vmem:[#allocation2 + $0x60] sm:$0xff]
    %v856 = vsel %vm836, %v803, %v855
    %857 = vst [vmem:[#allocation2 + $0x60] sm:$0xff] %v856
    %v858 = vld [vmem:[#allocation2 + $0x70] sm:$0xff]
    %v859 = vsel %vm836, %v805, %v858
    %860 = vst [vmem:[#allocation2 + $0x70] sm:$0xff] %v859
    %v861 = vld [vmem:[#allocation2 + $0x80] sm:$0xff]
    %v862 = vsel %vm836, %v807, %v861
    %863 = vst [vmem:[#allocation2 + $0x80] sm:$0xff] %v862
    %v864 = vld [vmem:[#allocation2 + $0x90] sm:$0xff]
    %v865 = vsel %vm836, %v809, %v864
    %866 = vst [vmem:[#allocation2 + $0x90] sm:$0xff] %v865
    %v867 = vld [vmem:[#allocation2 + $0xa0] sm:$0xff]
    %v868 = vsel %vm836, %v811, %v867
    %869 = vst [vmem:[#allocation2 + $0xa0] sm:$0xff] %v868
    %v870 = vld [vmem:[#allocation2 + $0xb0] sm:$0xff]
    %v871 = vsel %vm836, %v813, %v870
    %872 = vst [vmem:[#allocation2 + $0xb0] sm:$0xff] %v871
    %v873 = vld [vmem:[#allocation2 + $0xc0] sm:$0xff]
    %v874 = vsel %vm836, %v815, %v873
    %875 = vst [vmem:[#allocation2 + $0xc0] sm:$0xff] %v874
    %v876 = vld [vmem:[#allocation2 + $0xd0] sm:$0xff]
    %v877 = vsel %vm836, %v817, %v876
    %878 = vst [vmem:[#allocation2 + $0xd0] sm:$0xff] %v877
    %v879 = vld [vmem:[#allocation2 + $0xe0] sm:$0xff]
    %v880 = vsel %vm836, %v819, %v879
    %881 = vst [vmem:[#allocation2 + $0xe0] sm:$0xff] %v880
    %882 = vrot.lane.b32.xlu0 %v148, 112
    %v883 = vpop.permute.xlu0 %882
    %884 = vrot.lane.b32.xlu0 %v149, 112
    %v885 = vpop.permute.xlu0 %884
    %886 = vrot.lane.b32.xlu0 %v150, 112
    %v887 = vpop.permute.xlu0 %886
    %888 = vrot.lane.b32.xlu0 %v151, 112
    %v889 = vpop.permute.xlu0 %888
    %890 = vrot.lane.b32.xlu0 %v152, 112
    %v891 = vpop.permute.xlu0 %890
    %892 = vrot.lane.b32.xlu0 %v153, 112
    %v893 = vpop.permute.xlu0 %892
    %894 = vrot.lane.b32.xlu0 %v154, 112
    %v895 = vpop.permute.xlu0 %894
    %896 = vrot.lane.b32.xlu0 %v155, 112
    %v897 = vpop.permute.xlu0 %896
    %898 = vrot.lane.b32.xlu0 %v156, 112
    %v899 = vpop.permute.xlu0 %898
    %900 = vrot.lane.b32.xlu0 %v157, 112
    %v901 = vpop.permute.xlu0 %900
    %902 = vrot.lane.b32.xlu0 %v158, 112
    %v903 = vpop.permute.xlu0 %902
    %904 = vrot.lane.b32.xlu0 %v159, 112
    %v905 = vpop.permute.xlu0 %904
    %906 = vrot.lane.b32.xlu0 %v160, 112
    %v907 = vpop.permute.xlu0 %906
    %908 = vrot.lane.b32.xlu0 %v161, 112
    %v909 = vpop.permute.xlu0 %908
    %910 = vrot.lane.b32.xlu0 %v519, 112
    %v911 = vpop.permute.xlu0 %910
    %vm927 = vcmask 1048448
    %928 = vst.msk [vmem:[#allocation2] sm:$0xff] %vm927, %v883
    %929 = vst.msk [vmem:[#allocation2 + $0x10] sm:$0xff] %vm927, %v885
    %930 = vst.msk [vmem:[#allocation2 + $0x20] sm:$0xff] %vm927, %v887
    %931 = vst.msk [vmem:[#allocation2 + $0x30] sm:$0xff] %vm927, %v889
    %932 = vst.msk [vmem:[#allocation2 + $0x40] sm:$0xff] %vm927, %v891
    %933 = vst.msk [vmem:[#allocation2 + $0x50] sm:$0xff] %vm927, %v893
    %934 = vst.msk [vmem:[#allocation2 + $0x60] sm:$0xff] %vm927, %v895
    %935 = vst.msk [vmem:[#allocation2 + $0x70] sm:$0xff] %vm927, %v897
    %936 = vst.msk [vmem:[#allocation2 + $0x80] sm:$0xff] %vm927, %v899
    %937 = vst.msk [vmem:[#allocation2 + $0x90] sm:$0xff] %vm927, %v901
    %938 = vst.msk [vmem:[#allocation2 + $0xa0] sm:$0xff] %vm927, %v903
    %939 = vst.msk [vmem:[#allocation2 + $0xb0] sm:$0xff] %vm927, %v905
    %940 = vst.msk [vmem:[#allocation2 + $0xc0] sm:$0xff] %vm927, %v907
    %941 = vst.msk [vmem:[#allocation2 + $0xd0] sm:$0xff] %vm927, %v909
    %942 = vst.msk [vmem:[#allocation2 + $0xe0] sm:$0xff] %vm927, %v911
    %vm958 = vmand %vm283, %vm468
    %v959 = vld [vmem:[#allocation2 + $0x8] sm:$0xff]
    %v960 = vsel %vm958, %v395, %v959
    %961 = vst [vmem:[#allocation2 + $0x8] sm:$0xff] %v960
    %v962 = vld [vmem:[#allocation2 + $0x18] sm:$0xff]
    %v963 = vsel %vm958, %v397, %v962
    %964 = vst [vmem:[#allocation2 + $0x18] sm:$0xff] %v963
    %v965 = vld [vmem:[#allocation2 + $0x28] sm:$0xff]
    %v966 = vsel %vm958, %v399, %v965
    %967 = vst [vmem:[#allocation2 + $0x28] sm:$0xff] %v966
    %v968 = vld [vmem:[#allocation2 + $0x38] sm:$0xff]
    %v969 = vsel %vm958, %v401, %v968
    %970 = vst [vmem:[#allocation2 + $0x38] sm:$0xff] %v969
    %v971 = vld [vmem:[#allocation2 + $0x48] sm:$0xff]
    %v972 = vsel %vm958, %v403, %v971
    %973 = vst [vmem:[#allocation2 + $0x48] sm:$0xff] %v972
    %v974 = vld [vmem:[#allocation2 + $0x58] sm:$0xff]
    %v975 = vsel %vm958, %v405, %v974
    %976 = vst [vmem:[#allocation2 + $0x58] sm:$0xff] %v975
    %v977 = vld [vmem:[#allocation2 + $0x68] sm:$0xff]
    %v978 = vsel %vm958, %v407, %v977
    %979 = vst [vmem:[#allocation2 + $0x68] sm:$0xff] %v978
    %v980 = vld [vmem:[#allocation2 + $0x78] sm:$0xff]
    %v981 = vsel %vm958, %v409, %v980
    %982 = vst [vmem:[#allocation2 + $0x78] sm:$0xff] %v981
    %v983 = vld [vmem:[#allocation2 + $0x88] sm:$0xff]
    %v984 = vsel %vm958, %v411, %v983
    %985 = vst [vmem:[#allocation2 + $0x88] sm:$0xff] %v984
    %v986 = vld [vmem:[#allocation2 + $0x98] sm:$0xff]
    %v987 = vsel %vm958, %v413, %v986
    %988 = vst [vmem:[#allocation2 + $0x98] sm:$0xff] %v987
    %v989 = vld [vmem:[#allocation2 + $0xa8] sm:$0xff]
    %v990 = vsel %vm958, %v415, %v989
    %991 = vst [vmem:[#allocation2 + $0xa8] sm:$0xff] %v990
    %v992 = vld [vmem:[#allocation2 + $0xb8] sm:$0xff]
    %v993 = vsel %vm958, %v417, %v992
    %994 = vst [vmem:[#allocation2 + $0xb8] sm:$0xff] %v993
    %v995 = vld [vmem:[#allocation2 + $0xc8] sm:$0xff]
    %v996 = vsel %vm958, %v419, %v995
    %997 = vst [vmem:[#allocation2 + $0xc8] sm:$0xff] %v996
    %v998 = vld [vmem:[#allocation2 + $0xd8] sm:$0xff]
    %v999 = vsel %vm958, %v421, %v998
    %1000 = vst [vmem:[#allocation2 + $0xd8] sm:$0xff] %v999
    %v1001 = vld [vmem:[#allocation2 + $0xe8] sm:$0xff]
    %v1002 = vsel %vm958, %v691, %v1001
    %1003 = vst [vmem:[#allocation2 + $0xe8] sm:$0xff] %v1002
    %v1004 = vld [vmem:[%s1] sm:$0xf]
    %v1005 = vld [vmem:[%s1 + $0x4] sm:$0xf]
    %v1006 = vld [vmem:[%s1 + $0x8] sm:$0xf]
    %v1007 = vld [vmem:[%s1 + $0xc] sm:$0xf]
    %v1008 = vld [vmem:[%s1 + $0x10] sm:$0xf]
    %v1009 = vld [vmem:[%s1 + $0x14] sm:$0xf]
    %v1010 = vld [vmem:[%s1 + $0x18] sm:$0xf]
    %v1011 = vld [vmem:[%s1 + $0x1c] sm:$0xf]
    %v1012 = vld [vmem:[%s1 + $0x20] sm:$0xf]
    %v1013 = vld [vmem:[%s1 + $0x24] sm:$0xf]
    %v1014 = vld [vmem:[%s1 + $0x28] sm:$0xf]
    %v1015 = vld [vmem:[%s1 + $0x2c] sm:$0xf]
    %v1016 = vld [vmem:[%s1 + $0x30] sm:$0xf]
    %v1017 = vld [vmem:[%s1 + $0x34] sm:$0xf]
    %v1018 = vld [vmem:[%s1 + $0x38] sm:$0xf]
    %v1019 = vld [vmem:[%s1 + $0x3c] sm:$0xf]
    %v1020 = vld [vmem:[%s1 + $0x40] sm:$0xf]
    %v1021 = vld [vmem:[%s1 + $0x44] sm:$0xf]
    %v1022 = vld [vmem:[%s1 + $0x48] sm:$0xf]
    %v1023 = vld [vmem:[%s1 + $0x4c] sm:$0xf]
    %v1024 = vld [vmem:[%s1 + $0x50] sm:$0xf]
    %v1025 = vld [vmem:[%s1 + $0x54] sm:$0xf]
    %v1026 = vld [vmem:[%s1 + $0x58] sm:$0xf]
    %v1027 = vld [vmem:[%s1 + $0x5c] sm:$0xf]
    %v1028 = vld [vmem:[%s1 + $0x60] sm:$0xf]
    %v1029 = vld [vmem:[%s1 + $0x64] sm:$0xf]
    %v1030 = vld [vmem:[%s1 + $0x68] sm:$0xf]
    %v1031 = vld [vmem:[%s1 + $0x6c] sm:$0xf]
    %v1032 = vld [vmem:[%s1 + $0x70] sm:$0xf]
    %v1033 = vld [vmem:[%s1 + $0x74] sm:$0xf]
    %v1034 = vld [vmem:[%s1 + $0x78] sm:$0xf]
    %v1035 = vld [vmem:[%s1 + $0x7c] sm:$0xf]
    %v1066 = vunpack.c.l.b16 %v1004
    %v1067 = vunpack.c.l.b16 %v1005
    %v1068 = vunpack.c.l.b16 %v1006
    %v1069 = vunpack.c.l.b16 %v1007
    %v1070 = vunpack.c.l.b16 %v1008
    %v1071 = vunpack.c.l.b16 %v1009
    %v1072 = vunpack.c.l.b16 %v1010
    %v1073 = vunpack.c.l.b16 %v1011
    %v1074 = vunpack.c.l.b16 %v1012
    %v1075 = vunpack.c.l.b16 %v1013
    %v1076 = vunpack.c.l.b16 %v1014
    %v1077 = vunpack.c.l.b16 %v1015
    %v1078 = vunpack.c.l.b16 %v1016
    %v1079 = vunpack.c.l.b16 %v1017
    %v1080 = vunpack.c.l.b16 %v1018
    %v1081 = vunpack.c.l.b16 %v1019
    %v1082 = vunpack.c.l.b16 %v1020
    %v1083 = vunpack.c.l.b16 %v1021
    %v1084 = vunpack.c.l.b16 %v1022
    %v1085 = vunpack.c.l.b16 %v1023
    %v1086 = vunpack.c.l.b16 %v1024
    %v1087 = vunpack.c.l.b16 %v1025
    %v1088 = vunpack.c.l.b16 %v1026
    %v1089 = vunpack.c.l.b16 %v1027
    %v1090 = vunpack.c.l.b16 %v1028
    %v1091 = vunpack.c.l.b16 %v1029
    %v1092 = vunpack.c.l.b16 %v1030
    %v1093 = vunpack.c.l.b16 %v1031
    %v1094 = vunpack.c.l.b16 %v1032
    %v1095 = vunpack.c.l.b16 %v1033
    %v1096 = vpack.c.b16 %v1067, %v1066
    %v1097 = vpack.c.b16 %v1069, %v1068
    %v1098 = vpack.c.b16 %v1071, %v1070
    %v1099 = vpack.c.b16 %v1073, %v1072
    %v1100 = vpack.c.b16 %v1075, %v1074
    %v1101 = vpack.c.b16 %v1077, %v1076
    %v1102 = vpack.c.b16 %v1079, %v1078
    %v1103 = vpack.c.b16 %v1081, %v1080
    %v1104 = vpack.c.b16 %v1083, %v1082
    %v1105 = vpack.c.b16 %v1085, %v1084
    %v1106 = vpack.c.b16 %v1087, %v1086
    %v1107 = vpack.c.b16 %v1089, %v1088
    %v1108 = vpack.c.b16 %v1091, %v1090
    %v1109 = vpack.c.b16 %v1093, %v1092
    %v1110 = vpack.c.b16 %v1095, %v1094
    %v1112 = vshrl.u32 %v1096, 16
    %v1114 = vrot.slane %v1112, 7
    %v1115 = vshll.u32 %v1096, 16
    %v1117 = vor.u32 %v1114, %v1115
    %v1119 = vshrl.u32 %v1097, 16
    %v1121 = vrot.slane %v1119, 7
    %v1122 = vshll.u32 %v1097, 16
    %v1124 = vor.u32 %v1121, %v1122
    %v1126 = vshrl.u32 %v1098, 16
    %v1128 = vrot.slane %v1126, 7
    %v1129 = vshll.u32 %v1098, 16
    %v1131 = vor.u32 %v1128, %v1129
    %v1133 = vshrl.u32 %v1099, 16
    %v1135 = vrot.slane %v1133, 7
    %v1136 = vshll.u32 %v1099, 16
    %v1138 = vor.u32 %v1135, %v1136
    %v1140 = vshrl.u32 %v1100, 16
    %v1142 = vrot.slane %v1140, 7
    %v1143 = vshll.u32 %v1100, 16
    %v1145 = vor.u32 %v1142, %v1143
    %v1147 = vshrl.u32 %v1101, 16
    %v1149 = vrot.slane %v1147, 7
    %v1150 = vshll.u32 %v1101, 16
    %v1152 = vor.u32 %v1149, %v1150
    %v1154 = vshrl.u32 %v1102, 16
    %v1156 = vrot.slane %v1154, 7
    %v1157 = vshll.u32 %v1102, 16
    %v1159 = vor.u32 %v1156, %v1157
    %v1161 = vshrl.u32 %v1103, 16
    %v1163 = vrot.slane %v1161, 7
    %v1164 = vshll.u32 %v1103, 16
    %v1166 = vor.u32 %v1163, %v1164
    %v1168 = vshrl.u32 %v1104, 16
    %v1170 = vrot.slane %v1168, 7
    %v1171 = vshll.u32 %v1104, 16
    %v1173 = vor.u32 %v1170, %v1171
    %v1175 = vshrl.u32 %v1105, 16
    %v1177 = vrot.slane %v1175, 7
    %v1178 = vshll.u32 %v1105, 16
    %v1180 = vor.u32 %v1177, %v1178
    %v1182 = vshrl.u32 %v1106, 16
    %v1184 = vrot.slane %v1182, 7
    %v1185 = vshll.u32 %v1106, 16
    %v1187 = vor.u32 %v1184, %v1185
    %v1189 = vshrl.u32 %v1107, 16
    %v1191 = vrot.slane %v1189, 7
    %v1192 = vshll.u32 %v1107, 16
    %v1194 = vor.u32 %v1191, %v1192
    %v1196 = vshrl.u32 %v1108, 16
    %v1198 = vrot.slane %v1196, 7
    %v1199 = vshll.u32 %v1108, 16
    %v1201 = vor.u32 %v1198, %v1199
    %v1203 = vshrl.u32 %v1109, 16
    %v1205 = vrot.slane %v1203, 7
    %v1206 = vshll.u32 %v1109, 16
    %v1208 = vor.u32 %v1205, %v1206
    %v1210 = vshrl.u32 %v1110, 16
    %v1212 = vrot.slane %v1210, 7
    %v1213 = vshll.u32 %v1110, 16
    %v1215 = vor.u32 %v1212, %v1213
    %1216 = vrot.lane.b32.xlu0 %v1117, 16
    %v1217 = vpop.permute.xlu0 %1216
    %1218 = vrot.lane.b32.xlu0 %v1124, 16
    %v1219 = vpop.permute.xlu0 %1218
    %1220 = vrot.lane.b32.xlu0 %v1131, 16
    %v1221 = vpop.permute.xlu0 %1220
    %1222 = vrot.lane.b32.xlu0 %v1138, 16
    %v1223 = vpop.permute.xlu0 %1222
    %1224 = vrot.lane.b32.xlu0 %v1145, 16
    %v1225 = vpop.permute.xlu0 %1224
    %1226 = vrot.lane.b32.xlu0 %v1152, 16
    %v1227 = vpop.permute.xlu0 %1226
    %1228 = vrot.lane.b32.xlu0 %v1159, 16
    %v1229 = vpop.permute.xlu0 %1228
    %1230 = vrot.lane.b32.xlu0 %v1166, 16
    %v1231 = vpop.permute.xlu0 %1230
    %1232 = vrot.lane.b32.xlu0 %v1173, 16
    %v1233 = vpop.permute.xlu0 %1232
    %1234 = vrot.lane.b32.xlu0 %v1180, 16
    %v1235 = vpop.permute.xlu0 %1234
    %1236 = vrot.lane.b32.xlu0 %v1187, 16
    %v1237 = vpop.permute.xlu0 %1236
    %1238 = vrot.lane.b32.xlu0 %v1194, 16
    %v1239 = vpop.permute.xlu0 %1238
    %1240 = vrot.lane.b32.xlu0 %v1201, 16
    %v1241 = vpop.permute.xlu0 %1240
    %1242 = vrot.lane.b32.xlu0 %v1208, 16
    %v1243 = vpop.permute.xlu0 %1242
    %1244 = vrot.lane.b32.xlu0 %v1215, 16
    %v1245 = vpop.permute.xlu0 %1244
    %vm1261 = vcmask 195712
    %vm1262 = vmand %vm1261, %vm284
    %v1263 = vld [vmem:[%s282 + $0x8] sm:$0xff]
    %v1264 = vsel %vm1262, %v1217, %v1263
    %1265 = vst [vmem:[%s282 + $0x8] sm:$0xff] %v1264
    %v1266 = vld [vmem:[%s282 + $0x18] sm:$0xff]
    %v1267 = vsel %vm1262, %v1219, %v1266
    %1268 = vst [vmem:[%s282 + $0x18] sm:$0xff] %v1267
    %v1269 = vld [vmem:[%s282 + $0x28] sm:$0xff]
    %v1270 = vsel %vm1262, %v1221, %v1269
    %1271 = vst [vmem:[%s282 + $0x28] sm:$0xff] %v1270
    %v1272 = vld [vmem:[%s282 + $0x38] sm:$0xff]
    %v1273 = vsel %vm1262, %v1223, %v1272
    %1274 = vst [vmem:[%s282 + $0x38] sm:$0xff] %v1273
    %v1275 = vld [vmem:[%s282 + $0x48] sm:$0xff]
    %v1276 = vsel %vm1262, %v1225, %v1275
    %1277 = vst [vmem:[%s282 + $0x48] sm:$0xff] %v1276
    %v1278 = vld [vmem:[%s282 + $0x58] sm:$0xff]
    %v1279 = vsel %vm1262, %v1227, %v1278
    %1280 = vst [vmem:[%s282 + $0x58] sm:$0xff] %v1279
    %v1281 = vld [vmem:[%s282 + $0x68] sm:$0xff]
    %v1282 = vsel %vm1262, %v1229, %v1281
    %1283 = vst [vmem:[%s282 + $0x68] sm:$0xff] %v1282
    %v1284 = vld [vmem:[%s282 + $0x78] sm:$0xff]
    %v1285 = vsel %vm1262, %v1231, %v1284
    %1286 = vst [vmem:[%s282 + $0x78] sm:$0xff] %v1285
    %v1287 = vld [vmem:[%s282 + $0x88] sm:$0xff]
    %v1288 = vsel %vm1262, %v1233, %v1287
    %1289 = vst [vmem:[%s282 + $0x88] sm:$0xff] %v1288
    %v1290 = vld [vmem:[%s282 + $0x98] sm:$0xff]
    %v1291 = vsel %vm1262, %v1235, %v1290
    %1292 = vst [vmem:[%s282 + $0x98] sm:$0xff] %v1291
    %v1293 = vld [vmem:[%s282 + $0xa8] sm:$0xff]
    %v1294 = vsel %vm1262, %v1237, %v1293
    %1295 = vst [vmem:[%s282 + $0xa8] sm:$0xff] %v1294
    %v1296 = vld [vmem:[%s282 + $0xb8] sm:$0xff]
    %v1297 = vsel %vm1262, %v1239, %v1296
    %1298 = vst [vmem:[%s282 + $0xb8] sm:$0xff] %v1297
    %v1299 = vld [vmem:[%s282 + $0xc8] sm:$0xff]
    %v1300 = vsel %vm1262, %v1241, %v1299
    %1301 = vst [vmem:[%s282 + $0xc8] sm:$0xff] %v1300
    %v1302 = vld [vmem:[%s282 + $0xd8] sm:$0xff]
    %v1303 = vsel %vm1262, %v1243, %v1302
    %1304 = vst [vmem:[%s282 + $0xd8] sm:$0xff] %v1303
    %v1305 = vld [vmem:[%s282 + $0xe8] sm:$0xff]
    %v1306 = vsel %vm1262, %v1245, %v1305
    %1307 = vst [vmem:[%s282 + $0xe8] sm:$0xff] %v1306
    %1308 = vrot.lane.b32.xlu0 %v1096, 24
    %v1309 = vpop.permute.xlu0 %1308
    %1310 = vrot.lane.b32.xlu0 %v1097, 24
    %v1311 = vpop.permute.xlu0 %1310
    %1312 = vrot.lane.b32.xlu0 %v1098, 24
    %v1313 = vpop.permute.xlu0 %1312
    %1314 = vrot.lane.b32.xlu0 %v1099, 24
    %v1315 = vpop.permute.xlu0 %1314
    %1316 = vrot.lane.b32.xlu0 %v1100, 24
    %v1317 = vpop.permute.xlu0 %1316
    %1318 = vrot.lane.b32.xlu0 %v1101, 24
    %v1319 = vpop.permute.xlu0 %1318
    %1320 = vrot.lane.b32.xlu0 %v1102, 24
    %v1321 = vpop.permute.xlu0 %1320
    %1322 = vrot.lane.b32.xlu0 %v1103, 24
    %v1323 = vpop.permute.xlu0 %1322
    %1324 = vrot.lane.b32.xlu0 %v1104, 24
    %v1325 = vpop.permute.xlu0 %1324
    %1326 = vrot.lane.b32.xlu0 %v1105, 24
    %v1327 = vpop.permute.xlu0 %1326
    %1328 = vrot.lane.b32.xlu0 %v1106, 24
    %v1329 = vpop.permute.xlu0 %1328
    %1330 = vrot.lane.b32.xlu0 %v1107, 24
    %v1331 = vpop.permute.xlu0 %1330
    %1332 = vrot.lane.b32.xlu0 %v1108, 24
    %v1333 = vpop.permute.xlu0 %1332
    %1334 = vrot.lane.b32.xlu0 %v1109, 24
    %v1335 = vpop.permute.xlu0 %1334
    %1336 = vrot.lane.b32.xlu0 %v1110, 24
    %v1337 = vpop.permute.xlu0 %1336
    %vm1353 = vcmask 261312
    %1354 = vst.msk [vmem:[%s282 + $0x8] sm:$0xff] %vm1353, %v1309
    %1355 = vst.msk [vmem:[%s282 + $0x18] sm:$0xff] %vm1353, %v1311
    %1356 = vst.msk [vmem:[%s282 + $0x28] sm:$0xff] %vm1353, %v1313
    %1357 = vst.msk [vmem:[%s282 + $0x38] sm:$0xff] %vm1353, %v1315
    %1358 = vst.msk [vmem:[%s282 + $0x48] sm:$0xff] %vm1353, %v1317
    %1359 = vst.msk [vmem:[%s282 + $0x58] sm:$0xff] %vm1353, %v1319
    %1360 = vst.msk [vmem:[%s282 + $0x68] sm:$0xff] %vm1353, %v1321
    %1361 = vst.msk [vmem:[%s282 + $0x78] sm:$0xff] %vm1353, %v1323
    %1362 = vst.msk [vmem:[%s282 + $0x88] sm:$0xff] %vm1353, %v1325
    %1363 = vst.msk [vmem:[%s282 + $0x98] sm:$0xff] %vm1353, %v1327
    %1364 = vst.msk [vmem:[%s282 + $0xa8] sm:$0xff] %vm1353, %v1329
    %1365 = vst.msk [vmem:[%s282 + $0xb8] sm:$0xff] %vm1353, %v1331
    %1366 = vst.msk [vmem:[%s282 + $0xc8] sm:$0xff] %vm1353, %v1333
    %1367 = vst.msk [vmem:[%s282 + $0xd8] sm:$0xff] %vm1353, %v1335
    %1368 = vst.msk [vmem:[%s282 + $0xe8] sm:$0xff] %vm1353, %v1337
    %v1369 = vrot.slane %v1115, 1
    %v1370 = vor.u32 %v1112, %v1369
    %v1371 = vrot.slane %v1122, 1
    %v1372 = vor.u32 %v1119, %v1371
    %v1373 = vrot.slane %v1129, 1
    %v1374 = vor.u32 %v1126, %v1373
    %v1375 = vrot.slane %v1136, 1
    %v1376 = vor.u32 %v1133, %v1375
    %v1377 = vrot.slane %v1143, 1
    %v1378 = vor.u32 %v1140, %v1377
    %v1379 = vrot.slane %v1150, 1
    %v1380 = vor.u32 %v1147, %v1379
    %v1381 = vrot.slane %v1157, 1
    %v1382 = vor.u32 %v1154, %v1381
    %v1383 = vrot.slane %v1164, 1
    %v1384 = vor.u32 %v1161, %v1383
    %v1385 = vrot.slane %v1171, 1
    %v1386 = vor.u32 %v1168, %v1385
    %v1387 = vrot.slane %v1178, 1
    %v1388 = vor.u32 %v1175, %v1387
    %v1389 = vrot.slane %v1185, 1
    %v1390 = vor.u32 %v1182, %v1389
    %v1391 = vrot.slane %v1192, 1
    %v1392 = vor.u32 %v1189, %v1391
    %v1393 = vrot.slane %v1199, 1
    %v1394 = vor.u32 %v1196, %v1393
    %v1395 = vrot.slane %v1206, 1
    %v1396 = vor.u32 %v1203, %v1395
    %v1397 = vrot.slane %v1213, 1
    %v1398 = vor.u32 %v1210, %v1397
    %1399 = vrot.lane.b32.xlu0 %v1370, 32
    %v1400 = vpop.permute.xlu0 %1399
    %1401 = vrot.lane.b32.xlu0 %v1372, 32
    %v1402 = vpop.permute.xlu0 %1401
    %1403 = vrot.lane.b32.xlu0 %v1374, 32
    %v1404 = vpop.permute.xlu0 %1403
    %1405 = vrot.lane.b32.xlu0 %v1376, 32
    %v1406 = vpop.permute.xlu0 %1405
    %1407 = vrot.lane.b32.xlu0 %v1378, 32
    %v1408 = vpop.permute.xlu0 %1407
    %1409 = vrot.lane.b32.xlu0 %v1380, 32
    %v1410 = vpop.permute.xlu0 %1409
    %1411 = vrot.lane.b32.xlu0 %v1382, 32
    %v1412 = vpop.permute.xlu0 %1411
    %1413 = vrot.lane.b32.xlu0 %v1384, 32
    %v1414 = vpop.permute.xlu0 %1413
    %1415 = vrot.lane.b32.xlu0 %v1386, 32
    %v1416 = vpop.permute.xlu0 %1415
    %1417 = vrot.lane.b32.xlu0 %v1388, 32
    %v1418 = vpop.permute.xlu0 %1417
    %1419 = vrot.lane.b32.xlu0 %v1390, 32
    %v1420 = vpop.permute.xlu0 %1419
    %1421 = vrot.lane.b32.xlu0 %v1392, 32
    %v1422 = vpop.permute.xlu0 %1421
    %1423 = vrot.lane.b32.xlu0 %v1394, 32
    %v1424 = vpop.permute.xlu0 %1423
    %1425 = vrot.lane.b32.xlu0 %v1396, 32
    %v1426 = vpop.permute.xlu0 %1425
    %1427 = vrot.lane.b32.xlu0 %v1398, 32
    %v1428 = vpop.permute.xlu0 %1427
    %vm1444 = vcmask 326912
    %vm1445 = vmand %vm1444, %vm468
    %v1446 = vld [vmem:[%s282 + $0x8] sm:$0xff]
    %v1447 = vsel %vm1445, %v1400, %v1446
    %1448 = vst [vmem:[%s282 + $0x8] sm:$0xff] %v1447
    %v1449 = vld [vmem:[%s282 + $0x18] sm:$0xff]
    %v1450 = vsel %vm1445, %v1402, %v1449
    %1451 = vst [vmem:[%s282 + $0x18] sm:$0xff] %v1450
    %v1452 = vld [vmem:[%s282 + $0x28] sm:$0xff]
    %v1453 = vsel %vm1445, %v1404, %v1452
    %1454 = vst [vmem:[%s282 + $0x28] sm:$0xff] %v1453
    %v1455 = vld [vmem:[%s282 + $0x38] sm:$0xff]
    %v1456 = vsel %vm1445, %v1406, %v1455
    %1457 = vst [vmem:[%s282 + $0x38] sm:$0xff] %v1456
    %v1458 = vld [vmem:[%s282 + $0x48] sm:$0xff]
    %v1459 = vsel %vm1445, %v1408, %v1458
    %1460 = vst [vmem:[%s282 + $0x48] sm:$0xff] %v1459
    %v1461 = vld [vmem:[%s282 + $0x58] sm:$0xff]
    %v1462 = vsel %vm1445, %v1410, %v1461
    %1463 = vst [vmem:[%s282 + $0x58] sm:$0xff] %v1462
    %v1464 = vld [vmem:[%s282 + $0x68] sm:$0xff]
    %v1465 = vsel %vm1445, %v1412, %v1464
    %1466 = vst [vmem:[%s282 + $0x68] sm:$0xff] %v1465
    %v1467 = vld [vmem:[%s282 + $0x78] sm:$0xff]
    %v1468 = vsel %vm1445, %v1414, %v1467
    %1469 = vst [vmem:[%s282 + $0x78] sm:$0xff] %v1468
    %v1470 = vld [vmem:[%s282 + $0x88] sm:$0xff]
    %v1471 = vsel %vm1445, %v1416, %v1470
    %1472 = vst [vmem:[%s282 + $0x88] sm:$0xff] %v1471
    %v1473 = vld [vmem:[%s282 + $0x98] sm:$0xff]
    %v1474 = vsel %vm1445, %v1418, %v1473
    %1475 = vst [vmem:[%s282 + $0x98] sm:$0xff] %v1474
    %v1476 = vld [vmem:[%s282 + $0xa8] sm:$0xff]
    %v1477 = vsel %vm1445, %v1420, %v1476
    %1478 = vst [vmem:[%s282 + $0xa8] sm:$0xff] %v1477
    %v1479 = vld [vmem:[%s282 + $0xb8] sm:$0xff]
    %v1480 = vsel %vm1445, %v1422, %v1479
    %1481 = vst [vmem:[%s282 + $0xb8] sm:$0xff] %v1480
    %v1482 = vld [vmem:[%s282 + $0xc8] sm:$0xff]
    %v1483 = vsel %vm1445, %v1424, %v1482
    %1484 = vst [vmem:[%s282 + $0xc8] sm:$0xff] %v1483
    %v1485 = vld [vmem:[%s282 + $0xd8] sm:$0xff]
    %v1486 = vsel %vm1445, %v1426, %v1485
    %1487 = vst [vmem:[%s282 + $0xd8] sm:$0xff] %v1486
    %v1488 = vld [vmem:[%s282 + $0xe8] sm:$0xff]
    %v1489 = vsel %vm1445, %v1428, %v1488
    %1490 = vst [vmem:[%s282 + $0xe8] sm:$0xff] %v1489
    %v1493 = vunpack.c.l.b16 %v1034
    %v1494 = vunpack.c.l.b16 %v1035
    %v1495 = vpack.c.b16 %v1494, %v1493
    %v1497 = vshrl.u32 %v1495, 16
    %v1499 = vrot.slane %v1497, 7
    %v1500 = vshll.u32 %v1495, 16
    %v1502 = vor.u32 %v1499, %v1500
    %1503 = vrot.lane.b32.xlu0 %v1117, 40
    %v1504 = vpop.permute.xlu0 %1503
    %1505 = vrot.lane.b32.xlu0 %v1124, 40
    %v1506 = vpop.permute.xlu0 %1505
    %1507 = vrot.lane.b32.xlu0 %v1131, 40
    %v1508 = vpop.permute.xlu0 %1507
    %1509 = vrot.lane.b32.xlu0 %v1138, 40
    %v1510 = vpop.permute.xlu0 %1509
    %1511 = vrot.lane.b32.xlu0 %v1145, 40
    %v1512 = vpop.permute.xlu0 %1511
    %1513 = vrot.lane.b32.xlu0 %v1152, 40
    %v1514 = vpop.permute.xlu0 %1513
    %1515 = vrot.lane.b32.xlu0 %v1159, 40
    %v1516 = vpop.permute.xlu0 %1515
    %1517 = vrot.lane.b32.xlu0 %v1166, 40
    %v1518 = vpop.permute.xlu0 %1517
    %1519 = vrot.lane.b32.xlu0 %v1173, 40
    %v1520 = vpop.permute.xlu0 %1519
    %1521 = vrot.lane.b32.xlu0 %v1180, 40
    %v1522 = vpop.permute.xlu0 %1521
    %1523 = vrot.lane.b32.xlu0 %v1187, 40
    %v1524 = vpop.permute.xlu0 %1523
    %1525 = vrot.lane.b32.xlu0 %v1194, 40
    %v1526 = vpop.permute.xlu0 %1525
    %1527 = vrot.lane.b32.xlu0 %v1201, 40
    %v1528 = vpop.permute.xlu0 %1527
    %1529 = vrot.lane.b32.xlu0 %v1208, 40
    %v1530 = vpop.permute.xlu0 %1529
    %1531 = vrot.lane.b32.xlu0 %v1215, 40
    %v1532 = vpop.permute.xlu0 %1531
    %1533 = vrot.lane.b32.xlu0 %v1502, 40
    %v1534 = vpop.permute.xlu0 %1533
    %vm1551 = vcmask 392512
    %vm1552 = vmand %vm1551, %vm284
    %v1553 = vld [vmem:[#allocation2 + $0x8] sm:$0xff]
    %v1554 = vsel %vm1552, %v1504, %v1553
    %1555 = vst [vmem:[#allocation2 + $0x8] sm:$0xff] %v1554
    %v1556 = vld [vmem:[#allocation2 + $0x18] sm:$0xff]
    %v1557 = vsel %vm1552, %v1506, %v1556
    %1558 = vst [vmem:[#allocation2 + $0x18] sm:$0xff] %v1557
    %v1559 = vld [vmem:[#allocation2 + $0x28] sm:$0xff]
    %v1560 = vsel %vm1552, %v1508, %v1559
    %1561 = vst [vmem:[#allocation2 + $0x28] sm:$0xff] %v1560
    %v1562 = vld [vmem:[#allocation2 + $0x38] sm:$0xff]
    %v1563 = vsel %vm1552, %v1510, %v1562
    %1564 = vst [vmem:[#allocation2 + $0x38] sm:$0xff] %v1563
    %v1565 = vld [vmem:[#allocation2 + $0x48] sm:$0xff]
    %v1566 = vsel %vm1552, %v1512, %v1565
    %1567 = vst [vmem:[#allocation2 + $0x48] sm:$0xff] %v1566
    %v1568 = vld [vmem:[#allocation2 + $0x58] sm:$0xff]
    %v1569 = vsel %vm1552, %v1514, %v1568
    %1570 = vst [vmem:[#allocation2 + $0x58] sm:$0xff] %v1569
    %v1571 = vld [vmem:[#allocation2 + $0x68] sm:$0xff]
    %v1572 = vsel %vm1552, %v1516, %v1571
    %1573 = vst [vmem:[#allocation2 + $0x68] sm:$0xff] %v1572
    %v1574 = vld [vmem:[#allocation2 + $0x78] sm:$0xff]
    %v1575 = vsel %vm1552, %v1518, %v1574
    %1576 = vst [vmem:[#allocation2 + $0x78] sm:$0xff] %v1575
    %v1577 = vld [vmem:[#allocation2 + $0x88] sm:$0xff]
    %v1578 = vsel %vm1552, %v1520, %v1577
    %1579 = vst [vmem:[#allocation2 + $0x88] sm:$0xff] %v1578
    %v1580 = vld [vmem:[#allocation2 + $0x98] sm:$0xff]
    %v1581 = vsel %vm1552, %v1522, %v1580
    %1582 = vst [vmem:[#allocation2 + $0x98] sm:$0xff] %v1581
    %v1583 = vld [vmem:[#allocation2 + $0xa8] sm:$0xff]
    %v1584 = vsel %vm1552, %v1524, %v1583
    %1585 = vst [vmem:[#allocation2 + $0xa8] sm:$0xff] %v1584
    %v1586 = vld [vmem:[#allocation2 + $0xb8] sm:$0xff]
    %v1587 = vsel %vm1552, %v1526, %v1586
    %1588 = vst [vmem:[#allocation2 + $0xb8] sm:$0xff] %v1587
    %v1589 = vld [vmem:[#allocation2 + $0xc8] sm:$0xff]
    %v1590 = vsel %vm1552, %v1528, %v1589
    %1591 = vst [vmem:[#allocation2 + $0xc8] sm:$0xff] %v1590
    %v1592 = vld [vmem:[#allocation2 + $0xd8] sm:$0xff]
    %v1593 = vsel %vm1552, %v1530, %v1592
    %1594 = vst [vmem:[#allocation2 + $0xd8] sm:$0xff] %v1593
    %v1595 = vld [vmem:[#allocation2 + $0xe8] sm:$0xff]
    %v1596 = vsel %vm1552, %v1532, %v1595
    %1597 = vst [vmem:[#allocation2 + $0xe8] sm:$0xff] %v1596
    %v1598 = vld [vmem:[#allocation2 + $0xf8] sm:$0xff]
    %v1599 = vsel %vm1552, %v1534, %v1598
    %1600 = vst [vmem:[#allocation2 + $0xf8] sm:$0xff] %v1599
    %1601 = vrot.lane.b32.xlu0 %v1096, 48
    %v1602 = vpop.permute.xlu0 %1601
    %1603 = vrot.lane.b32.xlu0 %v1097, 48
    %v1604 = vpop.permute.xlu0 %1603
    %1605 = vrot.lane.b32.xlu0 %v1098, 48
    %v1606 = vpop.permute.xlu0 %1605
    %1607 = vrot.lane.b32.xlu0 %v1099, 48
    %v1608 = vpop.permute.xlu0 %1607
    %1609 = vrot.lane.b32.xlu0 %v1100, 48
    %v1610 = vpop.permute.xlu0 %1609
    %1611 = vrot.lane.b32.xlu0 %v1101, 48
    %v1612 = vpop.permute.xlu0 %1611
    %1613 = vrot.lane.b32.xlu0 %v1102, 48
    %v1614 = vpop.permute.xlu0 %1613
    %1615 = vrot.lane.b32.xlu0 %v1103, 48
    %v1616 = vpop.permute.xlu0 %1615
    %1617 = vrot.lane.b32.xlu0 %v1104, 48
    %v1618 = vpop.permute.xlu0 %1617
    %1619 = vrot.lane.b32.xlu0 %v1105, 48
    %v1620 = vpop.permute.xlu0 %1619
    %1621 = vrot.lane.b32.xlu0 %v1106, 48
    %v1622 = vpop.permute.xlu0 %1621
    %1623 = vrot.lane.b32.xlu0 %v1107, 48
    %v1624 = vpop.permute.xlu0 %1623
    %1625 = vrot.lane.b32.xlu0 %v1108, 48
    %v1626 = vpop.permute.xlu0 %1625
    %1627 = vrot.lane.b32.xlu0 %v1109, 48
    %v1628 = vpop.permute.xlu0 %1627
    %1629 = vrot.lane.b32.xlu0 %v1110, 48
    %v1630 = vpop.permute.xlu0 %1629
    %1631 = vrot.lane.b32.xlu0 %v1495, 48
    %v1632 = vpop.permute.xlu0 %1631
    %vm1649 = vcmask 458112
    %1650 = vst.msk [vmem:[#allocation2 + $0x8] sm:$0xff] %vm1649, %v1602
    %1651 = vst.msk [vmem:[#allocation2 + $0x18] sm:$0xff] %vm1649, %v1604
    %1652 = vst.msk [vmem:[#allocation2 + $0x28] sm:$0xff] %vm1649, %v1606
    %1653 = vst.msk [vmem:[#allocation2 + $0x38] sm:$0xff] %vm1649, %v1608
    %1654 = vst.msk [vmem:[#allocation2 + $0x48] sm:$0xff] %vm1649, %v1610
    %1655 = vst.msk [vmem:[#allocation2 + $0x58] sm:$0xff] %vm1649, %v1612
    %1656 = vst.msk [vmem:[#allocation2 + $0x68] sm:$0xff] %vm1649, %v1614
    %1657 = vst.msk [vmem:[#allocation2 + $0x78] sm:$0xff] %vm1649, %v1616
    %1658 = vst.msk [vmem:[#allocation2 + $0x88] sm:$0xff] %vm1649, %v1618
    %1659 = vst.msk [vmem:[#allocation2 + $0x98] sm:$0xff] %vm1649, %v1620
    %1660 = vst.msk [vmem:[#allocation2 + $0xa8] sm:$0xff] %vm1649, %v1622
    %1661 = vst.msk [vmem:[#allocation2 + $0xb8] sm:$0xff] %vm1649, %v1624
    %1662 = vst.msk [vmem:[#allocation2 + $0xc8] sm:$0xff] %vm1649, %v1626
    %1663 = vst.msk [vmem:[#allocation2 + $0xd8] sm:$0xff] %vm1649, %v1628
    %1664 = vst.msk [vmem:[#allocation2 + $0xe8] sm:$0xff] %vm1649, %v1630
    %1665 = vst.msk [vmem:[#allocation2 + $0xf8] sm:$0xff] %vm1649, %v1632
    %v1666 = vrot.slane %v1500, 1
    %v1667 = vor.u32 %v1497, %v1666
    %1668 = vrot.lane.b32.xlu0 %v1370, 56
    %v1669 = vpop.permute.xlu0 %1668
    %1670 = vrot.lane.b32.xlu0 %v1372, 56
    %v1671 = vpop.permute.xlu0 %1670
    %1672 = vrot.lane.b32.xlu0 %v1374, 56
    %v1673 = vpop.permute.xlu0 %1672
    %1674 = vrot.lane.b32.xlu0 %v1376, 56
    %v1675 = vpop.permute.xlu0 %1674
    %1676 = vrot.lane.b32.xlu0 %v1378, 56
    %v1677 = vpop.permute.xlu0 %1676
    %1678 = vrot.lane.b32.xlu0 %v1380, 56
    %v1679 = vpop.permute.xlu0 %1678
    %1680 = vrot.lane.b32.xlu0 %v1382, 56
    %v1681 = vpop.permute.xlu0 %1680
    %1682 = vrot.lane.b32.xlu0 %v1384, 56
    %v1683 = vpop.permute.xlu0 %1682
    %1684 = vrot.lane.b32.xlu0 %v1386, 56
    %v1685 = vpop.permute.xlu0 %1684
    %1686 = vrot.lane.b32.xlu0 %v1388, 56
    %v1687 = vpop.permute.xlu0 %1686
    %1688 = vrot.lane.b32.xlu0 %v1390, 56
    %v1689 = vpop.permute.xlu0 %1688
    %1690 = vrot.lane.b32.xlu0 %v1392, 56
    %v1691 = vpop.permute.xlu0 %1690
    %1692 = vrot.lane.b32.xlu0 %v1394, 56
    %v1693 = vpop.permute.xlu0 %1692
    %1694 = vrot.lane.b32.xlu0 %v1396, 56
    %v1695 = vpop.permute.xlu0 %1694
    %1696 = vrot.lane.b32.xlu0 %v1398, 56
    %v1697 = vpop.permute.xlu0 %1696
    %1698 = vrot.lane.b32.xlu0 %v1667, 56
    %v1699 = vpop.permute.xlu0 %1698
    %vm1716 = vcmask 523712
    %vm1717 = vmand %vm1716, %vm468
    %v1718 = vld [vmem:[#allocation2 + $0x8] sm:$0xff]
    %v1719 = vsel %vm1717, %v1669, %v1718
    %1720 = vst [vmem:[#allocation2 + $0x8] sm:$0xff] %v1719
    %v1721 = vld [vmem:[#allocation2 + $0x18] sm:$0xff]
    %v1722 = vsel %vm1717, %v1671, %v1721
    %1723 = vst [vmem:[#allocation2 + $0x18] sm:$0xff] %v1722
    %v1724 = vld [vmem:[#allocation2 + $0x28] sm:$0xff]
    %v1725 = vsel %vm1717, %v1673, %v1724
    %1726 = vst [vmem:[#allocation2 + $0x28] sm:$0xff] %v1725
    %v1727 = vld [vmem:[#allocation2 + $0x38] sm:$0xff]
    %v1728 = vsel %vm1717, %v1675, %v1727
    %1729 = vst [vmem:[#allocation2 + $0x38] sm:$0xff] %v1728
    %v1730 = vld [vmem:[#allocation2 + $0x48] sm:$0xff]
    %v1731 = vsel %vm1717, %v1677, %v1730
    %1732 = vst [vmem:[#allocation2 + $0x48] sm:$0xff] %v1731
    %v1733 = vld [vmem:[#allocation2 + $0x58] sm:$0xff]
    %v1734 = vsel %vm1717, %v1679, %v1733
    %1735 = vst [vmem:[#allocation2 + $0x58] sm:$0xff] %v1734
    %v1736 = vld [vmem:[#allocation2 + $0x68] sm:$0xff]
    %v1737 = vsel %vm1717, %v1681, %v1736
    %1738 = vst [vmem:[#allocation2 + $0x68] sm:$0xff] %v1737
    %v1739 = vld [vmem:[#allocation2 + $0x78] sm:$0xff]
    %v1740 = vsel %vm1717, %v1683, %v1739
    %1741 = vst [vmem:[#allocation2 + $0x78] sm:$0xff] %v1740
    %v1742 = vld [vmem:[#allocation2 + $0x88] sm:$0xff]
    %v1743 = vsel %vm1717, %v1685, %v1742
    %1744 = vst [vmem:[#allocation2 + $0x88] sm:$0xff] %v1743
    %v1745 = vld [vmem:[#allocation2 + $0x98] sm:$0xff]
    %v1746 = vsel %vm1717, %v1687, %v1745
    %1747 = vst [vmem:[#allocation2 + $0x98] sm:$0xff] %v1746
    %v1748 = vld [vmem:[#allocation2 + $0xa8] sm:$0xff]
    %v1749 = vsel %vm1717, %v1689, %v1748
    %1750 = vst [vmem:[#allocation2 + $0xa8] sm:$0xff] %v1749
    %v1751 = vld [vmem:[#allocation2 + $0xb8] sm:$0xff]
    %v1752 = vsel %vm1717, %v1691, %v1751
    %1753 = vst [vmem:[#allocation2 + $0xb8] sm:$0xff] %v1752
    %v1754 = vld [vmem:[#allocation2 + $0xc8] sm:$0xff]
    %v1755 = vsel %vm1717, %v1693, %v1754
    %1756 = vst [vmem:[#allocation2 + $0xc8] sm:$0xff] %v1755
    %v1757 = vld [vmem:[#allocation2 + $0xd8] sm:$0xff]
    %v1758 = vsel %vm1717, %v1695, %v1757
    %1759 = vst [vmem:[#allocation2 + $0xd8] sm:$0xff] %v1758
    %v1760 = vld [vmem:[#allocation2 + $0xe8] sm:$0xff]
    %v1761 = vsel %vm1717, %v1697, %v1760
    %1762 = vst [vmem:[#allocation2 + $0xe8] sm:$0xff] %v1761
    %v1763 = vld [vmem:[#allocation2 + $0xf8] sm:$0xff]
    %v1764 = vsel %vm1717, %v1699, %v1763
    %1765 = vst [vmem:[#allocation2 + $0xf8] sm:$0xff] %v1764
    %1766 = vrot.lane.b32.xlu0 %v1124, 64
    %v1767 = vpop.permute.xlu0 %1766
    %1768 = vrot.lane.b32.xlu0 %v1131, 64
    %v1769 = vpop.permute.xlu0 %1768
    %1770 = vrot.lane.b32.xlu0 %v1138, 64
    %v1771 = vpop.permute.xlu0 %1770
    %1772 = vrot.lane.b32.xlu0 %v1145, 64
    %v1773 = vpop.permute.xlu0 %1772
    %1774 = vrot.lane.b32.xlu0 %v1152, 64
    %v1775 = vpop.permute.xlu0 %1774
    %1776 = vrot.lane.b32.xlu0 %v1159, 64
    %v1777 = vpop.permute.xlu0 %1776
    %1778 = vrot.lane.b32.xlu0 %v1166, 64
    %v1779 = vpop.permute.xlu0 %1778
    %1780 = vrot.lane.b32.xlu0 %v1173, 64
    %v1781 = vpop.permute.xlu0 %1780
    %1782 = vrot.lane.b32.xlu0 %v1180, 64
    %v1783 = vpop.permute.xlu0 %1782
    %1784 = vrot.lane.b32.xlu0 %v1187, 64
    %v1785 = vpop.permute.xlu0 %1784
    %1786 = vrot.lane.b32.xlu0 %v1194, 64
    %v1787 = vpop.permute.xlu0 %1786
    %1788 = vrot.lane.b32.xlu0 %v1201, 64
    %v1789 = vpop.permute.xlu0 %1788
    %1790 = vrot.lane.b32.xlu0 %v1208, 64
    %v1791 = vpop.permute.xlu0 %1790
    %1792 = vrot.lane.b32.xlu0 %v1215, 64
    %v1793 = vpop.permute.xlu0 %1792
    %1794 = vrot.lane.b32.xlu0 %v1502, 64
    %v1795 = vpop.permute.xlu0 %1794
    %vm1811 = vcmask 589312
    %vm1812 = vmand %vm1811, %vm284
    %v1813 = vld [vmem:[#allocation2 + $0x8] sm:$0xff]
    %v1814 = vsel %vm1812, %v1767, %v1813
    %1815 = vst [vmem:[#allocation2 + $0x8] sm:$0xff] %v1814
    %v1816 = vld [vmem:[#allocation2 + $0x18] sm:$0xff]
    %v1817 = vsel %vm1812, %v1769, %v1816
    %1818 = vst [vmem:[#allocation2 + $0x18] sm:$0xff] %v1817
    %v1819 = vld [vmem:[#allocation2 + $0x28] sm:$0xff]
    %v1820 = vsel %vm1812, %v1771, %v1819
    %1821 = vst [vmem:[#allocation2 + $0x28] sm:$0xff] %v1820
    %v1822 = vld [vmem:[#allocation2 + $0x38] sm:$0xff]
    %v1823 = vsel %vm1812, %v1773, %v1822
    %1824 = vst [vmem:[#allocation2 + $0x38] sm:$0xff] %v1823
    %v1825 = vld [vmem:[#allocation2 + $0x48] sm:$0xff]
    %v1826 = vsel %vm1812, %v1775, %v1825
    %1827 = vst [vmem:[#allocation2 + $0x48] sm:$0xff] %v1826
    %v1828 = vld [vmem:[#allocation2 + $0x58] sm:$0xff]
    %v1829 = vsel %vm1812, %v1777, %v1828
    %1830 = vst [vmem:[#allocation2 + $0x58] sm:$0xff] %v1829
    %v1831 = vld [vmem:[#allocation2 + $0x68] sm:$0xff]
    %v1832 = vsel %vm1812, %v1779, %v1831
    %1833 = vst [vmem:[#allocation2 + $0x68] sm:$0xff] %v1832
    %v1834 = vld [vmem:[#allocation2 + $0x78] sm:$0xff]
    %v1835 = vsel %vm1812, %v1781, %v1834
    %1836 = vst [vmem:[#allocation2 + $0x78] sm:$0xff] %v1835
    %v1837 = vld [vmem:[#allocation2 + $0x88] sm:$0xff]
    %v1838 = vsel %vm1812, %v1783, %v1837
    %1839 = vst [vmem:[#allocation2 + $0x88] sm:$0xff] %v1838
    %v1840 = vld [vmem:[#allocation2 + $0x98] sm:$0xff]
    %v1841 = vsel %vm1812, %v1785, %v1840
    %1842 = vst [vmem:[#allocation2 + $0x98] sm:$0xff] %v1841
    %v1843 = vld [vmem:[#allocation2 + $0xa8] sm:$0xff]
    %v1844 = vsel %vm1812, %v1787, %v1843
    %1845 = vst [vmem:[#allocation2 + $0xa8] sm:$0xff] %v1844
    %v1846 = vld [vmem:[#allocation2 + $0xb8] sm:$0xff]
    %v1847 = vsel %vm1812, %v1789, %v1846
    %1848 = vst [vmem:[#allocation2 + $0xb8] sm:$0xff] %v1847
    %v1849 = vld [vmem:[#allocation2 + $0xc8] sm:$0xff]
    %v1850 = vsel %vm1812, %v1791, %v1849
    %1851 = vst [vmem:[#allocation2 + $0xc8] sm:$0xff] %v1850
    %v1852 = vld [vmem:[#allocation2 + $0xd8] sm:$0xff]
    %v1853 = vsel %vm1812, %v1793, %v1852
    %1854 = vst [vmem:[#allocation2 + $0xd8] sm:$0xff] %v1853
    %v1855 = vld [vmem:[#allocation2 + $0xe8] sm:$0xff]
    %v1856 = vsel %vm1812, %v1795, %v1855
    %1857 = vst [vmem:[#allocation2 + $0xe8] sm:$0xff] %v1856
    %1858 = vrot.lane.b32.xlu0 %v1097, 72
    %v1859 = vpop.permute.xlu0 %1858
    %1860 = vrot.lane.b32.xlu0 %v1098, 72
    %v1861 = vpop.permute.xlu0 %1860
    %1862 = vrot.lane.b32.xlu0 %v1099, 72
    %v1863 = vpop.permute.xlu0 %1862
    %1864 = vrot.lane.b32.xlu0 %v1100, 72
    %v1865 = vpop.permute.xlu0 %1864
    %1866 = vrot.lane.b32.xlu0 %v1101, 72
    %v1867 = vpop.permute.xlu0 %1866
    %1868 = vrot.lane.b32.xlu0 %v1102, 72
    %v1869 = vpop.permute.xlu0 %1868
    %1870 = vrot.lane.b32.xlu0 %v1103, 72
    %v1871 = vpop.permute.xlu0 %1870
    %1872 = vrot.lane.b32.xlu0 %v1104, 72
    %v1873 = vpop.permute.xlu0 %1872
    %1874 = vrot.lane.b32.xlu0 %v1105, 72
    %v1875 = vpop.permute.xlu0 %1874
    %1876 = vrot.lane.b32.xlu0 %v1106, 72
    %v1877 = vpop.permute.xlu0 %1876
    %1878 = vrot.lane.b32.xlu0 %v1107, 72
    %v1879 = vpop.permute.xlu0 %1878
    %1880 = vrot.lane.b32.xlu0 %v1108, 72
    %v1881 = vpop.permute.xlu0 %1880
    %1882 = vrot.lane.b32.xlu0 %v1109, 72
    %v1883 = vpop.permute.xlu0 %1882
    %1884 = vrot.lane.b32.xlu0 %v1110, 72
    %v1885 = vpop.permute.xlu0 %1884
    %1886 = vrot.lane.b32.xlu0 %v1495, 72
    %v1887 = vpop.permute.xlu0 %1886
    %vm1903 = vcmask 654912
    %1904 = vst.msk [vmem:[#allocation2 + $0x8] sm:$0xff] %vm1903, %v1859
    %1905 = vst.msk [vmem:[#allocation2 + $0x18] sm:$0xff] %vm1903, %v1861
    %1906 = vst.msk [vmem:[#allocation2 + $0x28] sm:$0xff] %vm1903, %v1863
    %1907 = vst.msk [vmem:[#allocation2 + $0x38] sm:$0xff] %vm1903, %v1865
    %1908 = vst.msk [vmem:[#allocation2 + $0x48] sm:$0xff] %vm1903, %v1867
    %1909 = vst.msk [vmem:[#allocation2 + $0x58] sm:$0xff] %vm1903, %v1869
    %1910 = vst.msk [vmem:[#allocation2 + $0x68] sm:$0xff] %vm1903, %v1871
    %1911 = vst.msk [vmem:[#allocation2 + $0x78] sm:$0xff] %vm1903, %v1873
    %1912 = vst.msk [vmem:[#allocation2 + $0x88] sm:$0xff] %vm1903, %v1875
    %1913 = vst.msk [vmem:[#allocation2 + $0x98] sm:$0xff] %vm1903, %v1877
    %1914 = vst.msk [vmem:[#allocation2 + $0xa8] sm:$0xff] %vm1903, %v1879
    %1915 = vst.msk [vmem:[#allocation2 + $0xb8] sm:$0xff] %vm1903, %v1881
    %1916 = vst.msk [vmem:[#allocation2 + $0xc8] sm:$0xff] %vm1903, %v1883
    %1917 = vst.msk [vmem:[#allocation2 + $0xd8] sm:$0xff] %vm1903, %v1885
    %1918 = vst.msk [vmem:[#allocation2 + $0xe8] sm:$0xff] %vm1903, %v1887
    %1919 = vrot.lane.b32.xlu0 %v1372, 80
    %v1920 = vpop.permute.xlu0 %1919
    %1921 = vrot.lane.b32.xlu0 %v1374, 80
    %v1922 = vpop.permute.xlu0 %1921
    %1923 = vrot.lane.b32.xlu0 %v1376, 80
    %v1924 = vpop.permute.xlu0 %1923
    %1925 = vrot.lane.b32.xlu0 %v1378, 80
    %v1926 = vpop.permute.xlu0 %1925
    %1927 = vrot.lane.b32.xlu0 %v1380, 80
    %v1928 = vpop.permute.xlu0 %1927
    %1929 = vrot.lane.b32.xlu0 %v1382, 80
    %v1930 = vpop.permute.xlu0 %1929
    %1931 = vrot.lane.b32.xlu0 %v1384, 80
    %v1932 = vpop.permute.xlu0 %1931
    %1933 = vrot.lane.b32.xlu0 %v1386, 80
    %v1934 = vpop.permute.xlu0 %1933
    %1935 = vrot.lane.b32.xlu0 %v1388, 80
    %v1936 = vpop.permute.xlu0 %1935
    %1937 = vrot.lane.b32.xlu0 %v1390, 80
    %v1938 = vpop.permute.xlu0 %1937
    %1939 = vrot.lane.b32.xlu0 %v1392, 80
    %v1940 = vpop.permute.xlu0 %1939
    %1941 = vrot.lane.b32.xlu0 %v1394, 80
    %v1942 = vpop.permute.xlu0 %1941
    %1943 = vrot.lane.b32.xlu0 %v1396, 80
    %v1944 = vpop.permute.xlu0 %1943
    %1945 = vrot.lane.b32.xlu0 %v1398, 80
    %v1946 = vpop.permute.xlu0 %1945
    %1947 = vrot.lane.b32.xlu0 %v1667, 80
    %v1948 = vpop.permute.xlu0 %1947
    %vm1964 = vcmask 720512
    %vm1965 = vmand %vm1964, %vm468
    %v1966 = vld [vmem:[#allocation2 + $0x8] sm:$0xff]
    %v1967 = vsel %vm1965, %v1920, %v1966
    %1968 = vst [vmem:[#allocation2 + $0x8] sm:$0xff] %v1967
    %v1969 = vld [vmem:[#allocation2 + $0x18] sm:$0xff]
    %v1970 = vsel %vm1965, %v1922, %v1969
    %1971 = vst [vmem:[#allocation2 + $0x18] sm:$0xff] %v1970
    %v1972 = vld [vmem:[#allocation2 + $0x28] sm:$0xff]
    %v1973 = vsel %vm1965, %v1924, %v1972
    %1974 = vst [vmem:[#allocation2 + $0x28] sm:$0xff] %v1973
    %v1975 = vld [vmem:[#allocation2 + $0x38] sm:$0xff]
    %v1976 = vsel %vm1965, %v1926, %v1975
    %1977 = vst [vmem:[#allocation2 + $0x38] sm:$0xff] %v1976
    %v1978 = vld [vmem:[#allocation2 + $0x48] sm:$0xff]
    %v1979 = vsel %vm1965, %v1928, %v1978
    %1980 = vst [vmem:[#allocation2 + $0x48] sm:$0xff] %v1979
    %v1981 = vld [vmem:[#allocation2 + $0x58] sm:$0xff]
    %v1982 = vsel %vm1965, %v1930, %v1981
    %1983 = vst [vmem:[#allocation2 + $0x58] sm:$0xff] %v1982
    %v1984 = vld [vmem:[#allocation2 + $0x68] sm:$0xff]
    %v1985 = vsel %vm1965, %v1932, %v1984
    %1986 = vst [vmem:[#allocation2 + $0x68] sm:$0xff] %v1985
    %v1987 = vld [vmem:[#allocation2 + $0x78] sm:$0xff]
    %v1988 = vsel %vm1965, %v1934, %v1987
    %1989 = vst [vmem:[#allocation2 + $0x78] sm:$0xff] %v1988
    %v1990 = vld [vmem:[#allocation2 + $0x88] sm:$0xff]
    %v1991 = vsel %vm1965, %v1936, %v1990
    %1992 = vst [vmem:[#allocation2 + $0x88] sm:$0xff] %v1991
    %v1993 = vld [vmem:[#allocation2 + $0x98] sm:$0xff]
    %v1994 = vsel %vm1965, %v1938, %v1993
    %1995 = vst [vmem:[#allocation2 + $0x98] sm:$0xff] %v1994
    %v1996 = vld [vmem:[#allocation2 + $0xa8] sm:$0xff]
    %v1997 = vsel %vm1965, %v1940, %v1996
    %1998 = vst [vmem:[#allocation2 + $0xa8] sm:$0xff] %v1997
    %v1999 = vld [vmem:[#allocation2 + $0xb8] sm:$0xff]
    %v2000 = vsel %vm1965, %v1942, %v1999
    %2001 = vst [vmem:[#allocation2 + $0xb8] sm:$0xff] %v2000
    %v2002 = vld [vmem:[#allocation2 + $0xc8] sm:$0xff]
    %v2003 = vsel %vm1965, %v1944, %v2002
    %2004 = vst [vmem:[#allocation2 + $0xc8] sm:$0xff] %v2003
    %v2005 = vld [vmem:[#allocation2 + $0xd8] sm:$0xff]
    %v2006 = vsel %vm1965, %v1946, %v2005
    %2007 = vst [vmem:[#allocation2 + $0xd8] sm:$0xff] %v2006
    %v2008 = vld [vmem:[#allocation2 + $0xe8] sm:$0xff]
    %v2009 = vsel %vm1965, %v1948, %v2008
    %2010 = vst [vmem:[#allocation2 + $0xe8] sm:$0xff] %v2009
    %v2011 = vld [vmem:[#allocation2] sm:$0xff]
    %v2012 = vld [vmem:[#allocation2 + $0x8] sm:$0xff]
    %v2013 = vld [vmem:[#allocation2 + $0x10] sm:$0xff]
    %v2014 = vld [vmem:[#allocation2 + $0x18] sm:$0xff]
    %v2015 = vld [vmem:[#allocation2 + $0x20] sm:$0xff]
    %v2016 = vld [vmem:[#allocation2 + $0x28] sm:$0xff]
    %v2017 = vld [vmem:[#allocation2 + $0x30] sm:$0xff]
    %v2018 = vld [vmem:[#allocation2 + $0x38] sm:$0xff]
    %v2019 = vld [vmem:[#allocation2 + $0x40] sm:$0xff]
    %v2020 = vld [vmem:[#allocation2 + $0x48] sm:$0xff]
    %v2021 = vld [vmem:[#allocation2 + $0x50] sm:$0xff]
    %v2022 = vld [vmem:[#allocation2 + $0x58] sm:$0xff]
    %v2023 = vld [vmem:[#allocation2 + $0x60] sm:$0xff]
    %v2024 = vld [vmem:[#allocation2 + $0x68] sm:$0xff]
    %v2025 = vld [vmem:[#allocation2 + $0x70] sm:$0xff]
    %v2026 = vld [vmem:[#allocation2 + $0x78] sm:$0xff]
    %v2027 = vld [vmem:[#allocation2 + $0x80] sm:$0xff]
    %v2028 = vld [vmem:[#allocation2 + $0x88] sm:$0xff]
    %v2029 = vld [vmem:[#allocation2 + $0x90] sm:$0xff]
    %v2030 = vld [vmem:[#allocation2 + $0x98] sm:$0xff]
    %v2031 = vld [vmem:[#allocation2 + $0xa0] sm:$0xff]
    %v2032 = vld [vmem:[#allocation2 + $0xa8] sm:$0xff]
    %v2033 = vld [vmem:[#allocation2 + $0xb0] sm:$0xff]
    %v2034 = vld [vmem:[#allocation2 + $0xb8] sm:$0xff]
    %v2035 = vld [vmem:[#allocation2 + $0xc0] sm:$0xff]
    %v2036 = vld [vmem:[#allocation2 + $0xc8] sm:$0xff]
    %v2037 = vld [vmem:[#allocation2 + $0xd0] sm:$0xff]
    %v2038 = vld [vmem:[#allocation2 + $0xd8] sm:$0xff]
    %v2039 = vld [vmem:[#allocation2 + $0xe0] sm:$0xff]
    %v2040 = vld [vmem:[#allocation2 + $0xe8] sm:$0xff]
    %v2041 = vld [vmem:[#allocation2 + $0xf0] sm:$0xff]
    %v2042 = vld [vmem:[#allocation2 + $0xf8] sm:$0xff]
    %v2043 = vld [vmem:[%s3] sm:$0xf]
    %v2044 = vld [vmem:[%s3 + $0x4] sm:$0xf]
    %v2045 = vld [vmem:[%s3 + $0x8] sm:$0xf]
    %v2046 = vld [vmem:[%s3 + $0xc] sm:$0xf]
    %v2047 = vld [vmem:[%s3 + $0x10] sm:$0xf]
    %v2048 = vld [vmem:[%s3 + $0x14] sm:$0xf]
    %v2049 = vld [vmem:[%s3 + $0x18] sm:$0xf]
    %v2050 = vld [vmem:[%s3 + $0x1c] sm:$0xf]
    %v2051 = vld [vmem:[%s3 + $0x20] sm:$0xf]
    %v2052 = vld [vmem:[%s3 + $0x24] sm:$0xf]
    %v2053 = vld [vmem:[%s3 + $0x28] sm:$0xf]
    %v2054 = vld [vmem:[%s3 + $0x2c] sm:$0xf]
    %v2055 = vld [vmem:[%s3 + $0x30] sm:$0xf]
    %v2056 = vld [vmem:[%s3 + $0x34] sm:$0xf]
    %v2057 = vld [vmem:[%s3 + $0x38] sm:$0xf]
    %v2058 = vld [vmem:[%s3 + $0x3c] sm:$0xf]
    %v2059 = vld [vmem:[%s3 + $0x40] sm:$0xf]
    %v2060 = vld [vmem:[%s3 + $0x44] sm:$0xf]
    %v2061 = vld [vmem:[%s3 + $0x48] sm:$0xf]
    %v2062 = vld [vmem:[%s3 + $0x4c] sm:$0xf]
    %v2063 = vld [vmem:[%s3 + $0x50] sm:$0xf]
    %v2064 = vld [vmem:[%s3 + $0x54] sm:$0xf]
    %v2065 = vld [vmem:[%s3 + $0x58] sm:$0xf]
    %v2066 = vld [vmem:[%s3 + $0x5c] sm:$0xf]
    %v2067 = vld [vmem:[%s3 + $0x60] sm:$0xf]
    %v2068 = vld [vmem:[%s3 + $0x64] sm:$0xf]
    %v2069 = vld [vmem:[%s3 + $0x68] sm:$0xf]
    %v2070 = vld [vmem:[%s4] sm:$0x1]
    %v2072 = vlaneseq
    %v2073 = vshrl.u32 %v2072, 7
    %v2074 = vsub.s32 0, %v2073
    %v2075 = vrot.slane %v2070, %v2074
    %v2104 = vunpack.c.l.b16 %v2043
    %v2105 = vunpack.c.l.b16 %v2044
    %v2106 = vunpack.c.l.b16 %v2045
    %v2107 = vunpack.c.l.b16 %v2046
    %v2108 = vunpack.c.l.b16 %v2047
    %v2109 = vunpack.c.l.b16 %v2048
    %v2110 = vunpack.c.l.b16 %v2049
    %v2111 = vunpack.c.l.b16 %v2050
    %v2112 = vunpack.c.l.b16 %v2051
    %v2113 = vunpack.c.l.b16 %v2052
    %v2114 = vunpack.c.l.b16 %v2053
    %v2115 = vunpack.c.l.b16 %v2054
    %v2116 = vunpack.c.l.b16 %v2055
    %v2117 = vunpack.c.l.b16 %v2056
    %v2118 = vunpack.c.l.b16 %v2057
    %v2119 = vunpack.c.l.b16 %v2058
    %v2120 = vunpack.c.l.b16 %v2059
    %v2121 = vunpack.c.l.b16 %v2060
    %v2122 = vunpack.c.l.b16 %v2061
    %v2123 = vunpack.c.l.b16 %v2062
    %v2124 = vunpack.c.l.b16 %v2063
    %v2125 = vunpack.c.l.b16 %v2064
    %v2126 = vunpack.c.l.b16 %v2065
    %v2127 = vunpack.c.l.b16 %v2066
    %v2128 = vunpack.c.l.b16 %v2067
    %v2129 = vunpack.c.l.b16 %v2068
    %v2130 = vunpack.c.l.b16 %v2069
    %v2131 = vpack.c.b16 %v2105, %v2104
    %v2132 = vpack.c.b16 %v2107, %v2106
    %v2133 = vpack.c.b16 %v2109, %v2108
    %v2134 = vpack.c.b16 %v2111, %v2110
    %v2135 = vpack.c.b16 %v2113, %v2112
    %v2136 = vpack.c.b16 %v2115, %v2114
    %v2137 = vpack.c.b16 %v2117, %v2116
    %v2138 = vpack.c.b16 %v2119, %v2118
    %v2139 = vpack.c.b16 %v2121, %v2120
    %v2140 = vpack.c.b16 %v2123, %v2122
    %v2141 = vpack.c.b16 %v2125, %v2124
    %v2142 = vpack.c.b16 %v2127, %v2126
    %v2143 = vpack.c.b16 %v2129, %v2128
    %v2144 = vpack.c.b16 %v2130, %v2130
    %v2159 = vsel %vm23, %v2012, 0
    %v2162 = vsel %vm23, %v2014, 0
    %v2165 = vsel %vm23, %v2016, 0
    %v2168 = vsel %vm23, %v2018, 0
    %v2171 = vsel %vm23, %v2020, 0
    %v2174 = vsel %vm23, %v2022, 0
    %v2177 = vsel %vm23, %v2024, 0
    %v2180 = vsel %vm23, %v2026, 0
    %v2183 = vsel %vm23, %v2028, 0
    %v2186 = vsel %vm23, %v2030, 0
    %v2189 = vsel %vm23, %v2032, 0
    %v2192 = vsel %vm23, %v2034, 0
    %v2195 = vsel %vm23, %v2036, 0
    %v2198 = vsel %vm23, %v2038, 0
    %v2201 = vsel %vm23, %v2040, 0
    %v2204 = vsel %vm23, %v2042, 0
    %vm2206 = vcmask 1043456
    %v2208 = vsel %vm2206, %v2144, 0
    %2210 = vmatprep.subr.bf16.mxu0 0
    %2211 = vmatpush1.bf16.msra.mxu0 %v2131
    %2212 = vmatprep.subr.bf16.mxu0 0
    %2213 = vmatpush1.bf16.msra.mxu0 %v2132
    %2214 = vmatprep.subr.bf16.mxu0 0
    %2215 = vmatpush1.bf16.msra.mxu0 %v2133
    %2216 = vmatprep.subr.bf16.mxu0 0
    %2217 = vmatpush1.bf16.msra.mxu0 %v2134
    %2218 = vmatprep.subr.bf16.mxu0 0
    %2219 = vmatpush1.bf16.msra.mxu0 %v2135
    %2220 = vmatprep.subr.bf16.mxu0 0
    %2221 = vmatpush1.bf16.msra.mxu0 %v2136
    %2222 = vmatprep.subr.bf16.mxu0 0
    %2223 = vmatpush1.bf16.msra.mxu0 %v2137
    %2224 = vmatprep.subr.bf16.mxu0 0
    %2225 = vmatpush1.bf16.msra.mxu0 %v2138
    %2226 = vmatprep.subr.bf16.mxu0 0
    %2227 = vmatpush1.bf16.msra.mxu0 %v2139
    %2228 = vmatprep.subr.bf16.mxu0 0
    %2229 = vmatpush1.bf16.msra.mxu0 %v2140
    %2230 = vmatprep.subr.bf16.mxu0 0
    %2231 = vmatpush1.bf16.msra.mxu0 %v2141
    %2232 = vmatprep.subr.bf16.mxu0 0
    %2233 = vmatpush1.bf16.msra.mxu0 %v2142
    %2234 = vmatprep.subr.bf16.mxu0 0
    %2235 = vmatpush1.bf16.msra.mxu0 %v2143
    %2236 = vmatprep.subr.bf16.mxu0 0
    %2237 = vmatpush1.bf16.msra.mxu0 %v2208
    %2238 = vmatprep.subr.bf16.mxu0 0
    %2239 = vmatpush1.bf16.msra.mxu0 0
    %2240 = vmatprep.subr.bf16.mxu0 0
    %2241 = vmatpush1.bf16.msra.mxu0 0
    %2242 = vmatprep.mubr.bf16.mxu0 %v2159
    %2243 = vmatmul.mubr.bf16.gmra.mrb[0].mxu0 %v2011
    %v2244 = vpop.f32.mrb[0].mxu0
    %v2245 = vadd.f32 %v2075, %v2244
    %v2246 = vpop.f32.mrb[0].mxu0
    %v2247 = vpop.f32.mrb[0].mxu0
    %v2248 = vadd.f32 %v2075, %v2247
    %v2249 = vpop.f32.mrb[0].mxu0
    %2250 = vmatprep.mubr.bf16.mxu0 %v2162
    %2251 = vmatmul.mubr.bf16.gmra.mrb[0].mxu0 %v2013
    %v2252 = vpop.f32.mrb[0].mxu0
    %v2253 = vadd.f32 %v2075, %v2252
    %v2254 = vpop.f32.mrb[0].mxu0
    %v2255 = vpop.f32.mrb[0].mxu0
    %v2256 = vadd.f32 %v2075, %v2255
    %v2257 = vpop.f32.mrb[0].mxu0
    %2258 = vmatprep.mubr.bf16.mxu0 %v2165
    %2259 = vmatmul.mubr.bf16.gmra.mrb[0].mxu0 %v2015
    %v2260 = vpop.f32.mrb[0].mxu0
    %v2261 = vadd.f32 %v2075, %v2260
    %v2262 = vpop.f32.mrb[0].mxu0
    %v2263 = vpop.f32.mrb[0].mxu0
    %v2264 = vadd.f32 %v2075, %v2263
    %v2265 = vpop.f32.mrb[0].mxu0
    %2266 = vmatprep.mubr.bf16.mxu0 %v2168
    %2267 = vmatmul.mubr.bf16.gmra.mrb[0].mxu0 %v2017
    %v2268 = vpop.f32.mrb[0].mxu0
    %v2269 = vadd.f32 %v2075, %v2268
    %v2270 = vpop.f32.mrb[0].mxu0
    %v2271 = vpop.f32.mrb[0].mxu0
    %v2272 = vadd.f32 %v2075, %v2271
    %v2273 = vpop.f32.mrb[0].mxu0
    %2274 = vmatprep.mubr.bf16.mxu0 %v2171
    %2275 = vmatmul.mubr.bf16.gmra.mrb[0].mxu0 %v2019
    %v2276 = vpop.f32.mrb[0].mxu0
    %v2277 = vadd.f32 %v2075, %v2276
    %v2278 = vpop.f32.mrb[0].mxu0
    %v2279 = vpop.f32.mrb[0].mxu0
    %v2280 = vadd.f32 %v2075, %v2279
    %v2281 = vpop.f32.mrb[0].mxu0
    %2282 = vmatprep.mubr.bf16.mxu0 %v2174
    %2283 = vmatmul.mubr.bf16.gmra.mrb[0].mxu0 %v2021
    %v2284 = vpop.f32.mrb[0].mxu0
    %v2285 = vadd.f32 %v2075, %v2284
    %v2286 = vpop.f32.mrb[0].mxu0
    %v2287 = vpop.f32.mrb[0].mxu0
    %v2288 = vadd.f32 %v2075, %v2287
    %v2289 = vpop.f32.mrb[0].mxu0
    %2290 = vmatprep.mubr.bf16.mxu0 %v2177
    %2291 = vmatmul.mubr.bf16.gmra.mrb[0].mxu0 %v2023
    %v2292 = vpop.f32.mrb[0].mxu0
    %v2293 = vadd.f32 %v2075, %v2292
    %v2294 = vpop.f32.mrb[0].mxu0
    %v2295 = vpop.f32.mrb[0].mxu0
    %v2296 = vadd.f32 %v2075, %v2295
    %v2297 = vpop.f32.mrb[0].mxu0
    %2298 = vmatprep.mubr.bf16.mxu0 %v2180
    %2299 = vmatmul.mubr.bf16.gmra.mrb[0].mxu0 %v2025
    %v2300 = vpop.f32.mrb[0].mxu0
    %v2301 = vadd.f32 %v2075, %v2300
    %v2302 = vpop.f32.mrb[0].mxu0
    %v2303 = vpop.f32.mrb[0].mxu0
    %v2304 = vadd.f32 %v2075, %v2303
    %v2305 = vpop.f32.mrb[0].mxu0
    %2306 = vmatprep.mubr.bf16.mxu0 %v2183
    %2307 = vmatmul.mubr.bf16.gmra.mrb[0].mxu0 %v2027
    %v2308 = vpop.f32.mrb[0].mxu0
    %v2309 = vadd.f32 %v2075, %v2308
    %v2310 = vpop.f32.mrb[0].mxu0
    %v2311 = vpop.f32.mrb[0].mxu0
    %v2312 = vadd.f32 %v2075, %v2311
    %v2313 = vpop.f32.mrb[0].mxu0
    %2314 = vmatprep.mubr.bf16.mxu0 %v2186
    %2315 = vmatmul.mubr.bf16.gmra.mrb[0].mxu0 %v2029
    %v2316 = vpop.f32.mrb[0].mxu0
    %v2317 = vadd.f32 %v2075, %v2316
    %v2318 = vpop.f32.mrb[0].mxu0
    %v2319 = vpop.f32.mrb[0].mxu0
    %v2320 = vadd.f32 %v2075, %v2319
    %v2321 = vpop.f32.mrb[0].mxu0
    %2322 = vmatprep.mubr.bf16.mxu0 %v2189
    %2323 = vmatmul.mubr.bf16.gmra.mrb[0].mxu0 %v2031
    %v2324 = vpop.f32.mrb[0].mxu0
    %v2325 = vadd.f32 %v2075, %v2324
    %v2326 = vpop.f32.mrb[0].mxu0
    %v2327 = vpop.f32.mrb[0].mxu0
    %v2328 = vadd.f32 %v2075, %v2327
    %v2329 = vpop.f32.mrb[0].mxu0
    %2330 = vmatprep.mubr.bf16.mxu0 %v2192
    %2331 = vmatmul.mubr.bf16.gmra.mrb[0].mxu0 %v2033
    %v2332 = vpop.f32.mrb[0].mxu0
    %v2333 = vadd.f32 %v2075, %v2332
    %v2334 = vpop.f32.mrb[0].mxu0
    %v2335 = vpop.f32.mrb[0].mxu0
    %v2336 = vadd.f32 %v2075, %v2335
    %v2337 = vpop.f32.mrb[0].mxu0
    %2338 = vmatprep.mubr.bf16.mxu0 %v2195
    %2339 = vmatmul.mubr.bf16.gmra.mrb[0].mxu0 %v2035
    %v2340 = vpop.f32.mrb[0].mxu0
    %v2341 = vadd.f32 %v2075, %v2340
    %v2342 = vpop.f32.mrb[0].mxu0
    %v2343 = vpop.f32.mrb[0].mxu0
    %v2344 = vadd.f32 %v2075, %v2343
    %v2345 = vpop.f32.mrb[0].mxu0
    %2346 = vmatprep.mubr.bf16.mxu0 %v2198
    %2347 = vmatmul.mubr.bf16.gmra.mrb[0].mxu0 %v2037
    %v2348 = vpop.f32.mrb[0].mxu0
    %v2349 = vadd.f32 %v2075, %v2348
    %v2350 = vpop.f32.mrb[0].mxu0
    %v2351 = vpop.f32.mrb[0].mxu0
    %v2352 = vadd.f32 %v2075, %v2351
    %v2353 = vpop.f32.mrb[0].mxu0
    %2354 = vmatprep.mubr.bf16.mxu0 %v2201
    %2355 = vmatmul.mubr.bf16.gmra.mrb[0].mxu0 %v2039
    %v2356 = vpop.f32.mrb[0].mxu0
    %v2357 = vadd.f32 %v2075, %v2356
    %v2358 = vpop.f32.mrb[0].mxu0
    %v2359 = vpop.f32.mrb[0].mxu0
    %v2360 = vadd.f32 %v2075, %v2359
    %v2361 = vpop.f32.mrb[0].mxu0
    %2362 = vmatprep.mubr.bf16.mxu0 %v2204
    %2363 = vmatmul.mubr.bf16.gmra.mrb[0].mxu0 %v2041
    %v2364 = vpop.f32.mrb[0].mxu0
    %v2365 = vadd.f32 %v2075, %v2364
    %v2366 = vpop.f32.mrb[0].mxu0
    %v2367 = vpop.f32.mrb[0].mxu0
    %v2368 = vadd.f32 %v2075, %v2367
    %v2369 = vpop.f32.mrb[0].mxu0
    %2370 = vdwg.mxu0
    %vm2371 = vcmp.ge.f32.partialorder %v2245, 0.0
    %vm2372 = vcmp.ge.f32.partialorder %v2248, 0.0
    %vm2373 = vcmp.ge.f32.partialorder %v2253, 0.0
    %vm2374 = vcmp.ge.f32.partialorder %v2256, 0.0
    %vm2375 = vcmp.ge.f32.partialorder %v2261, 0.0
    %vm2376 = vcmp.ge.f32.partialorder %v2264, 0.0
    %vm2377 = vcmp.ge.f32.partialorder %v2269, 0.0
    %vm2378 = vcmp.ge.f32.partialorder %v2272, 0.0
    %vm2379 = vcmp.ge.f32.partialorder %v2277, 0.0
    %vm2380 = vcmp.ge.f32.partialorder %v2280, 0.0
    %vm2381 = vcmp.ge.f32.partialorder %v2285, 0.0
    %vm2382 = vcmp.ge.f32.partialorder %v2288, 0.0
    %vm2383 = vcmp.ge.f32.partialorder %v2293, 0.0
    %vm2384 = vcmp.ge.f32.partialorder %v2296, 0.0
    %vm2385 = vcmp.ge.f32.partialorder %v2301, 0.0
    %vm2386 = vcmp.ge.f32.partialorder %v2304, 0.0
    %vm2387 = vcmp.ge.f32.partialorder %v2309, 0.0
    %vm2388 = vcmp.ge.f32.partialorder %v2312, 0.0
    %vm2389 = vcmp.ge.f32.partialorder %v2317, 0.0
    %vm2390 = vcmp.ge.f32.partialorder %v2320, 0.0
    %vm2391 = vcmp.ge.f32.partialorder %v2325, 0.0
    %vm2392 = vcmp.ge.f32.partialorder %v2328, 0.0
    %vm2393 = vcmp.ge.f32.partialorder %v2333, 0.0
    %vm2394 = vcmp.ge.f32.partialorder %v2336, 0.0
    %vm2395 = vcmp.ge.f32.partialorder %v2341, 0.0
    %vm2396 = vcmp.ge.f32.partialorder %v2344, 0.0
    %vm2397 = vcmp.ge.f32.partialorder %v2349, 0.0
    %vm2398 = vcmp.ge.f32.partialorder %v2352, 0.0
    %vm2399 = vcmp.ge.f32.partialorder %v2357, 0.0
    %vm2400 = vcmp.ge.f32.partialorder %v2360, 0.0
    %vm2401 = vcmp.ge.f32.partialorder %v2365, 0.0
    %vm2402 = vcmp.ge.f32.partialorder %v2368, 0.0
    %v2403 = vmul.f32 %v2245, 0.2
    %v2404 = vmul.f32 %v2248, 0.2
    %v2405 = vmul.f32 %v2253, 0.2
    %v2406 = vmul.f32 %v2256, 0.2
    %v2407 = vmul.f32 %v2261, 0.2
    %v2408 = vmul.f32 %v2264, 0.2
    %v2409 = vmul.f32 %v2269, 0.2
    %v2410 = vmul.f32 %v2272, 0.2
    %v2411 = vmul.f32 %v2277, 0.2
    %v2412 = vmul.f32 %v2280, 0.2
    %v2413 = vmul.f32 %v2285, 0.2
    %v2414 = vmul.f32 %v2288, 0.2
    %v2415 = vmul.f32 %v2293, 0.2
    %v2416 = vmul.f32 %v2296, 0.2
    %v2417 = vmul.f32 %v2301, 0.2
    %v2418 = vmul.f32 %v2304, 0.2
    %v2419 = vmul.f32 %v2309, 0.2
    %v2420 = vmul.f32 %v2312, 0.2
    %v2421 = vmul.f32 %v2317, 0.2
    %v2422 = vmul.f32 %v2320, 0.2
    %v2423 = vmul.f32 %v2325, 0.2
    %v2424 = vmul.f32 %v2328, 0.2
    %v2425 = vmul.f32 %v2333, 0.2
    %v2426 = vmul.f32 %v2336, 0.2
    %v2427 = vmul.f32 %v2341, 0.2
    %v2428 = vmul.f32 %v2344, 0.2
    %v2429 = vmul.f32 %v2349, 0.2
    %v2430 = vmul.f32 %v2352, 0.2
    %v2431 = vmul.f32 %v2357, 0.2
    %v2432 = vmul.f32 %v2360, 0.2
    %v2433 = vmul.f32 %v2365, 0.2
    %v2434 = vmul.f32 %v2368, 0.2
    %v2435 = vsel %vm2371, %v2245, %v2403
    %v2436 = vsel %vm2372, %v2248, %v2404
    %v2437 = vsel %vm2373, %v2253, %v2405
    %v2438 = vsel %vm2374, %v2256, %v2406
    %v2439 = vsel %vm2375, %v2261, %v2407
    %v2440 = vsel %vm2376, %v2264, %v2408
    %v2441 = vsel %vm2377, %v2269, %v2409
    %v2442 = vsel %vm2378, %v2272, %v2410
    %v2443 = vsel %vm2379, %v2277, %v2411
    %v2444 = vsel %vm2380, %v2280, %v2412
    %v2445 = vsel %vm2381, %v2285, %v2413
    %v2446 = vsel %vm2382, %v2288, %v2414
    %v2447 = vsel %vm2383, %v2293, %v2415
    %v2448 = vsel %vm2384, %v2296, %v2416
    %v2449 = vsel %vm2385, %v2301, %v2417
    %v2450 = vsel %vm2386, %v2304, %v2418
    %v2451 = vsel %vm2387, %v2309, %v2419
    %v2452 = vsel %vm2388, %v2312, %v2420
    %v2453 = vsel %vm2389, %v2317, %v2421
    %v2454 = vsel %vm2390, %v2320, %v2422
    %v2455 = vsel %vm2391, %v2325, %v2423
    %v2456 = vsel %vm2392, %v2328, %v2424
    %v2457 = vsel %vm2393, %v2333, %v2425
    %v2458 = vsel %vm2394, %v2336, %v2426
    %v2459 = vsel %vm2395, %v2341, %v2427
    %v2460 = vsel %vm2396, %v2344, %v2428
    %v2461 = vsel %vm2397, %v2349, %v2429
    %v2462 = vsel %vm2398, %v2352, %v2430
    %v2463 = vsel %vm2399, %v2357, %v2431
    %v2464 = vsel %vm2400, %v2360, %v2432
    %v2465 = vsel %vm2401, %v2365, %v2433
    %v2466 = vsel %vm2402, %v2368, %v2434
    %v2467 = vld [vmem:[%s0] sm:$0xf]
    %v2468 = vld [vmem:[%s0 + $0x4] sm:$0xf]
    %v2469 = vld [vmem:[%s0 + $0x8] sm:$0xf]
    %v2470 = vld [vmem:[%s0 + $0xc] sm:$0xf]
    %v2471 = vld [vmem:[%s0 + $0x10] sm:$0xf]
    %v2472 = vld [vmem:[%s0 + $0x14] sm:$0xf]
    %v2473 = vld [vmem:[%s0 + $0x18] sm:$0xf]
    %v2474 = vld [vmem:[%s0 + $0x1c] sm:$0xf]
    %v2475 = vld [vmem:[%s0 + $0x20] sm:$0xf]
    %v2476 = vld [vmem:[%s0 + $0x24] sm:$0xf]
    %v2477 = vld [vmem:[%s0 + $0x28] sm:$0xf]
    %v2478 = vld [vmem:[%s0 + $0x2c] sm:$0xf]
    %v2479 = vld [vmem:[%s0 + $0x30] sm:$0xf]
    %v2480 = vld [vmem:[%s0 + $0x34] sm:$0xf]
    %v2481 = vld [vmem:[%s0 + $0x38] sm:$0xf]
    %v2482 = vld [vmem:[%s0 + $0x3c] sm:$0xf]
    %v2483 = vld [vmem:[%s0 + $0x40] sm:$0xf]
    %v2484 = vld [vmem:[%s0 + $0x44] sm:$0xf]
    %v2485 = vld [vmem:[%s0 + $0x48] sm:$0xf]
    %v2486 = vld [vmem:[%s0 + $0x4c] sm:$0xf]
    %v2487 = vld [vmem:[%s0 + $0x50] sm:$0xf]
    %v2488 = vld [vmem:[%s0 + $0x54] sm:$0xf]
    %v2489 = vld [vmem:[%s0 + $0x58] sm:$0xf]
    %v2490 = vld [vmem:[%s0 + $0x5c] sm:$0xf]
    %v2491 = vld [vmem:[%s0 + $0x60] sm:$0xf]
    %v2492 = vld [vmem:[%s0 + $0x64] sm:$0xf]
    %v2493 = vld [vmem:[%s0 + $0x68] sm:$0xf]
    %v2494 = vld [vmem:[%s0 + $0x6c] sm:$0xf]
    %v2495 = vld [vmem:[%s0 + $0x70] sm:$0xf]
    %v2496 = vld [vmem:[%s0 + $0x74] sm:$0xf]
    %v2497 = vld [vmem:[%s0 + $0x78] sm:$0xf]
    %v2498 = vld [vmem:[%s0 + $0x7c] sm:$0xf]
    %v2499 = vunpack.c.l.bf16 %v2467
    %v2500 = vunpack.c.l.bf16 %v2468
    %v2501 = vunpack.c.l.bf16 %v2469
    %v2502 = vunpack.c.l.bf16 %v2470
    %v2503 = vunpack.c.l.bf16 %v2471
    %v2504 = vunpack.c.l.bf16 %v2472
    %v2505 = vunpack.c.l.bf16 %v2473
    %v2506 = vunpack.c.l.bf16 %v2474
    %v2507 = vunpack.c.l.bf16 %v2475
    %v2508 = vunpack.c.l.bf16 %v2476
    %v2509 = vunpack.c.l.bf16 %v2477
    %v2510 = vunpack.c.l.bf16 %v2478
    %v2511 = vunpack.c.l.bf16 %v2479
    %v2512 = vunpack.c.l.bf16 %v2480
    %v2513 = vunpack.c.l.bf16 %v2481
    %v2514 = vunpack.c.l.bf16 %v2482
    %v2515 = vunpack.c.l.bf16 %v2483
    %v2516 = vunpack.c.l.bf16 %v2484
    %v2517 = vunpack.c.l.bf16 %v2485
    %v2518 = vunpack.c.l.bf16 %v2486
    %v2519 = vunpack.c.l.bf16 %v2487
    %v2520 = vunpack.c.l.bf16 %v2488
    %v2521 = vunpack.c.l.bf16 %v2489
    %v2522 = vunpack.c.l.bf16 %v2490
    %v2523 = vunpack.c.l.bf16 %v2491
    %v2524 = vunpack.c.l.bf16 %v2492
    %v2525 = vunpack.c.l.bf16 %v2493
    %v2526 = vunpack.c.l.bf16 %v2494
    %v2527 = vunpack.c.l.bf16 %v2495
    %v2528 = vunpack.c.l.bf16 %v2496
    %v2529 = vunpack.c.l.bf16 %v2497
    %v2530 = vunpack.c.l.bf16 %v2498
    %v2531 = vmul.f32 %v2435, 0.2
    %v2532 = vmul.f32 %v2436, 0.2
    %v2533 = vmul.f32 %v2437, 0.2
    %v2534 = vmul.f32 %v2438, 0.2
    %v2535 = vmul.f32 %v2439, 0.2
    %v2536 = vmul.f32 %v2440, 0.2
    %v2537 = vmul.f32 %v2441, 0.2
    %v2538 = vmul.f32 %v2442, 0.2
    %v2539 = vmul.f32 %v2443, 0.2
    %v2540 = vmul.f32 %v2444, 0.2
    %v2541 = vmul.f32 %v2445, 0.2
    %v2542 = vmul.f32 %v2446, 0.2
    %v2543 = vmul.f32 %v2447, 0.2
    %v2544 = vmul.f32 %v2448, 0.2
    %v2545 = vmul.f32 %v2449, 0.2
    %v2546 = vmul.f32 %v2450, 0.2
    %v2547 = vmul.f32 %v2451, 0.2
    %v2548 = vmul.f32 %v2452, 0.2
    %v2549 = vmul.f32 %v2453, 0.2
    %v2550 = vmul.f32 %v2454, 0.2
    %v2551 = vmul.f32 %v2455, 0.2
    %v2552 = vmul.f32 %v2456, 0.2
    %v2553 = vmul.f32 %v2457, 0.2
    %v2554 = vmul.f32 %v2458, 0.2
    %v2555 = vmul.f32 %v2459, 0.2
    %v2556 = vmul.f32 %v2460, 0.2
    %v2557 = vmul.f32 %v2461, 0.2
    %v2558 = vmul.f32 %v2462, 0.2
    %v2559 = vmul.f32 %v2463, 0.2
    %v2560 = vmul.f32 %v2464, 0.2
    %v2561 = vmul.f32 %v2465, 0.2
    %v2562 = vmul.f32 %v2466, 0.2
    %v2563 = vadd.f32 %v2531, %v2499
    %v2564 = vadd.f32 %v2532, %v2500
    %v2565 = vadd.f32 %v2533, %v2501
    %v2566 = vadd.f32 %v2534, %v2502
    %v2567 = vadd.f32 %v2535, %v2503
    %v2568 = vadd.f32 %v2536, %v2504
    %v2569 = vadd.f32 %v2537, %v2505
    %v2570 = vadd.f32 %v2538, %v2506
    %v2571 = vadd.f32 %v2539, %v2507
    %v2572 = vadd.f32 %v2540, %v2508
    %v2573 = vadd.f32 %v2541, %v2509
    %v2574 = vadd.f32 %v2542, %v2510
    %v2575 = vadd.f32 %v2543, %v2511
    %v2576 = vadd.f32 %v2544, %v2512
    %v2577 = vadd.f32 %v2545, %v2513
    %v2578 = vadd.f32 %v2546, %v2514
    %v2579 = vadd.f32 %v2547, %v2515
    %v2580 = vadd.f32 %v2548, %v2516
    %v2581 = vadd.f32 %v2549, %v2517
    %v2582 = vadd.f32 %v2550, %v2518
    %v2583 = vadd.f32 %v2551, %v2519
    %v2584 = vadd.f32 %v2552, %v2520
    %v2585 = vadd.f32 %v2553, %v2521
    %v2586 = vadd.f32 %v2554, %v2522
    %v2587 = vadd.f32 %v2555, %v2523
    %v2588 = vadd.f32 %v2556, %v2524
    %v2589 = vadd.f32 %v2557, %v2525
    %v2590 = vadd.f32 %v2558, %v2526
    %v2591 = vadd.f32 %v2559, %v2527
    %v2592 = vadd.f32 %v2560, %v2528
    %v2593 = vadd.f32 %v2561, %v2529
    %v2594 = vadd.f32 %v2562, %v2530
    %v2595 = vld [vmem:[%s2] sm:$0xf]
    %v2596 = vld [vmem:[%s2 + $0x4] sm:$0xf]
    %v2597 = vld [vmem:[%s2 + $0x8] sm:$0xf]
    %v2598 = vld [vmem:[%s2 + $0xc] sm:$0xf]
    %v2599 = vld [vmem:[%s2 + $0x10] sm:$0xf]
    %v2600 = vld [vmem:[%s2 + $0x14] sm:$0xf]
    %v2601 = vld [vmem:[%s2 + $0x18] sm:$0xf]
    %v2602 = vld [vmem:[%s2 + $0x1c] sm:$0xf]
    %v2603 = vld [vmem:[%s2 + $0x20] sm:$0xf]
    %v2604 = vld [vmem:[%s2 + $0x24] sm:$0xf]
    %v2605 = vld [vmem:[%s2 + $0x28] sm:$0xf]
    %v2606 = vld [vmem:[%s2 + $0x2c] sm:$0xf]
    %v2607 = vld [vmem:[%s2 + $0x30] sm:$0xf]
    %v2608 = vld [vmem:[%s2 + $0x34] sm:$0xf]
    %v2609 = vld [vmem:[%s2 + $0x38] sm:$0xf]
    %v2610 = vld [vmem:[%s2 + $0x3c] sm:$0xf]
    %v2611 = vld [vmem:[%s2 + $0x40] sm:$0xf]
    %v2612 = vld [vmem:[%s2 + $0x44] sm:$0xf]
    %v2613 = vld [vmem:[%s2 + $0x48] sm:$0xf]
    %v2614 = vld [vmem:[%s2 + $0x4c] sm:$0xf]
    %v2615 = vld [vmem:[%s2 + $0x50] sm:$0xf]
    %v2616 = vld [vmem:[%s2 + $0x54] sm:$0xf]
    %v2617 = vld [vmem:[%s2 + $0x58] sm:$0xf]
    %v2618 = vld [vmem:[%s2 + $0x5c] sm:$0xf]
    %v2619 = vld [vmem:[%s2 + $0x60] sm:$0xf]
    %v2620 = vld [vmem:[%s2 + $0x64] sm:$0xf]
    %v2621 = vld [vmem:[%s2 + $0x68] sm:$0xf]
    %v2622 = vld [vmem:[%s2 + $0x6c] sm:$0xf]
    %v2623 = vld [vmem:[%s2 + $0x70] sm:$0xf]
    %v2624 = vld [vmem:[%s2 + $0x74] sm:$0xf]
    %v2625 = vld [vmem:[%s2 + $0x78] sm:$0xf]
    %v2626 = vld [vmem:[%s2 + $0x7c] sm:$0xf]
    %v2627 = vunpack.c.l.bf16 %v2595
    %v2628 = vunpack.c.l.bf16 %v2596
    %v2629 = vunpack.c.l.bf16 %v2597
    %v2630 = vunpack.c.l.bf16 %v2598
    %v2631 = vunpack.c.l.bf16 %v2599
    %v2632 = vunpack.c.l.bf16 %v2600
    %v2633 = vunpack.c.l.bf16 %v2601
    %v2634 = vunpack.c.l.bf16 %v2602
    %v2635 = vunpack.c.l.bf16 %v2603
    %v2636 = vunpack.c.l.bf16 %v2604
    %v2637 = vunpack.c.l.bf16 %v2605
    %v2638 = vunpack.c.l.bf16 %v2606
    %v2639 = vunpack.c.l.bf16 %v2607
    %v2640 = vunpack.c.l.bf16 %v2608
    %v2641 = vunpack.c.l.bf16 %v2609
    %v2642 = vunpack.c.l.bf16 %v2610
    %v2643 = vunpack.c.l.bf16 %v2611
    %v2644 = vunpack.c.l.bf16 %v2612
    %v2645 = vunpack.c.l.bf16 %v2613
    %v2646 = vunpack.c.l.bf16 %v2614
    %v2647 = vunpack.c.l.bf16 %v2615
    %v2648 = vunpack.c.l.bf16 %v2616
    %v2649 = vunpack.c.l.bf16 %v2617
    %v2650 = vunpack.c.l.bf16 %v2618
    %v2651 = vunpack.c.l.bf16 %v2619
    %v2652 = vunpack.c.l.bf16 %v2620
    %v2653 = vunpack.c.l.bf16 %v2621
    %v2654 = vunpack.c.l.bf16 %v2622
    %v2655 = vunpack.c.l.bf16 %v2623
    %v2656 = vunpack.c.l.bf16 %v2624
    %v2657 = vunpack.c.l.bf16 %v2625
    %v2658 = vunpack.c.l.bf16 %v2626
    %v2659 = vmul.f32 %v2563, 0.2
    %v2660 = vmul.f32 %v2564, 0.2
    %v2661 = vmul.f32 %v2565, 0.2
    %v2662 = vmul.f32 %v2566, 0.2
    %v2663 = vmul.f32 %v2567, 0.2
    %v2664 = vmul.f32 %v2568, 0.2
    %v2665 = vmul.f32 %v2569, 0.2
    %v2666 = vmul.f32 %v2570, 0.2
    %v2667 = vmul.f32 %v2571, 0.2
    %v2668 = vmul.f32 %v2572, 0.2
    %v2669 = vmul.f32 %v2573, 0.2
    %v2670 = vmul.f32 %v2574, 0.2
    %v2671 = vmul.f32 %v2575, 0.2
    %v2672 = vmul.f32 %v2576, 0.2
    %v2673 = vmul.f32 %v2577, 0.2
    %v2674 = vmul.f32 %v2578, 0.2
    %v2675 = vmul.f32 %v2579, 0.2
    %v2676 = vmul.f32 %v2580, 0.2
    %v2677 = vmul.f32 %v2581, 0.2
    %v2678 = vmul.f32 %v2582, 0.2
    %v2679 = vmul.f32 %v2583, 0.2
    %v2680 = vmul.f32 %v2584, 0.2
    %v2681 = vmul.f32 %v2585, 0.2
    %v2682 = vmul.f32 %v2586, 0.2
    %v2683 = vmul.f32 %v2587, 0.2
    %v2684 = vmul.f32 %v2588, 0.2
    %v2685 = vmul.f32 %v2589, 0.2
    %v2686 = vmul.f32 %v2590, 0.2
    %v2687 = vmul.f32 %v2591, 0.2
    %v2688 = vmul.f32 %v2592, 0.2
    %v2689 = vmul.f32 %v2593, 0.2
    %v2690 = vmul.f32 %v2594, 0.2
    %v2691 = vadd.f32 %v2659, %v2627
    %v2692 = vadd.f32 %v2660, %v2628
    %v2693 = vadd.f32 %v2661, %v2629
    %v2694 = vadd.f32 %v2662, %v2630
    %v2695 = vadd.f32 %v2663, %v2631
    %v2696 = vadd.f32 %v2664, %v2632
    %v2697 = vadd.f32 %v2665, %v2633
    %v2698 = vadd.f32 %v2666, %v2634
    %v2699 = vadd.f32 %v2667, %v2635
    %v2700 = vadd.f32 %v2668, %v2636
    %v2701 = vadd.f32 %v2669, %v2637
    %v2702 = vadd.f32 %v2670, %v2638
    %v2703 = vadd.f32 %v2671, %v2639
    %v2704 = vadd.f32 %v2672, %v2640
    %v2705 = vadd.f32 %v2673, %v2641
    %v2706 = vadd.f32 %v2674, %v2642
    %v2707 = vadd.f32 %v2675, %v2643
    %v2708 = vadd.f32 %v2676, %v2644
    %v2709 = vadd.f32 %v2677, %v2645
    %v2710 = vadd.f32 %v2678, %v2646
    %v2711 = vadd.f32 %v2679, %v2647
    %v2712 = vadd.f32 %v2680, %v2648
    %v2713 = vadd.f32 %v2681, %v2649
    %v2714 = vadd.f32 %v2682, %v2650
    %v2715 = vadd.f32 %v2683, %v2651
    %v2716 = vadd.f32 %v2684, %v2652
    %v2717 = vadd.f32 %v2685, %v2653
    %v2718 = vadd.f32 %v2686, %v2654
    %v2719 = vadd.f32 %v2687, %v2655
    %v2720 = vadd.f32 %v2688, %v2656
    %v2721 = vadd.f32 %v2689, %v2657
    %v2722 = vadd.f32 %v2690, %v2658
    %vm2723 = vcmask 130048
    %2724 = vst.msk [vmem:[#allocation3] sm:$0xff] %vm2723, %v2691
    %2725 = vst.msk [vmem:[#allocation3 + $0x8] sm:$0xff] %vm2723, %v2692
    %2726 = vst.msk [vmem:[#allocation3 + $0x10] sm:$0xff] %vm2723, %v2693
    %2727 = vst.msk [vmem:[#allocation3 + $0x18] sm:$0xff] %vm2723, %v2694
    %2728 = vst.msk [vmem:[#allocation3 + $0x20] sm:$0xff] %vm2723, %v2695
    %2729 = vst.msk [vmem:[#allocation3 + $0x28] sm:$0xff] %vm2723, %v2696
    %2730 = vst.msk [vmem:[#allocation3 + $0x30] sm:$0xff] %vm2723, %v2697
    %2731 = vst.msk [vmem:[#allocation3 + $0x38] sm:$0xff] %vm2723, %v2698
    %2732 = vst.msk [vmem:[#allocation3 + $0x40] sm:$0xff] %vm2723, %v2699
    %2733 = vst.msk [vmem:[#allocation3 + $0x48] sm:$0xff] %vm2723, %v2700
    %2734 = vst.msk [vmem:[#allocation3 + $0x50] sm:$0xff] %vm2723, %v2701
    %2735 = vst.msk [vmem:[#allocation3 + $0x58] sm:$0xff] %vm2723, %v2702
    %2736 = vst.msk [vmem:[#allocation3 + $0x60] sm:$0xff] %vm2723, %v2703
    %2737 = vst.msk [vmem:[#allocation3 + $0x68] sm:$0xff] %vm2723, %v2704
    %2738 = vst.msk [vmem:[#allocation3 + $0x70] sm:$0xff] %vm2723, %v2705
    %2739 = vst.msk [vmem:[#allocation3 + $0x78] sm:$0xff] %vm2723, %v2706
    %2740 = vst.msk [vmem:[#allocation3 + $0x80] sm:$0xff] %vm2723, %v2707
    %2741 = vst.msk [vmem:[#allocation3 + $0x88] sm:$0xff] %vm2723, %v2708
    %2742 = vst.msk [vmem:[#allocation3 + $0x90] sm:$0xff] %vm2723, %v2709
    %2743 = vst.msk [vmem:[#allocation3 + $0x98] sm:$0xff] %vm2723, %v2710
    %2744 = vst.msk [vmem:[#allocation3 + $0xa0] sm:$0xff] %vm2723, %v2711
    %2745 = vst.msk [vmem:[#allocation3 + $0xa8] sm:$0xff] %vm2723, %v2712
    %2746 = vst.msk [vmem:[#allocation3 + $0xb0] sm:$0xff] %vm2723, %v2713
    %2747 = vst.msk [vmem:[#allocation3 + $0xb8] sm:$0xff] %vm2723, %v2714
    %2748 = vst.msk [vmem:[#allocation3 + $0xc0] sm:$0xff] %vm2723, %v2715
    %2749 = vst.msk [vmem:[#allocation3 + $0xc8] sm:$0xff] %vm2723, %v2716
    %2750 = vst.msk [vmem:[#allocation3 + $0xd0] sm:$0xff] %vm2723, %v2717
    %2751 = vst.msk [vmem:[#allocation3 + $0xd8] sm:$0xff] %vm2723, %v2718
    %2752 = vst.msk [vmem:[#allocation3 + $0xe0] sm:$0xff] %vm2723, %v2719
    %2753 = vst.msk [vmem:[#allocation3 + $0xe8] sm:$0xff] %vm2723, %v2720
    %2754 = vst.msk [vmem:[#allocation3 + $0xf0] sm:$0xff] %vm2723, %v2721
    %2755 = vst.msk [vmem:[#allocation3 + $0xf8] sm:$0xff] %vm2723, %v2722
    // Predicated region
    $region22: #{tpu_custom_call.1} parent=1 // pred_check
      _
    $region23: #{tpu_custom_call.1} parent=1 // pred_check_branch
      %2757 = sbr.rel (0) target = $region25
    $region24: #{tpu_custom_call.1} parent=1 // pred_region
      %s2759 = ssub.s32 4096, 4096
      %2760 = vsyncadd [#allocation4], %s2759
      %s2761 = sshll.u32 [#allocation3], 4
      %s2762 = int_to_ptr.vmem [resolvable:$true] %s2761
      %2767 = dma.vmem_to_hbm [thread:$0]  %s2762, 4096, %s5, [#allocation4], 128, 128, 8
    $region25: #{tpu_custom_call.1} parent=1 // pred_fallthru
      _
    // Predicated region
    $region26: #{tpu_custom_call.1} parent=1 // pred_check
      _
    $region27: #{tpu_custom_call.1} parent=1 // pred_check_branch
      %2769 = sbr.rel (0) target = $region29
    $region28: #{tpu_custom_call.1} parent=1 // pred_region
      %2770 = dma.done [#allocation4], 4096
    $region29: #{tpu_custom_call.1} parent=1 // pred_fallthru
      _
    %2771 = vsyncpa [#allocation4], 1

// kernel: tpu_custom_call.1
$region0: #{tpu_custom_call.1}
  #allocation0 [shape = 'u32[]', space=smem, size = 0x4, offset = 0x4, fixed_abs, tag = 'smem constant byte address 0x4 - core index']
  #allocation1 [shape = 'u32[144,128]{1,0:T(1,128)}', space=vmem, size = 0x12000, scoped, tag = 'internal scratch']
  #allocation2 [shape = 'f32[16,16,288]{2,1,0:T(8,128)}', space=vmem, size = 0x60000, scoped, tag = 'scratch operand']
  %s0 = inlined_call_operand.hbm [shape: bf16[2,16,16,32], index: 0, kind: input, shape index: {}]
  %s1 = inlined_call_operand.vmem [shape: bf16[288,32], index: 1, kind: input, shape index: {}]
  %s2 = inlined_call_operand.vmem [shape: f32[1,32], index: 2, kind: input, shape index: {}]
  %s3 = inlined_call_operand.hbm [shape: f32[2,16,16,32], index: 3, kind: output, shape index: {}]
  %s4 = sld [smem:[#allocation0]]
  $region49: #{tpu_custom_call.1} parent=0
    _
  %s6 = ssub.s32 1, %s4
  %s7 = scalar_select 0, %s6, %s4
  $region1: #{tpu_custom_call.1} parent=0
    #allocation3 [shape = 'u8[131072]{0}', space=vmem, size = 0x20000, scoped, tag = 'input window, operand 0']
    #allocation4 [shape = 's32[2]{0}', space=sflag, size = 0x8, scoped, tag = 'scoped memory for tpu_custom_call.1']
    #allocation5 [shape = 's32[2]{0}', space=sflag, size = 0x8, scoped, tag = 'scoped memory for tpu_custom_call.1']
    #allocation6 [shape = 'u8[262144]{0}', space=vmem, size = 0x40000, scoped, tag = 'output window, operand 0']
    %8 = vsyncpa [#allocation4], 0
    %s9 = scalar_lea.sflag [#allocation4], 1
    %10 = vsyncpa %s9, 0
    %11 = vsyncpa [#allocation5], 0
    %s12 = scalar_lea.sflag [#allocation5], 1
    %13 = vsyncpa %s12, 0
    loop: start=0, step=1, limit=4
    $region2: #{tpu_custom_call.1} parent=1 // loop_pre_header
      _
    $region3: #{tpu_custom_call.1} parent=1 // loop_header
      %s15 = sphi 0, %s19
      %p16 = scmp.ge.s32.totalorder %s15, 4
      %s25 = sphi 0, %s27
      %s28 = sphi 0, %s25
      %s29 = sphi 0, %s28
      %s45 = sphi 0, %s29
      %s49 = sphi 0, %s49
      %s51 = sphi 0, %s49
      %s52 = sphi 0, %s51
      %s66 = sphi 0, %s52
      %s70 = sphi 0, %s70
      %s72 = sphi 0, %s70
      %s73 = sphi 0, %s72
      %s87 = sphi 0, %s73
      %s93 = sphi 0, %s95
      %s96 = sphi 0, %s93
      %s97 = sphi 0, %s96
      %s113 = sphi 0, %s97
    $region4: #{tpu_custom_call.1} parent=1 // loop_header_branch
      %18 = sbr.rel (%p16) target = $region8
    $region5: #{tpu_custom_call.1} parent=1 // loop_body
      %s20 = ssub.s32 %s15, 1
      %s21 = ssub.s32 %s15, 2
      %s22 = sadd.s32 %s15, 1
      %s23 = ssub.s32 %s15, %s22
      %p24 = scmp.eq.s32.totalorder %s23, 0
      %s26 = sadd.s32 %s25, 1
      %s27 = scalar_select %p24, %s25, %s26
      %p30 = pneg %p24
      %p31 = scmp.eq.s32.totalorder %s15, 1
      %p32 = por %p30, %p31
      %p33 = scmp.ne.s32.totalorder %s25, %s28
      %p34 = scmp.eq.s32.totalorder %s15, 0
      %p35 = por %p33, %p34
      %p36 = scmp.ne.s32.totalorder %s25, %s28
      %p37 = scmp.eq.s32.totalorder %s20, 1
      %p38 = por %p36, %p37
      %p39 = scmp.ne.s32.totalorder %s28, %s29
      %p40 = scmp.eq.s32.totalorder %s20, 0
      %p41 = por %p39, %p40
      %p42 = scmp.ne.s32.totalorder %s28, %s29
      %p43 = scmp.eq.s32.totalorder %s21, 1
      %p44 = por %p42, %p43
      %p46 = scmp.ne.s32.totalorder %s29, %s45
      %p47 = scmp.eq.s32.totalorder %s21, 0
      %p48 = por %p46, %p47
      %s50 = sadd.s32 %s49, 1
      %p53 = scmp.eq.s32.totalorder %s15, 1
      %p54 = scmp.ne.s32.totalorder %s49, %s51
      %p55 = scmp.eq.s32.totalorder %s15, 0
      %p56 = por %p54, %p55
      %p57 = scmp.ne.s32.totalorder %s49, %s51
      %p58 = scmp.eq.s32.totalorder %s20, 1
      %p59 = por %p57, %p58
      %p60 = scmp.ne.s32.totalorder %s51, %s52
      %p61 = scmp.eq.s32.totalorder %s20, 0
      %p62 = por %p60, %p61
      %p63 = scmp.ne.s32.totalorder %s51, %s52
      %p64 = scmp.eq.s32.totalorder %s21, 1
      %p65 = por %p63, %p64
      %p67 = scmp.ne.s32.totalorder %s52, %s66
      %p68 = scmp.eq.s32.totalorder %s21, 0
      %p69 = por %p67, %p68
      %s71 = sadd.s32 %s70, 1
      %p74 = scmp.eq.s32.totalorder %s15, 1
      %p75 = scmp.ne.s32.totalorder %s70, %s72
      %p76 = scmp.eq.s32.totalorder %s15, 0
      %p77 = por %p75, %p76
      %p78 = scmp.ne.s32.totalorder %s70, %s72
      %p79 = scmp.eq.s32.totalorder %s20, 1
      %p80 = por %p78, %p79
      %p81 = scmp.ne.s32.totalorder %s72, %s73
      %p82 = scmp.eq.s32.totalorder %s20, 0
      %p83 = por %p81, %p82
      %p84 = scmp.ne.s32.totalorder %s72, %s73
      %p85 = scmp.eq.s32.totalorder %s21, 1
      %p86 = por %p84, %p85
      %p88 = scmp.ne.s32.totalorder %s73, %s87
      %p89 = scmp.eq.s32.totalorder %s21, 0
      %p90 = por %p88, %p89
      %s91 = ssub.s32 %s15, %s22
      %p92 = scmp.eq.s32.totalorder %s91, 0
      %s94 = sadd.s32 %s93, 1
      %s95 = scalar_select %p92, %s93, %s94
      %p98 = pneg %p92
      %p99 = scmp.eq.s32.totalorder %s15, 1
      %p100 = por %p98, %p99
      %p101 = scmp.ne.s32.totalorder %s93, %s96
      %p102 = scmp.eq.s32.totalorder %s15, 0
      %p103 = por %p101, %p102
      %p104 = scmp.ne.s32.totalorder %s93, %s96
      %p105 = scmp.eq.s32.totalorder %s20, 1
      %p106 = por %p104, %p105
      %p107 = scmp.ne.s32.totalorder %s96, %s97
      %p108 = scmp.eq.s32.totalorder %s20, 0
      %p109 = por %p107, %p108
      %p110 = scmp.ne.s32.totalorder %s96, %s97
      %p111 = scmp.eq.s32.totalorder %s21, 1
      %p112 = por %p110, %p111
      %p114 = scmp.ne.s32.totalorder %s97, %s113
      %p115 = scmp.eq.s32.totalorder %s21, 0
      %p116 = por %p114, %p115
      %p117 = scmp.le.s32.totalorder 1, %s15
      %p118 = scmp.lt.s32.totalorder %s15, 3
      %p119 = pnand %p117, %p118
      %p120 = pneg %p119
      // Predicated region
      $region9: #{tpu_custom_call.1} parent=5 // pred_check
        _
      $region10: #{tpu_custom_call.1} parent=5 // pred_check_branch
        %122 = sbr.rel (%p119) target = $region12
      $region11: #{tpu_custom_call.1} parent=5 // pred_region
        %s123 = ssub.s32 %s15, 1
        // Predicated region
        $region13: #{tpu_custom_call.1} parent=11 // pred_check
          %p124 = pneg %p62
        $region14: #{tpu_custom_call.1} parent=11 // pred_check_branch
          %126 = sbr.rel (%p124) target = $region16
        $region15: #{tpu_custom_call.1} parent=11 // pred_region
          _
        $region16: #{tpu_custom_call.1} parent=11 // pred_fallthru
          _
        // Predicated region
        $region17: #{tpu_custom_call.1} parent=11 // pred_check
          %p127 = pneg %p83
        $region18: #{tpu_custom_call.1} parent=11 // pred_check_branch
          %129 = sbr.rel (%p127) target = $region20
        $region19: #{tpu_custom_call.1} parent=11 // pred_region
          _
        $region20: #{tpu_custom_call.1} parent=11 // pred_fallthru
          _
      $region12: #{tpu_custom_call.1} parent=5 // pred_fallthru
        _
      %p130 = scmp.lt.s32.totalorder %s15, 2
      // Predicated region
      $region21: #{tpu_custom_call.1} parent=5 // pred_check
        %p131 = pneg %p130
      $region22: #{tpu_custom_call.1} parent=5 // pred_check_branch
        %133 = sbr.rel (%p131) target = $region24
      $region23: #{tpu_custom_call.1} parent=5 // pred_region
        // Predicated region
        $region25: #{tpu_custom_call.1} parent=23 // pred_check
          %p134 = pneg %p35
        $region26: #{tpu_custom_call.1} parent=23 // pred_check_branch
          %136 = sbr.rel (%p134) target = $region28
        $region27: #{tpu_custom_call.1} parent=23 // pred_region
          %s137 = sand.u32 %s25, 1
          %s138 = scalar_lea.sflag [#allocation4], %s137
          %s139 = sand.u32 %s25, 1
          %s140 = smul.addr %s139, 128
          %s141 = scalar_lea.vmem [#allocation3], %s140
          %s143 = ssub.s32 2048, 2048
          %144 = vsyncadd %s138, %s143
          %s145 = smul.addr %s15, 32
          %s146 = smul.addr %s145, 64
          %s147 = scalar_lea.hbm %s0, %s146
          %s148 = sshll.u32 %s141, 4
          %s149 = int_to_ptr.vmem [resolvable:$true] %s148
          %154 = dma.hbm_to_vmem [thread:$0]  %s147, 2048, %s149, %s138, 64, 64, 4
        $region28: #{tpu_custom_call.1} parent=23 // pred_fallthru
          _
      $region24: #{tpu_custom_call.1} parent=5 // pred_fallthru
        _
      %p155 = scmp.le.s32.totalorder 1, %s15
      %p156 = scmp.lt.s32.totalorder %s15, 3
      %p157 = pnand %p155, %p156
      %p158 = pneg %p157
      // Predicated region
      $region29: #{tpu_custom_call.1} parent=5 // pred_check
        _
      $region30: #{tpu_custom_call.1} parent=5 // pred_check_branch
        %160 = sbr.rel (%p157) target = $region32
      $region31: #{tpu_custom_call.1} parent=5 // pred_region
        %s161 = ssub.s32 %s15, 1
        %s162 = sand.u32 %s28, 1
        %s163 = scalar_lea.sflag [#allocation4], %s162
        %s164 = sand.u32 %s28, 1
        %s165 = smul.addr %s164, 128
        %s166 = scalar_lea.vmem [#allocation3], %s165
        // Predicated region
        $region33: #{tpu_custom_call.1} parent=31 // pred_check
          %p167 = pneg %p41
        $region34: #{tpu_custom_call.1} parent=31 // pred_check_branch
          %169 = sbr.rel (%p167) target = $region36
        $region35: #{tpu_custom_call.1} parent=31 // pred_region
          %170 = dma.done %s163, 2048
        $region36: #{tpu_custom_call.1} parent=31 // pred_fallthru
          _
        %s171 = sand.u32 %s28, 1
        %s172 = scalar_lea.sflag [#allocation4], %s171
        %s173 = sand.u32 %s28, 1
        %s174 = smul.addr %s173, 128
        %s175 = scalar_lea.vmem [#allocation3], %s174
        %p176 = pneg %p41
        %p177 = pneg %p38
        %p178 = pneg %p62
        %p179 = pneg %p59
        %p180 = pneg %p83
        %p181 = pneg %p80
        %p182 = pneg %p109
        %p183 = pneg %p106
        %s184 = sand.u32 %s96, 1
        %s185 = scalar_lea.sflag [#allocation5], %s184
        %s186 = sand.u32 %s96, 1
        %s187 = smul.addr %s186, 256
        %s188 = scalar_lea.vmem [#allocation6], %s187
        %190 = vst [vmem:[#allocation2] sm:$0xff] 0.0
        %191 = vst [vmem:[#allocation2 + $0x8] sm:$0xff] 0.0
        %vm192 = vcmask 261120
        %193 = vst.msk [vmem:[#allocation2 + $0x10] sm:$0xff] %vm192, 0.0
        %194 = vst [vmem:[#allocation2 + $0x18] sm:$0xff] 0.0
        %195 = vst [vmem:[#allocation2 + $0x20] sm:$0xff] 0.0
        %196 = vst.msk [vmem:[#allocation2 + $0x28] sm:$0xff] %vm192, 0.0
        %197 = vst [vmem:[#allocation2 + $0x30] sm:$0xff] 0.0
        %198 = vst [vmem:[#allocation2 + $0x38] sm:$0xff] 0.0
        %199 = vst.msk [vmem:[#allocation2 + $0x40] sm:$0xff] %vm192, 0.0
        %200 = vst [vmem:[#allocation2 + $0x48] sm:$0xff] 0.0
        %201 = vst [vmem:[#allocation2 + $0x50] sm:$0xff] 0.0
        %202 = vst.msk [vmem:[#allocation2 + $0x58] sm:$0xff] %vm192, 0.0
        %203 = vst [vmem:[#allocation2 + $0x60] sm:$0xff] 0.0
        %204 = vst [vmem:[#allocation2 + $0x68] sm:$0xff] 0.0
        %205 = vst.msk [vmem:[#allocation2 + $0x70] sm:$0xff] %vm192, 0.0
        %206 = vst [vmem:[#allocation2 + $0x78] sm:$0xff] 0.0
        %207 = vst [vmem:[#allocation2 + $0x80] sm:$0xff] 0.0
        %208 = vst.msk [vmem:[#allocation2 + $0x88] sm:$0xff] %vm192, 0.0
        %209 = vst [vmem:[#allocation2 + $0x90] sm:$0xff] 0.0
        %210 = vst [vmem:[#allocation2 + $0x98] sm:$0xff] 0.0
        %211 = vst.msk [vmem:[#allocation2 + $0xa0] sm:$0xff] %vm192, 0.0
        %212 = vst [vmem:[#allocation2 + $0xa8] sm:$0xff] 0.0
        %213 = vst [vmem:[#allocation2 + $0xb0] sm:$0xff] 0.0
        %214 = vst.msk [vmem:[#allocation2 + $0xb8] sm:$0xff] %vm192, 0.0
        %215 = vst [vmem:[#allocation2 + $0xc0] sm:$0xff] 0.0
        %216 = vst [vmem:[#allocation2 + $0xc8] sm:$0xff] 0.0
        %217 = vst.msk [vmem:[#allocation2 + $0xd0] sm:$0xff] %vm192, 0.0
        %218 = vst [vmem:[#allocation2 + $0xd8] sm:$0xff] 0.0
        %219 = vst [vmem:[#allocation2 + $0xe0] sm:$0xff] 0.0
        %220 = vst.msk [vmem:[#allocation2 + $0xe8] sm:$0xff] %vm192, 0.0
        %221 = vst [vmem:[#allocation2 + $0xf0] sm:$0xff] 0.0
        %222 = vst [vmem:[#allocation2 + $0xf8] sm:$0xff] 0.0
        %223 = vst.msk [vmem:[#allocation2 + $0x100] sm:$0xff] %vm192, 0.0
        %224 = vst [vmem:[#allocation2 + $0x108] sm:$0xff] 0.0
        %225 = vst [vmem:[#allocation2 + $0x110] sm:$0xff] 0.0
        %226 = vst.msk [vmem:[#allocation2 + $0x118] sm:$0xff] %vm192, 0.0
        %227 = vst [vmem:[#allocation2 + $0x120] sm:$0xff] 0.0
        %228 = vst [vmem:[#allocation2 + $0x128] sm:$0xff] 0.0
        %229 = vst.msk [vmem:[#allocation2 + $0x130] sm:$0xff] %vm192, 0.0
        %230 = vst [vmem:[#allocation2 + $0x138] sm:$0xff] 0.0
        %231 = vst [vmem:[#allocation2 + $0x140] sm:$0xff] 0.0
        %232 = vst.msk [vmem:[#allocation2 + $0x148] sm:$0xff] %vm192, 0.0
        %233 = vst [vmem:[#allocation2 + $0x150] sm:$0xff] 0.0
        %234 = vst [vmem:[#allocation2 + $0x158] sm:$0xff] 0.0
        %235 = vst.msk [vmem:[#allocation2 + $0x160] sm:$0xff] %vm192, 0.0
        %236 = vst [vmem:[#allocation2 + $0x168] sm:$0xff] 0.0
        %237 = vst [vmem:[#allocation2 + $0x170] sm:$0xff] 0.0
        %238 = vst.msk [vmem:[#allocation2 + $0x178] sm:$0xff] %vm192, 0.0
        %239 = vst [vmem:[#allocation2 + $0x180] sm:$0xff] 0.0
        %240 = vst [vmem:[#allocation2 + $0x188] sm:$0xff] 0.0
        %241 = vst.msk [vmem:[#allocation2 + $0x190] sm:$0xff] %vm192, 0.0
        %242 = vst [vmem:[#allocation2 + $0x198] sm:$0xff] 0.0
        %243 = vst [vmem:[#allocation2 + $0x1a0] sm:$0xff] 0.0
        %244 = vst.msk [vmem:[#allocation2 + $0x1a8] sm:$0xff] %vm192, 0.0
        %245 = vst [vmem:[#allocation2 + $0x1b0] sm:$0xff] 0.0
        %246 = vst [vmem:[#allocation2 + $0x1b8] sm:$0xff] 0.0
        %247 = vst.msk [vmem:[#allocation2 + $0x1c0] sm:$0xff] %vm192, 0.0
        %248 = vst [vmem:[#allocation2 + $0x1c8] sm:$0xff] 0.0
        %249 = vst [vmem:[#allocation2 + $0x1d0] sm:$0xff] 0.0
        %250 = vst.msk [vmem:[#allocation2 + $0x1d8] sm:$0xff] %vm192, 0.0
        %251 = vst [vmem:[#allocation2 + $0x1e0] sm:$0xff] 0.0
        %252 = vst [vmem:[#allocation2 + $0x1e8] sm:$0xff] 0.0
        %253 = vst.msk [vmem:[#allocation2 + $0x1f0] sm:$0xff] %vm192, 0.0
        %254 = vst [vmem:[#allocation2 + $0x1f8] sm:$0xff] 0.0
        %255 = vst [vmem:[#allocation2 + $0x200] sm:$0xff] 0.0
        %256 = vst.msk [vmem:[#allocation2 + $0x208] sm:$0xff] %vm192, 0.0
        %257 = vst [vmem:[#allocation2 + $0x210] sm:$0xff] 0.0
        %258 = vst [vmem:[#allocation2 + $0x218] sm:$0xff] 0.0
        %259 = vst.msk [vmem:[#allocation2 + $0x220] sm:$0xff] %vm192, 0.0
        %260 = vst [vmem:[#allocation2 + $0x228] sm:$0xff] 0.0
        %261 = vst [vmem:[#allocation2 + $0x230] sm:$0xff] 0.0
        %262 = vst.msk [vmem:[#allocation2 + $0x238] sm:$0xff] %vm192, 0.0
        %263 = vst [vmem:[#allocation2 + $0x240] sm:$0xff] 0.0
        %264 = vst [vmem:[#allocation2 + $0x248] sm:$0xff] 0.0
        %265 = vst.msk [vmem:[#allocation2 + $0x250] sm:$0xff] %vm192, 0.0
        %266 = vst [vmem:[#allocation2 + $0x258] sm:$0xff] 0.0
        %267 = vst [vmem:[#allocation2 + $0x260] sm:$0xff] 0.0
        %268 = vst.msk [vmem:[#allocation2 + $0x268] sm:$0xff] %vm192, 0.0
        %269 = vst [vmem:[#allocation2 + $0x270] sm:$0xff] 0.0
        %270 = vst [vmem:[#allocation2 + $0x278] sm:$0xff] 0.0
        %271 = vst.msk [vmem:[#allocation2 + $0x280] sm:$0xff] %vm192, 0.0
        %272 = vst [vmem:[#allocation2 + $0x288] sm:$0xff] 0.0
        %273 = vst [vmem:[#allocation2 + $0x290] sm:$0xff] 0.0
        %274 = vst.msk [vmem:[#allocation2 + $0x298] sm:$0xff] %vm192, 0.0
        %275 = vst [vmem:[#allocation2 + $0x2a0] sm:$0xff] 0.0
        %276 = vst [vmem:[#allocation2 + $0x2a8] sm:$0xff] 0.0
        %277 = vst.msk [vmem:[#allocation2 + $0x2b0] sm:$0xff] %vm192, 0.0
        %278 = vst [vmem:[#allocation2 + $0x2b8] sm:$0xff] 0.0
        %279 = vst [vmem:[#allocation2 + $0x2c0] sm:$0xff] 0.0
        %280 = vst.msk [vmem:[#allocation2 + $0x2c8] sm:$0xff] %vm192, 0.0
        %281 = vst [vmem:[#allocation2 + $0x2d0] sm:$0xff] 0.0
        %282 = vst [vmem:[#allocation2 + $0x2d8] sm:$0xff] 0.0
        %283 = vst.msk [vmem:[#allocation2 + $0x2e0] sm:$0xff] %vm192, 0.0
        %284 = vst [vmem:[#allocation2 + $0x2e8] sm:$0xff] 0.0
        %285 = vst [vmem:[#allocation2 + $0x2f0] sm:$0xff] 0.0
        %286 = vst.msk [vmem:[#allocation2 + $0x2f8] sm:$0xff] %vm192, 0.0
        %v287 = vld [vmem:[%s166] sm:$0xf]
        %v288 = vld [vmem:[%s166 + $0x4] sm:$0xf]
        %v289 = vld [vmem:[%s166 + $0x8] sm:$0xf]
        %v290 = vld [vmem:[%s166 + $0xc] sm:$0xf]
        %v291 = vld [vmem:[%s166 + $0x10] sm:$0xf]
        %v292 = vld [vmem:[%s166 + $0x14] sm:$0xf]
        %v293 = vld [vmem:[%s166 + $0x18] sm:$0xf]
        %v294 = vld [vmem:[%s166 + $0x1c] sm:$0xf]
        %v295 = vld [vmem:[%s166 + $0x20] sm:$0xf]
        %v296 = vld [vmem:[%s166 + $0x24] sm:$0xf]
        %v297 = vld [vmem:[%s166 + $0x28] sm:$0xf]
        %v298 = vld [vmem:[%s166 + $0x2c] sm:$0xf]
        %v299 = vld [vmem:[%s166 + $0x30] sm:$0xf]
        %v300 = vld [vmem:[%s166 + $0x34] sm:$0xf]
        %v301 = vld [vmem:[%s166 + $0x38] sm:$0xf]
        %v302 = vld [vmem:[%s166 + $0x3c] sm:$0xf]
        %v303 = vld [vmem:[%s166 + $0x40] sm:$0xf]
        %v304 = vld [vmem:[%s166 + $0x44] sm:$0xf]
        %v305 = vld [vmem:[%s166 + $0x48] sm:$0xf]
        %v306 = vld [vmem:[%s166 + $0x4c] sm:$0xf]
        %v307 = vld [vmem:[%s166 + $0x50] sm:$0xf]
        %v308 = vld [vmem:[%s166 + $0x54] sm:$0xf]
        %v309 = vld [vmem:[%s166 + $0x58] sm:$0xf]
        %v310 = vld [vmem:[%s166 + $0x5c] sm:$0xf]
        %v311 = vld [vmem:[%s166 + $0x60] sm:$0xf]
        %v312 = vld [vmem:[%s166 + $0x64] sm:$0xf]
        %v313 = vld [vmem:[%s166 + $0x68] sm:$0xf]
        %v314 = vld [vmem:[%s166 + $0x6c] sm:$0xf]
        %v315 = vld [vmem:[%s166 + $0x70] sm:$0xf]
        %v316 = vld [vmem:[%s166 + $0x74] sm:$0xf]
        %v317 = vld [vmem:[%s166 + $0x78] sm:$0xf]
        %v318 = vld [vmem:[%s166 + $0x7c] sm:$0xf]
        %v319 = vunpack.c.l.bf16 %v287
        %v320 = vunpack.c.l.bf16 %v288
        %v321 = vunpack.c.l.bf16 %v289
        %v322 = vunpack.c.l.bf16 %v290
        %v323 = vunpack.c.l.bf16 %v291
        %v324 = vunpack.c.l.bf16 %v292
        %v325 = vunpack.c.l.bf16 %v293
        %v326 = vunpack.c.l.bf16 %v294
        %v327 = vunpack.c.l.bf16 %v295
        %v328 = vunpack.c.l.bf16 %v296
        %v329 = vunpack.c.l.bf16 %v297
        %v330 = vunpack.c.l.bf16 %v298
        %v331 = vunpack.c.l.bf16 %v299
        %v332 = vunpack.c.l.bf16 %v300
        %v333 = vunpack.c.l.bf16 %v301
        %v334 = vunpack.c.l.bf16 %v302
        %v335 = vunpack.c.l.bf16 %v303
        %v336 = vunpack.c.l.bf16 %v304
        %v337 = vunpack.c.l.bf16 %v305
        %v338 = vunpack.c.l.bf16 %v306
        %v339 = vunpack.c.l.bf16 %v307
        %v340 = vunpack.c.l.bf16 %v308
        %v341 = vunpack.c.l.bf16 %v309
        %v342 = vunpack.c.l.bf16 %v310
        %v343 = vunpack.c.l.bf16 %v311
        %v344 = vunpack.c.l.bf16 %v312
        %v345 = vunpack.c.l.bf16 %v313
        %v346 = vunpack.c.l.bf16 %v314
        %v347 = vunpack.c.l.bf16 %v315
        %v348 = vunpack.c.l.bf16 %v316
        %v349 = vunpack.c.l.bf16 %v317
        %v350 = vunpack.c.l.bf16 %v318
        %vm381 = vcmask 1040384
        %v382 = vrot.slane %v319, 7
        %v383 = vrot.slane %v320, 7
        %v384 = vsel %vm381, %v382, %v383
        %v385 = vrot.slane %v321, 7
        %v386 = vrot.slane %v322, 7
        %v387 = vsel %vm381, %v385, %v386
        %v388 = vrot.slane %v323, 7
        %v389 = vrot.slane %v324, 7
        %v390 = vsel %vm381, %v388, %v389
        %v391 = vrot.slane %v325, 7
        %v392 = vrot.slane %v326, 7
        %v393 = vsel %vm381, %v391, %v392
        %v394 = vrot.slane %v327, 7
        %v395 = vrot.slane %v328, 7
        %v396 = vsel %vm381, %v394, %v395
        %v397 = vrot.slane %v329, 7
        %v398 = vrot.slane %v330, 7
        %v399 = vsel %vm381, %v397, %v398
        %v400 = vrot.slane %v331, 7
        %v401 = vrot.slane %v332, 7
        %v402 = vsel %vm381, %v400, %v401
        %v403 = vrot.slane %v333, 7
        %v404 = vrot.slane %v334, 7
        %v405 = vsel %vm381, %v403, %v404
        %v406 = vrot.slane %v335, 7
        %v407 = vrot.slane %v336, 7
        %v408 = vsel %vm381, %v406, %v407
        %v409 = vrot.slane %v337, 7
        %v410 = vrot.slane %v338, 7
        %v411 = vsel %vm381, %v409, %v410
        %v412 = vrot.slane %v339, 7
        %v413 = vrot.slane %v340, 7
        %v414 = vsel %vm381, %v412, %v413
        %v415 = vrot.slane %v341, 7
        %v416 = vrot.slane %v342, 7
        %v417 = vsel %vm381, %v415, %v416
        %v418 = vrot.slane %v343, 7
        %v419 = vrot.slane %v344, 7
        %v420 = vsel %vm381, %v418, %v419
        %v421 = vrot.slane %v345, 7
        %v422 = vrot.slane %v346, 7
        %v423 = vsel %vm381, %v421, %v422
        %v424 = vrot.slane %v347, 7
        %v425 = vrot.slane %v348, 7
        %v426 = vsel %vm381, %v424, %v425
        %s457 = scalar_lea.vmem [#allocation2], 48
        %vm458 = vcmask 261121
        %459 = vst.msk [vmem:[%s457] sm:$0xfe] %vm458, %v382
        %460 = vst.msk [vmem:[%s457 + $0x18] sm:$0xff] %vm192, %v384
        %461 = vst.msk [vmem:[%s457 + $0x30] sm:$0xfe] %vm458, %v385
        %462 = vst.msk [vmem:[%s457 + $0x48] sm:$0xff] %vm192, %v387
        %463 = vst.msk [vmem:[%s457 + $0x60] sm:$0xfe] %vm458, %v388
        %464 = vst.msk [vmem:[%s457 + $0x78] sm:$0xff] %vm192, %v390
        %465 = vst.msk [vmem:[%s457 + $0x90] sm:$0xfe] %vm458, %v391
        %466 = vst.msk [vmem:[%s457 + $0xa8] sm:$0xff] %vm192, %v393
        %467 = vst.msk [vmem:[%s457 + $0xc0] sm:$0xfe] %vm458, %v394
        %468 = vst.msk [vmem:[%s457 + $0xd8] sm:$0xff] %vm192, %v396
        %469 = vst.msk [vmem:[%s457 + $0xf0] sm:$0xfe] %vm458, %v397
        %470 = vst.msk [vmem:[%s457 + $0x108] sm:$0xff] %vm192, %v399
        %471 = vst.msk [vmem:[%s457 + $0x120] sm:$0xfe] %vm458, %v400
        %472 = vst.msk [vmem:[%s457 + $0x138] sm:$0xff] %vm192, %v402
        %473 = vst.msk [vmem:[%s457 + $0x150] sm:$0xfe] %vm458, %v403
        %474 = vst.msk [vmem:[%s457 + $0x168] sm:$0xff] %vm192, %v405
        %475 = vst.msk [vmem:[%s457 + $0x180] sm:$0xfe] %vm458, %v406
        %476 = vst.msk [vmem:[%s457 + $0x198] sm:$0xff] %vm192, %v408
        %477 = vst.msk [vmem:[%s457 + $0x1b0] sm:$0xfe] %vm458, %v409
        %478 = vst.msk [vmem:[%s457 + $0x1c8] sm:$0xff] %vm192, %v411
        %479 = vst.msk [vmem:[%s457 + $0x1e0] sm:$0xfe] %vm458, %v412
        %480 = vst.msk [vmem:[%s457 + $0x1f8] sm:$0xff] %vm192, %v414
        %481 = vst.msk [vmem:[%s457 + $0x210] sm:$0xfe] %vm458, %v415
        %482 = vst.msk [vmem:[%s457 + $0x228] sm:$0xff] %vm192, %v417
        %483 = vst.msk [vmem:[%s457 + $0x240] sm:$0xfe] %vm458, %v418
        %484 = vst.msk [vmem:[%s457 + $0x258] sm:$0xff] %vm192, %v420
        %485 = vst.msk [vmem:[%s457 + $0x270] sm:$0xfe] %vm458, %v421
        %486 = vst.msk [vmem:[%s457 + $0x288] sm:$0xff] %vm192, %v423
        %487 = vst.msk [vmem:[%s457 + $0x2a0] sm:$0xfe] %vm458, %v424
        %488 = vst.msk [vmem:[%s457 + $0x2b8] sm:$0xff] %vm192, %v426
        %489 = vrot.lane.b32.xlu0 %v319, 32
        %v490 = vpop.permute.xlu0 %489
        %491 = vrot.lane.b32.xlu0 %v320, 32
        %v492 = vpop.permute.xlu0 %491
        %493 = vrot.lane.b32.xlu0 %v321, 32
        %v494 = vpop.permute.xlu0 %493
        %495 = vrot.lane.b32.xlu0 %v322, 32
        %v496 = vpop.permute.xlu0 %495
        %497 = vrot.lane.b32.xlu0 %v323, 32
        %v498 = vpop.permute.xlu0 %497
        %499 = vrot.lane.b32.xlu0 %v324, 32
        %v500 = vpop.permute.xlu0 %499
        %501 = vrot.lane.b32.xlu0 %v325, 32
        %v502 = vpop.permute.xlu0 %501
        %503 = vrot.lane.b32.xlu0 %v326, 32
        %v504 = vpop.permute.xlu0 %503
        %505 = vrot.lane.b32.xlu0 %v327, 32
        %v506 = vpop.permute.xlu0 %505
        %507 = vrot.lane.b32.xlu0 %v328, 32
        %v508 = vpop.permute.xlu0 %507
        %509 = vrot.lane.b32.xlu0 %v329, 32
        %v510 = vpop.permute.xlu0 %509
        %511 = vrot.lane.b32.xlu0 %v330, 32
        %v512 = vpop.permute.xlu0 %511
        %513 = vrot.lane.b32.xlu0 %v331, 32
        %v514 = vpop.permute.xlu0 %513
        %515 = vrot.lane.b32.xlu0 %v332, 32
        %v516 = vpop.permute.xlu0 %515
        %517 = vrot.lane.b32.xlu0 %v333, 32
        %v518 = vpop.permute.xlu0 %517
        %519 = vrot.lane.b32.xlu0 %v334, 32
        %v520 = vpop.permute.xlu0 %519
        %521 = vrot.lane.b32.xlu0 %v335, 32
        %v522 = vpop.permute.xlu0 %521
        %523 = vrot.lane.b32.xlu0 %v336, 32
        %v524 = vpop.permute.xlu0 %523
        %525 = vrot.lane.b32.xlu0 %v337, 32
        %v526 = vpop.permute.xlu0 %525
        %527 = vrot.lane.b32.xlu0 %v338, 32
        %v528 = vpop.permute.xlu0 %527
        %529 = vrot.lane.b32.xlu0 %v339, 32
        %v530 = vpop.permute.xlu0 %529
        %531 = vrot.lane.b32.xlu0 %v340, 32
        %v532 = vpop.permute.xlu0 %531
        %533 = vrot.lane.b32.xlu0 %v341, 32
        %v534 = vpop.permute.xlu0 %533
        %535 = vrot.lane.b32.xlu0 %v342, 32
        %v536 = vpop.permute.xlu0 %535
        %537 = vrot.lane.b32.xlu0 %v343, 32
        %v538 = vpop.permute.xlu0 %537
        %539 = vrot.lane.b32.xlu0 %v344, 32
        %v540 = vpop.permute.xlu0 %539
        %541 = vrot.lane.b32.xlu0 %v345, 32
        %v542 = vpop.permute.xlu0 %541
        %543 = vrot.lane.b32.xlu0 %v346, 32
        %v544 = vpop.permute.xlu0 %543
        %545 = vrot.lane.b32.xlu0 %v347, 32
        %v546 = vpop.permute.xlu0 %545
        %547 = vrot.lane.b32.xlu0 %v348, 32
        %v548 = vpop.permute.xlu0 %547
        %vm579 = vcmask 523520
        %580 = vst.msk [vmem:[%s457] sm:$0xff] %vm579, %v490
        %581 = vst.msk [vmem:[%s457 + $0x18] sm:$0xff] %vm579, %v492
        %582 = vst.msk [vmem:[%s457 + $0x30] sm:$0xff] %vm579, %v494
        %583 = vst.msk [vmem:[%s457 + $0x48] sm:$0xff] %vm579, %v496
        %584 = vst.msk [vmem:[%s457 + $0x60] sm:$0xff] %vm579, %v498
        %585 = vst.msk [vmem:[%s457 + $0x78] sm:$0xff] %vm579, %v500
        %586 = vst.msk [vmem:[%s457 + $0x90] sm:$0xff] %vm579, %v502
        %587 = vst.msk [vmem:[%s457 + $0xa8] sm:$0xff] %vm579, %v504
        %588 = vst.msk [vmem:[%s457 + $0xc0] sm:$0xff] %vm579, %v506
        %589 = vst.msk [vmem:[%s457 + $0xd8] sm:$0xff] %vm579, %v508
        %590 = vst.msk [vmem:[%s457 + $0xf0] sm:$0xff] %vm579, %v510
        %591 = vst.msk [vmem:[%s457 + $0x108] sm:$0xff] %vm579, %v512
        %592 = vst.msk [vmem:[%s457 + $0x120] sm:$0xff] %vm579, %v514
        %593 = vst.msk [vmem:[%s457 + $0x138] sm:$0xff] %vm579, %v516
        %594 = vst.msk [vmem:[%s457 + $0x150] sm:$0xff] %vm579, %v518
        %595 = vst.msk [vmem:[%s457 + $0x168] sm:$0xff] %vm579, %v520
        %596 = vst.msk [vmem:[%s457 + $0x180] sm:$0xff] %vm579, %v522
        %597 = vst.msk [vmem:[%s457 + $0x198] sm:$0xff] %vm579, %v524
        %598 = vst.msk [vmem:[%s457 + $0x1b0] sm:$0xff] %vm579, %v526
        %599 = vst.msk [vmem:[%s457 + $0x1c8] sm:$0xff] %vm579, %v528
        %600 = vst.msk [vmem:[%s457 + $0x1e0] sm:$0xff] %vm579, %v530
        %601 = vst.msk [vmem:[%s457 + $0x1f8] sm:$0xff] %vm579, %v532
        %602 = vst.msk [vmem:[%s457 + $0x210] sm:$0xff] %vm579, %v534
        %603 = vst.msk [vmem:[%s457 + $0x228] sm:$0xff] %vm579, %v536
        %604 = vst.msk [vmem:[%s457 + $0x240] sm:$0xff] %vm579, %v538
        %605 = vst.msk [vmem:[%s457 + $0x258] sm:$0xff] %vm579, %v540
        %606 = vst.msk [vmem:[%s457 + $0x270] sm:$0xff] %vm579, %v542
        %607 = vst.msk [vmem:[%s457 + $0x288] sm:$0xff] %vm579, %v544
        %608 = vst.msk [vmem:[%s457 + $0x2a0] sm:$0xff] %vm579, %v546
        %609 = vst.msk [vmem:[%s457 + $0x2b8] sm:$0xff] %vm579, %v548
        %vm610 = vcmask 1046528
        %v611 = vrot.slane %v319, 1
        %v612 = vrot.slane %v320, 1
        %v613 = vsel %vm610, %v611, %v612
        %v614 = vrot.slane %v321, 1
        %v615 = vrot.slane %v322, 1
        %v616 = vsel %vm610, %v614, %v615
        %v617 = vrot.slane %v323, 1
        %v618 = vrot.slane %v324, 1
        %v619 = vsel %vm610, %v617, %v618
        %v620 = vrot.slane %v325, 1
        %v621 = vrot.slane %v326, 1
        %v622 = vsel %vm610, %v620, %v621
        %v623 = vrot.slane %v327, 1
        %v624 = vrot.slane %v328, 1
        %v625 = vsel %vm610, %v623, %v624
        %v626 = vrot.slane %v329, 1
        %v627 = vrot.slane %v330, 1
        %v628 = vsel %vm610, %v626, %v627
        %v629 = vrot.slane %v331, 1
        %v630 = vrot.slane %v332, 1
        %v631 = vsel %vm610, %v629, %v630
        %v632 = vrot.slane %v333, 1
        %v633 = vrot.slane %v334, 1
        %v634 = vsel %vm610, %v632, %v633
        %v635 = vrot.slane %v335, 1
        %v636 = vrot.slane %v336, 1
        %v637 = vsel %vm610, %v635, %v636
        %v638 = vrot.slane %v337, 1
        %v639 = vrot.slane %v338, 1
        %v640 = vsel %vm610, %v638, %v639
        %v641 = vrot.slane %v339, 1
        %v642 = vrot.slane %v340, 1
        %v643 = vsel %vm610, %v641, %v642
        %v644 = vrot.slane %v341, 1
        %v645 = vrot.slane %v342, 1
        %v646 = vsel %vm610, %v644, %v645
        %v647 = vrot.slane %v343, 1
        %v648 = vrot.slane %v344, 1
        %v649 = vsel %vm610, %v647, %v648
        %v650 = vrot.slane %v345, 1
        %v651 = vrot.slane %v346, 1
        %v652 = vsel %vm610, %v650, %v651
        %v653 = vrot.slane %v347, 1
        %v654 = vrot.slane %v348, 1
        %v655 = vsel %vm610, %v653, %v654
        %656 = vrot.lane.b32.xlu0 %v613, 64
        %v657 = vpop.permute.xlu0 %656
        %658 = vrot.lane.b32.xlu0 %v612, 64
        %v659 = vpop.permute.xlu0 %658
        %660 = vrot.lane.b32.xlu0 %v616, 64
        %v661 = vpop.permute.xlu0 %660
        %662 = vrot.lane.b32.xlu0 %v615, 64
        %v663 = vpop.permute.xlu0 %662
        %664 = vrot.lane.b32.xlu0 %v619, 64
        %v665 = vpop.permute.xlu0 %664
        %666 = vrot.lane.b32.xlu0 %v618, 64
        %v667 = vpop.permute.xlu0 %666
        %668 = vrot.lane.b32.xlu0 %v622, 64
        %v669 = vpop.permute.xlu0 %668
        %670 = vrot.lane.b32.xlu0 %v621, 64
        %v671 = vpop.permute.xlu0 %670
        %672 = vrot.lane.b32.xlu0 %v625, 64
        %v673 = vpop.permute.xlu0 %672
        %674 = vrot.lane.b32.xlu0 %v624, 64
        %v675 = vpop.permute.xlu0 %674
        %676 = vrot.lane.b32.xlu0 %v628, 64
        %v677 = vpop.permute.xlu0 %676
        %678 = vrot.lane.b32.xlu0 %v627, 64
        %v679 = vpop.permute.xlu0 %678
        %680 = vrot.lane.b32.xlu0 %v631, 64
        %v681 = vpop.permute.xlu0 %680
        %682 = vrot.lane.b32.xlu0 %v630, 64
        %v683 = vpop.permute.xlu0 %682
        %684 = vrot.lane.b32.xlu0 %v634, 64
        %v685 = vpop.permute.xlu0 %684
        %686 = vrot.lane.b32.xlu0 %v633, 64
        %v687 = vpop.permute.xlu0 %686
        %688 = vrot.lane.b32.xlu0 %v637, 64
        %v689 = vpop.permute.xlu0 %688
        %690 = vrot.lane.b32.xlu0 %v636, 64
        %v691 = vpop.permute.xlu0 %690
        %692 = vrot.lane.b32.xlu0 %v640, 64
        %v693 = vpop.permute.xlu0 %692
        %694 = vrot.lane.b32.xlu0 %v639, 64
        %v695 = vpop.permute.xlu0 %694
        %696 = vrot.lane.b32.xlu0 %v643, 64
        %v697 = vpop.permute.xlu0 %696
        %698 = vrot.lane.b32.xlu0 %v642, 64
        %v699 = vpop.permute.xlu0 %698
        %700 = vrot.lane.b32.xlu0 %v646, 64
        %v701 = vpop.permute.xlu0 %700
        %702 = vrot.lane.b32.xlu0 %v645, 64
        %v703 = vpop.permute.xlu0 %702
        %704 = vrot.lane.b32.xlu0 %v649, 64
        %v705 = vpop.permute.xlu0 %704
        %706 = vrot.lane.b32.xlu0 %v648, 64
        %v707 = vpop.permute.xlu0 %706
        %708 = vrot.lane.b32.xlu0 %v652, 64
        %v709 = vpop.permute.xlu0 %708
        %710 = vrot.lane.b32.xlu0 %v651, 64
        %v711 = vpop.permute.xlu0 %710
        %712 = vrot.lane.b32.xlu0 %v655, 64
        %v713 = vpop.permute.xlu0 %712
        %714 = vrot.lane.b32.xlu0 %v654, 64
        %v715 = vpop.permute.xlu0 %714
        %vm746 = vcmask 785920
        %747 = vst.msk [vmem:[%s457] sm:$0xff] %vm746, %v657
        %vm748 = vcmask 784896
        %749 = vst.msk [vmem:[%s457 + $0x18] sm:$0x7f] %vm748, %v659
        %750 = vst.msk [vmem:[%s457 + $0x30] sm:$0xff] %vm746, %v661
        %751 = vst.msk [vmem:[%s457 + $0x48] sm:$0x7f] %vm748, %v663
        %752 = vst.msk [vmem:[%s457 + $0x60] sm:$0xff] %vm746, %v665
        %753 = vst.msk [vmem:[%s457 + $0x78] sm:$0x7f] %vm748, %v667
        %754 = vst.msk [vmem:[%s457 + $0x90] sm:$0xff] %vm746, %v669
        %755 = vst.msk [vmem:[%s457 + $0xa8] sm:$0x7f] %vm748, %v671
        %756 = vst.msk [vmem:[%s457 + $0xc0] sm:$0xff] %vm746, %v673
        %757 = vst.msk [vmem:[%s457 + $0xd8] sm:$0x7f] %vm748, %v675
        %758 = vst.msk [vmem:[%s457 + $0xf0] sm:$0xff] %vm746, %v677
        %759 = vst.msk [vmem:[%s457 + $0x108] sm:$0x7f] %vm748, %v679
        %760 = vst.msk [vmem:[%s457 + $0x120] sm:$0xff] %vm746, %v681
        %761 = vst.msk [vmem:[%s457 + $0x138] sm:$0x7f] %vm748, %v683
        %762 = vst.msk [vmem:[%s457 + $0x150] sm:$0xff] %vm746, %v685
        %763 = vst.msk [vmem:[%s457 + $0x168] sm:$0x7f] %vm748, %v687
        %764 = vst.msk [vmem:[%s457 + $0x180] sm:$0xff] %vm746, %v689
        %765 = vst.msk [vmem:[%s457 + $0x198] sm:$0x7f] %vm748, %v691
        %766 = vst.msk [vmem:[%s457 + $0x1b0] sm:$0xff] %vm746, %v693
        %767 = vst.msk [vmem:[%s457 + $0x1c8] sm:$0x7f] %vm748, %v695
        %768 = vst.msk [vmem:[%s457 + $0x1e0] sm:$0xff] %vm746, %v697
        %769 = vst.msk [vmem:[%s457 + $0x1f8] sm:$0x7f] %vm748, %v699
        %770 = vst.msk [vmem:[%s457 + $0x210] sm:$0xff] %vm746, %v701
        %771 = vst.msk [vmem:[%s457 + $0x228] sm:$0x7f] %vm748, %v703
        %772 = vst.msk [vmem:[%s457 + $0x240] sm:$0xff] %vm746, %v705
        %773 = vst.msk [vmem:[%s457 + $0x258] sm:$0x7f] %vm748, %v707
        %774 = vst.msk [vmem:[%s457 + $0x270] sm:$0xff] %vm746, %v709
        %775 = vst.msk [vmem:[%s457 + $0x288] sm:$0x7f] %vm748, %v711
        %776 = vst.msk [vmem:[%s457 + $0x2a0] sm:$0xff] %vm746, %v713
        %777 = vst.msk [vmem:[%s457 + $0x2b8] sm:$0x7f] %vm748, %v715
        %v780 = vrot.slane %v349, 7
        %v781 = vrot.slane %v350, 7
        %v782 = vsel %vm381, %v780, %v781
        %783 = vrot.lane.b32.xlu0 %v382, 96
        %v784 = vpop.permute.xlu0 %783
        %785 = vrot.lane.b32.xlu0 %v384, 96
        %v786 = vpop.permute.xlu0 %785
        %787 = vrot.lane.b32.xlu0 %v385, 96
        %v788 = vpop.permute.xlu0 %787
        %789 = vrot.lane.b32.xlu0 %v387, 96
        %v790 = vpop.permute.xlu0 %789
        %791 = vrot.lane.b32.xlu0 %v388, 96
        %v792 = vpop.permute.xlu0 %791
        %793 = vrot.lane.b32.xlu0 %v390, 96
        %v794 = vpop.permute.xlu0 %793
        %795 = vrot.lane.b32.xlu0 %v391, 96
        %v796 = vpop.permute.xlu0 %795
        %797 = vrot.lane.b32.xlu0 %v393, 96
        %v798 = vpop.permute.xlu0 %797
        %799 = vrot.lane.b32.xlu0 %v394, 96
        %v800 = vpop.permute.xlu0 %799
        %801 = vrot.lane.b32.xlu0 %v396, 96
        %v802 = vpop.permute.xlu0 %801
        %803 = vrot.lane.b32.xlu0 %v397, 96
        %v804 = vpop.permute.xlu0 %803
        %805 = vrot.lane.b32.xlu0 %v399, 96
        %v806 = vpop.permute.xlu0 %805
        %807 = vrot.lane.b32.xlu0 %v400, 96
        %v808 = vpop.permute.xlu0 %807
        %809 = vrot.lane.b32.xlu0 %v402, 96
        %v810 = vpop.permute.xlu0 %809
        %811 = vrot.lane.b32.xlu0 %v403, 96
        %v812 = vpop.permute.xlu0 %811
        %813 = vrot.lane.b32.xlu0 %v405, 96
        %v814 = vpop.permute.xlu0 %813
        %815 = vrot.lane.b32.xlu0 %v406, 96
        %v816 = vpop.permute.xlu0 %815
        %817 = vrot.lane.b32.xlu0 %v408, 96
        %v818 = vpop.permute.xlu0 %817
        %819 = vrot.lane.b32.xlu0 %v409, 96
        %v820 = vpop.permute.xlu0 %819
        %821 = vrot.lane.b32.xlu0 %v411, 96
        %v822 = vpop.permute.xlu0 %821
        %823 = vrot.lane.b32.xlu0 %v412, 96
        %v824 = vpop.permute.xlu0 %823
        %825 = vrot.lane.b32.xlu0 %v414, 96
        %v826 = vpop.permute.xlu0 %825
        %827 = vrot.lane.b32.xlu0 %v415, 96
        %v828 = vpop.permute.xlu0 %827
        %829 = vrot.lane.b32.xlu0 %v417, 96
        %v830 = vpop.permute.xlu0 %829
        %831 = vrot.lane.b32.xlu0 %v418, 96
        %v832 = vpop.permute.xlu0 %831
        %833 = vrot.lane.b32.xlu0 %v420, 96
        %v834 = vpop.permute.xlu0 %833
        %835 = vrot.lane.b32.xlu0 %v421, 96
        %v836 = vpop.permute.xlu0 %835
        %837 = vrot.lane.b32.xlu0 %v423, 96
        %v838 = vpop.permute.xlu0 %837
        %839 = vrot.lane.b32.xlu0 %v424, 96
        %v840 = vpop.permute.xlu0 %839
        %841 = vrot.lane.b32.xlu0 %v426, 96
        %v842 = vpop.permute.xlu0 %841
        %843 = vrot.lane.b32.xlu0 %v780, 96
        %v844 = vpop.permute.xlu0 %843
        %845 = vrot.lane.b32.xlu0 %v782, 96
        %v846 = vpop.permute.xlu0 %845
        %vm879 = vcmask 1048321
        %880 = vst.msk [vmem:[#allocation2] sm:$0xfe] %vm879, %v784
        %vm881 = vcmask 1048320
        %882 = vst.msk [vmem:[#allocation2 + $0x18] sm:$0xff] %vm881, %v786
        %883 = vst.msk [vmem:[#allocation2 + $0x30] sm:$0xfe] %vm879, %v788
        %884 = vst.msk [vmem:[#allocation2 + $0x48] sm:$0xff] %vm881, %v790
        %885 = vst.msk [vmem:[#allocation2 + $0x60] sm:$0xfe] %vm879, %v792
        %886 = vst.msk [vmem:[#allocation2 + $0x78] sm:$0xff] %vm881, %v794
        %887 = vst.msk [vmem:[#allocation2 + $0x90] sm:$0xfe] %vm879, %v796
        %888 = vst.msk [vmem:[#allocation2 + $0xa8] sm:$0xff] %vm881, %v798
        %889 = vst.msk [vmem:[#allocation2 + $0xc0] sm:$0xfe] %vm879, %v800
        %890 = vst.msk [vmem:[#allocation2 + $0xd8] sm:$0xff] %vm881, %v802
        %891 = vst.msk [vmem:[#allocation2 + $0xf0] sm:$0xfe] %vm879, %v804
        %892 = vst.msk [vmem:[#allocation2 + $0x108] sm:$0xff] %vm881, %v806
        %893 = vst.msk [vmem:[#allocation2 + $0x120] sm:$0xfe] %vm879, %v808
        %894 = vst.msk [vmem:[#allocation2 + $0x138] sm:$0xff] %vm881, %v810
        %895 = vst.msk [vmem:[#allocation2 + $0x150] sm:$0xfe] %vm879, %v812
        %896 = vst.msk [vmem:[#allocation2 + $0x168] sm:$0xff] %vm881, %v814
        %897 = vst.msk [vmem:[#allocation2 + $0x180] sm:$0xfe] %vm879, %v816
        %898 = vst.msk [vmem:[#allocation2 + $0x198] sm:$0xff] %vm881, %v818
        %899 = vst.msk [vmem:[#allocation2 + $0x1b0] sm:$0xfe] %vm879, %v820
        %900 = vst.msk [vmem:[#allocation2 + $0x1c8] sm:$0xff] %vm881, %v822
        %901 = vst.msk [vmem:[#allocation2 + $0x1e0] sm:$0xfe] %vm879, %v824
        %902 = vst.msk [vmem:[#allocation2 + $0x1f8] sm:$0xff] %vm881, %v826
        %903 = vst.msk [vmem:[#allocation2 + $0x210] sm:$0xfe] %vm879, %v828
        %904 = vst.msk [vmem:[#allocation2 + $0x228] sm:$0xff] %vm881, %v830
        %905 = vst.msk [vmem:[#allocation2 + $0x240] sm:$0xfe] %vm879, %v832
        %906 = vst.msk [vmem:[#allocation2 + $0x258] sm:$0xff] %vm881, %v834
        %907 = vst.msk [vmem:[#allocation2 + $0x270] sm:$0xfe] %vm879, %v836
        %908 = vst.msk [vmem:[#allocation2 + $0x288] sm:$0xff] %vm881, %v838
        %909 = vst.msk [vmem:[#allocation2 + $0x2a0] sm:$0xfe] %vm879, %v840
        %910 = vst.msk [vmem:[#allocation2 + $0x2b8] sm:$0xff] %vm881, %v842
        %911 = vst.msk [vmem:[#allocation2 + $0x2d0] sm:$0xfe] %vm879, %v844
        %912 = vst.msk [vmem:[#allocation2 + $0x2e8] sm:$0xff] %vm881, %v846
        %913 = vst.msk [vmem:[#allocation2 + $0x8] sm:$0xff] %vm192, %v319
        %914 = vst.msk [vmem:[#allocation2 + $0x20] sm:$0xff] %vm192, %v320
        %915 = vst.msk [vmem:[#allocation2 + $0x38] sm:$0xff] %vm192, %v321
        %916 = vst.msk [vmem:[#allocation2 + $0x50] sm:$0xff] %vm192, %v322
        %917 = vst.msk [vmem:[#allocation2 + $0x68] sm:$0xff] %vm192, %v323
        %918 = vst.msk [vmem:[#allocation2 + $0x80] sm:$0xff] %vm192, %v324
        %919 = vst.msk [vmem:[#allocation2 + $0x98] sm:$0xff] %vm192, %v325
        %920 = vst.msk [vmem:[#allocation2 + $0xb0] sm:$0xff] %vm192, %v326
        %921 = vst.msk [vmem:[#allocation2 + $0xc8] sm:$0xff] %vm192, %v327
        %922 = vst.msk [vmem:[#allocation2 + $0xe0] sm:$0xff] %vm192, %v328
        %923 = vst.msk [vmem:[#allocation2 + $0xf8] sm:$0xff] %vm192, %v329
        %924 = vst.msk [vmem:[#allocation2 + $0x110] sm:$0xff] %vm192, %v330
        %925 = vst.msk [vmem:[#allocation2 + $0x128] sm:$0xff] %vm192, %v331
        %926 = vst.msk [vmem:[#allocation2 + $0x140] sm:$0xff] %vm192, %v332
        %927 = vst.msk [vmem:[#allocation2 + $0x158] sm:$0xff] %vm192, %v333
        %928 = vst.msk [vmem:[#allocation2 + $0x170] sm:$0xff] %vm192, %v334
        %929 = vst.msk [vmem:[#allocation2 + $0x188] sm:$0xff] %vm192, %v335
        %930 = vst.msk [vmem:[#allocation2 + $0x1a0] sm:$0xff] %vm192, %v336
        %931 = vst.msk [vmem:[#allocation2 + $0x1b8] sm:$0xff] %vm192, %v337
        %932 = vst.msk [vmem:[#allocation2 + $0x1d0] sm:$0xff] %vm192, %v338
        %933 = vst.msk [vmem:[#allocation2 + $0x1e8] sm:$0xff] %vm192, %v339
        %934 = vst.msk [vmem:[#allocation2 + $0x200] sm:$0xff] %vm192, %v340
        %935 = vst.msk [vmem:[#allocation2 + $0x218] sm:$0xff] %vm192, %v341
        %936 = vst.msk [vmem:[#allocation2 + $0x230] sm:$0xff] %vm192, %v342
        %937 = vst.msk [vmem:[#allocation2 + $0x248] sm:$0xff] %vm192, %v343
        %938 = vst.msk [vmem:[#allocation2 + $0x260] sm:$0xff] %vm192, %v344
        %939 = vst.msk [vmem:[#allocation2 + $0x278] sm:$0xff] %vm192, %v345
        %940 = vst.msk [vmem:[#allocation2 + $0x290] sm:$0xff] %vm192, %v346
        %941 = vst.msk [vmem:[#allocation2 + $0x2a8] sm:$0xff] %vm192, %v347
        %942 = vst.msk [vmem:[#allocation2 + $0x2c0] sm:$0xff] %vm192, %v348
        %943 = vst.msk [vmem:[#allocation2 + $0x2d8] sm:$0xff] %vm192, %v349
        %944 = vst.msk [vmem:[#allocation2 + $0x2f0] sm:$0xff] %vm192, %v350
        %v945 = vrot.slane %v349, 1
        %v946 = vrot.slane %v350, 1
        %v947 = vsel %vm610, %v945, %v946
        %948 = vrot.lane.b32.xlu0 %v613, 32
        %v949 = vpop.permute.xlu0 %948
        %950 = vrot.lane.b32.xlu0 %v612, 32
        %v951 = vpop.permute.xlu0 %950
        %952 = vrot.lane.b32.xlu0 %v616, 32
        %v953 = vpop.permute.xlu0 %952
        %954 = vrot.lane.b32.xlu0 %v615, 32
        %v955 = vpop.permute.xlu0 %954
        %956 = vrot.lane.b32.xlu0 %v619, 32
        %v957 = vpop.permute.xlu0 %956
        %958 = vrot.lane.b32.xlu0 %v618, 32
        %v959 = vpop.permute.xlu0 %958
        %960 = vrot.lane.b32.xlu0 %v622, 32
        %v961 = vpop.permute.xlu0 %960
        %962 = vrot.lane.b32.xlu0 %v621, 32
        %v963 = vpop.permute.xlu0 %962
        %964 = vrot.lane.b32.xlu0 %v625, 32
        %v965 = vpop.permute.xlu0 %964
        %966 = vrot.lane.b32.xlu0 %v624, 32
        %v967 = vpop.permute.xlu0 %966
        %968 = vrot.lane.b32.xlu0 %v628, 32
        %v969 = vpop.permute.xlu0 %968
        %970 = vrot.lane.b32.xlu0 %v627, 32
        %v971 = vpop.permute.xlu0 %970
        %972 = vrot.lane.b32.xlu0 %v631, 32
        %v973 = vpop.permute.xlu0 %972
        %974 = vrot.lane.b32.xlu0 %v630, 32
        %v975 = vpop.permute.xlu0 %974
        %976 = vrot.lane.b32.xlu0 %v634, 32
        %v977 = vpop.permute.xlu0 %976
        %978 = vrot.lane.b32.xlu0 %v633, 32
        %v979 = vpop.permute.xlu0 %978
        %980 = vrot.lane.b32.xlu0 %v637, 32
        %v981 = vpop.permute.xlu0 %980
        %982 = vrot.lane.b32.xlu0 %v636, 32
        %v983 = vpop.permute.xlu0 %982
        %984 = vrot.lane.b32.xlu0 %v640, 32
        %v985 = vpop.permute.xlu0 %984
        %986 = vrot.lane.b32.xlu0 %v639, 32
        %v987 = vpop.permute.xlu0 %986
        %988 = vrot.lane.b32.xlu0 %v643, 32
        %v989 = vpop.permute.xlu0 %988
        %990 = vrot.lane.b32.xlu0 %v642, 32
        %v991 = vpop.permute.xlu0 %990
        %992 = vrot.lane.b32.xlu0 %v646, 32
        %v993 = vpop.permute.xlu0 %992
        %994 = vrot.lane.b32.xlu0 %v645, 32
        %v995 = vpop.permute.xlu0 %994
        %996 = vrot.lane.b32.xlu0 %v649, 32
        %v997 = vpop.permute.xlu0 %996
        %998 = vrot.lane.b32.xlu0 %v648, 32
        %v999 = vpop.permute.xlu0 %998
        %1000 = vrot.lane.b32.xlu0 %v652, 32
        %v1001 = vpop.permute.xlu0 %1000
        %1002 = vrot.lane.b32.xlu0 %v651, 32
        %v1003 = vpop.permute.xlu0 %1002
        %1004 = vrot.lane.b32.xlu0 %v655, 32
        %v1005 = vpop.permute.xlu0 %1004
        %1006 = vrot.lane.b32.xlu0 %v654, 32
        %v1007 = vpop.permute.xlu0 %1006
        %1008 = vrot.lane.b32.xlu0 %v947, 32
        %v1009 = vpop.permute.xlu0 %1008
        %1010 = vrot.lane.b32.xlu0 %v946, 32
        %v1011 = vpop.permute.xlu0 %1010
        %1044 = vst.msk [vmem:[#allocation2 + $0x8] sm:$0xff] %vm579, %v949
        %vm1045 = vcmask 522496
        %1046 = vst.msk [vmem:[#allocation2 + $0x20] sm:$0x7f] %vm1045, %v951
        %1047 = vst.msk [vmem:[#allocation2 + $0x38] sm:$0xff] %vm579, %v953
        %1048 = vst.msk [vmem:[#allocation2 + $0x50] sm:$0x7f] %vm1045, %v955
        %1049 = vst.msk [vmem:[#allocation2 + $0x68] sm:$0xff] %vm579, %v957
        %1050 = vst.msk [vmem:[#allocation2 + $0x80] sm:$0x7f] %vm1045, %v959
        %1051 = vst.msk [vmem:[#allocation2 + $0x98] sm:$0xff] %vm579, %v961
        %1052 = vst.msk [vmem:[#allocation2 + $0xb0] sm:$0x7f] %vm1045, %v963
        %1053 = vst.msk [vmem:[#allocation2 + $0xc8] sm:$0xff] %vm579, %v965
        %1054 = vst.msk [vmem:[#allocation2 + $0xe0] sm:$0x7f] %vm1045, %v967
        %1055 = vst.msk [vmem:[#allocation2 + $0xf8] sm:$0xff] %vm579, %v969
        %1056 = vst.msk [vmem:[#allocation2 + $0x110] sm:$0x7f] %vm1045, %v971
        %1057 = vst.msk [vmem:[#allocation2 + $0x128] sm:$0xff] %vm579, %v973
        %1058 = vst.msk [vmem:[#allocation2 + $0x140] sm:$0x7f] %vm1045, %v975
        %1059 = vst.msk [vmem:[#allocation2 + $0x158] sm:$0xff] %vm579, %v977
        %1060 = vst.msk [vmem:[#allocation2 + $0x170] sm:$0x7f] %vm1045, %v979
        %1061 = vst.msk [vmem:[#allocation2 + $0x188] sm:$0xff] %vm579, %v981
        %1062 = vst.msk [vmem:[#allocation2 + $0x1a0] sm:$0x7f] %vm1045, %v983
        %1063 = vst.msk [vmem:[#allocation2 + $0x1b8] sm:$0xff] %vm579, %v985
        %1064 = vst.msk [vmem:[#allocation2 + $0x1d0] sm:$0x7f] %vm1045, %v987
        %1065 = vst.msk [vmem:[#allocation2 + $0x1e8] sm:$0xff] %vm579, %v989
        %1066 = vst.msk [vmem:[#allocation2 + $0x200] sm:$0x7f] %vm1045, %v991
        %1067 = vst.msk [vmem:[#allocation2 + $0x218] sm:$0xff] %vm579, %v993
        %1068 = vst.msk [vmem:[#allocation2 + $0x230] sm:$0x7f] %vm1045, %v995
        %1069 = vst.msk [vmem:[#allocation2 + $0x248] sm:$0xff] %vm579, %v997
        %1070 = vst.msk [vmem:[#allocation2 + $0x260] sm:$0x7f] %vm1045, %v999
        %1071 = vst.msk [vmem:[#allocation2 + $0x278] sm:$0xff] %vm579, %v1001
        %1072 = vst.msk [vmem:[#allocation2 + $0x290] sm:$0x7f] %vm1045, %v1003
        %1073 = vst.msk [vmem:[#allocation2 + $0x2a8] sm:$0xff] %vm579, %v1005
        %1074 = vst.msk [vmem:[#allocation2 + $0x2c0] sm:$0x7f] %vm1045, %v1007
        %1075 = vst.msk [vmem:[#allocation2 + $0x2d8] sm:$0xff] %vm579, %v1009
        %1076 = vst.msk [vmem:[#allocation2 + $0x2f0] sm:$0x7f] %vm1045, %v1011
        %1077 = vrot.lane.b32.xlu0 %v385, 64
        %v1078 = vpop.permute.xlu0 %1077
        %1079 = vrot.lane.b32.xlu0 %v387, 64
        %v1080 = vpop.permute.xlu0 %1079
        %1081 = vrot.lane.b32.xlu0 %v388, 64
        %v1082 = vpop.permute.xlu0 %1081
        %1083 = vrot.lane.b32.xlu0 %v390, 64
        %v1084 = vpop.permute.xlu0 %1083
        %1085 = vrot.lane.b32.xlu0 %v391, 64
        %v1086 = vpop.permute.xlu0 %1085
        %1087 = vrot.lane.b32.xlu0 %v393, 64
        %v1088 = vpop.permute.xlu0 %1087
        %1089 = vrot.lane.b32.xlu0 %v394, 64
        %v1090 = vpop.permute.xlu0 %1089
        %1091 = vrot.lane.b32.xlu0 %v396, 64
        %v1092 = vpop.permute.xlu0 %1091
        %1093 = vrot.lane.b32.xlu0 %v397, 64
        %v1094 = vpop.permute.xlu0 %1093
        %1095 = vrot.lane.b32.xlu0 %v399, 64
        %v1096 = vpop.permute.xlu0 %1095
        %1097 = vrot.lane.b32.xlu0 %v400, 64
        %v1098 = vpop.permute.xlu0 %1097
        %1099 = vrot.lane.b32.xlu0 %v402, 64
        %v1100 = vpop.permute.xlu0 %1099
        %1101 = vrot.lane.b32.xlu0 %v403, 64
        %v1102 = vpop.permute.xlu0 %1101
        %1103 = vrot.lane.b32.xlu0 %v405, 64
        %v1104 = vpop.permute.xlu0 %1103
        %1105 = vrot.lane.b32.xlu0 %v406, 64
        %v1106 = vpop.permute.xlu0 %1105
        %1107 = vrot.lane.b32.xlu0 %v408, 64
        %v1108 = vpop.permute.xlu0 %1107
        %1109 = vrot.lane.b32.xlu0 %v409, 64
        %v1110 = vpop.permute.xlu0 %1109
        %1111 = vrot.lane.b32.xlu0 %v411, 64
        %v1112 = vpop.permute.xlu0 %1111
        %1113 = vrot.lane.b32.xlu0 %v412, 64
        %v1114 = vpop.permute.xlu0 %1113
        %1115 = vrot.lane.b32.xlu0 %v414, 64
        %v1116 = vpop.permute.xlu0 %1115
        %1117 = vrot.lane.b32.xlu0 %v415, 64
        %v1118 = vpop.permute.xlu0 %1117
        %1119 = vrot.lane.b32.xlu0 %v417, 64
        %v1120 = vpop.permute.xlu0 %1119
        %1121 = vrot.lane.b32.xlu0 %v418, 64
        %v1122 = vpop.permute.xlu0 %1121
        %1123 = vrot.lane.b32.xlu0 %v420, 64
        %v1124 = vpop.permute.xlu0 %1123
        %1125 = vrot.lane.b32.xlu0 %v421, 64
        %v1126 = vpop.permute.xlu0 %1125
        %1127 = vrot.lane.b32.xlu0 %v423, 64
        %v1128 = vpop.permute.xlu0 %1127
        %1129 = vrot.lane.b32.xlu0 %v424, 64
        %v1130 = vpop.permute.xlu0 %1129
        %1131 = vrot.lane.b32.xlu0 %v426, 64
        %v1132 = vpop.permute.xlu0 %1131
        %1133 = vrot.lane.b32.xlu0 %v780, 64
        %v1134 = vpop.permute.xlu0 %1133
        %1135 = vrot.lane.b32.xlu0 %v782, 64
        %v1136 = vpop.permute.xlu0 %1135
        %vm1167 = vcmask 785921
        %1168 = vst.msk [vmem:[#allocation2 + $0x8] sm:$0xfe] %vm1167, %v1078
        %1169 = vst.msk [vmem:[#allocation2 + $0x20] sm:$0xff] %vm746, %v1080
        %1170 = vst.msk [vmem:[#allocation2 + $0x38] sm:$0xfe] %vm1167, %v1082
        %1171 = vst.msk [vmem:[#allocation2 + $0x50] sm:$0xff] %vm746, %v1084
        %1172 = vst.msk [vmem:[#allocation2 + $0x68] sm:$0xfe] %vm1167, %v1086
        %1173 = vst.msk [vmem:[#allocation2 + $0x80] sm:$0xff] %vm746, %v1088
        %1174 = vst.msk [vmem:[#allocation2 + $0x98] sm:$0xfe] %vm1167, %v1090
        %1175 = vst.msk [vmem:[#allocation2 + $0xb0] sm:$0xff] %vm746, %v1092
        %1176 = vst.msk [vmem:[#allocation2 + $0xc8] sm:$0xfe] %vm1167, %v1094
        %1177 = vst.msk [vmem:[#allocation2 + $0xe0] sm:$0xff] %vm746, %v1096
        %1178 = vst.msk [vmem:[#allocation2 + $0xf8] sm:$0xfe] %vm1167, %v1098
        %1179 = vst.msk [vmem:[#allocation2 + $0x110] sm:$0xff] %vm746, %v1100
        %1180 = vst.msk [vmem:[#allocation2 + $0x128] sm:$0xfe] %vm1167, %v1102
        %1181 = vst.msk [vmem:[#allocation2 + $0x140] sm:$0xff] %vm746, %v1104
        %1182 = vst.msk [vmem:[#allocation2 + $0x158] sm:$0xfe] %vm1167, %v1106
        %1183 = vst.msk [vmem:[#allocation2 + $0x170] sm:$0xff] %vm746, %v1108
        %1184 = vst.msk [vmem:[#allocation2 + $0x188] sm:$0xfe] %vm1167, %v1110
        %1185 = vst.msk [vmem:[#allocation2 + $0x1a0] sm:$0xff] %vm746, %v1112
        %1186 = vst.msk [vmem:[#allocation2 + $0x1b8] sm:$0xfe] %vm1167, %v1114
        %1187 = vst.msk [vmem:[#allocation2 + $0x1d0] sm:$0xff] %vm746, %v1116
        %1188 = vst.msk [vmem:[#allocation2 + $0x1e8] sm:$0xfe] %vm1167, %v1118
        %1189 = vst.msk [vmem:[#allocation2 + $0x200] sm:$0xff] %vm746, %v1120
        %1190 = vst.msk [vmem:[#allocation2 + $0x218] sm:$0xfe] %vm1167, %v1122
        %1191 = vst.msk [vmem:[#allocation2 + $0x230] sm:$0xff] %vm746, %v1124
        %1192 = vst.msk [vmem:[#allocation2 + $0x248] sm:$0xfe] %vm1167, %v1126
        %1193 = vst.msk [vmem:[#allocation2 + $0x260] sm:$0xff] %vm746, %v1128
        %1194 = vst.msk [vmem:[#allocation2 + $0x278] sm:$0xfe] %vm1167, %v1130
        %1195 = vst.msk [vmem:[#allocation2 + $0x290] sm:$0xff] %vm746, %v1132
        %1196 = vst.msk [vmem:[#allocation2 + $0x2a8] sm:$0xfe] %vm1167, %v1134
        %1197 = vst.msk [vmem:[#allocation2 + $0x2c0] sm:$0xff] %vm746, %v1136
        %1198 = vrot.lane.b32.xlu0 %v321, 96
        %v1199 = vpop.permute.xlu0 %1198
        %1200 = vrot.lane.b32.xlu0 %v322, 96
        %v1201 = vpop.permute.xlu0 %1200
        %1202 = vrot.lane.b32.xlu0 %v323, 96
        %v1203 = vpop.permute.xlu0 %1202
        %1204 = vrot.lane.b32.xlu0 %v324, 96
        %v1205 = vpop.permute.xlu0 %1204
        %1206 = vrot.lane.b32.xlu0 %v325, 96
        %v1207 = vpop.permute.xlu0 %1206
        %1208 = vrot.lane.b32.xlu0 %v326, 96
        %v1209 = vpop.permute.xlu0 %1208
        %1210 = vrot.lane.b32.xlu0 %v327, 96
        %v1211 = vpop.permute.xlu0 %1210
        %1212 = vrot.lane.b32.xlu0 %v328, 96
        %v1213 = vpop.permute.xlu0 %1212
        %1214 = vrot.lane.b32.xlu0 %v329, 96
        %v1215 = vpop.permute.xlu0 %1214
        %1216 = vrot.lane.b32.xlu0 %v330, 96
        %v1217 = vpop.permute.xlu0 %1216
        %1218 = vrot.lane.b32.xlu0 %v331, 96
        %v1219 = vpop.permute.xlu0 %1218
        %1220 = vrot.lane.b32.xlu0 %v332, 96
        %v1221 = vpop.permute.xlu0 %1220
        %1222 = vrot.lane.b32.xlu0 %v333, 96
        %v1223 = vpop.permute.xlu0 %1222
        %1224 = vrot.lane.b32.xlu0 %v334, 96
        %v1225 = vpop.permute.xlu0 %1224
        %1226 = vrot.lane.b32.xlu0 %v335, 96
        %v1227 = vpop.permute.xlu0 %1226
        %1228 = vrot.lane.b32.xlu0 %v336, 96
        %v1229 = vpop.permute.xlu0 %1228
        %1230 = vrot.lane.b32.xlu0 %v337, 96
        %v1231 = vpop.permute.xlu0 %1230
        %1232 = vrot.lane.b32.xlu0 %v338, 96
        %v1233 = vpop.permute.xlu0 %1232
        %1234 = vrot.lane.b32.xlu0 %v339, 96
        %v1235 = vpop.permute.xlu0 %1234
        %1236 = vrot.lane.b32.xlu0 %v340, 96
        %v1237 = vpop.permute.xlu0 %1236
        %1238 = vrot.lane.b32.xlu0 %v341, 96
        %v1239 = vpop.permute.xlu0 %1238
        %1240 = vrot.lane.b32.xlu0 %v342, 96
        %v1241 = vpop.permute.xlu0 %1240
        %1242 = vrot.lane.b32.xlu0 %v343, 96
        %v1243 = vpop.permute.xlu0 %1242
        %1244 = vrot.lane.b32.xlu0 %v344, 96
        %v1245 = vpop.permute.xlu0 %1244
        %1246 = vrot.lane.b32.xlu0 %v345, 96
        %v1247 = vpop.permute.xlu0 %1246
        %1248 = vrot.lane.b32.xlu0 %v346, 96
        %v1249 = vpop.permute.xlu0 %1248
        %1250 = vrot.lane.b32.xlu0 %v347, 96
        %v1251 = vpop.permute.xlu0 %1250
        %1252 = vrot.lane.b32.xlu0 %v348, 96
        %v1253 = vpop.permute.xlu0 %1252
        %1254 = vrot.lane.b32.xlu0 %v349, 96
        %v1255 = vpop.permute.xlu0 %1254
        %1256 = vrot.lane.b32.xlu0 %v350, 96
        %v1257 = vpop.permute.xlu0 %1256
        %1288 = vst.msk [vmem:[#allocation2 + $0x8] sm:$0xff] %vm881, %v1199
        %1289 = vst.msk [vmem:[#allocation2 + $0x20] sm:$0xff] %vm881, %v1201
        %1290 = vst.msk [vmem:[#allocation2 + $0x38] sm:$0xff] %vm881, %v1203
        %1291 = vst.msk [vmem:[#allocation2 + $0x50] sm:$0xff] %vm881, %v1205
        %1292 = vst.msk [vmem:[#allocation2 + $0x68] sm:$0xff] %vm881, %v1207
        %1293 = vst.msk [vmem:[#allocation2 + $0x80] sm:$0xff] %vm881, %v1209
        %1294 = vst.msk [vmem:[#allocation2 + $0x98] sm:$0xff] %vm881, %v1211
        %1295 = vst.msk [vmem:[#allocation2 + $0xb0] sm:$0xff] %vm881, %v1213
        %1296 = vst.msk [vmem:[#allocation2 + $0xc8] sm:$0xff] %vm881, %v1215
        %1297 = vst.msk [vmem:[#allocation2 + $0xe0] sm:$0xff] %vm881, %v1217
        %1298 = vst.msk [vmem:[#allocation2 + $0xf8] sm:$0xff] %vm881, %v1219
        %1299 = vst.msk [vmem:[#allocation2 + $0x110] sm:$0xff] %vm881, %v1221
        %1300 = vst.msk [vmem:[#allocation2 + $0x128] sm:$0xff] %vm881, %v1223
        %1301 = vst.msk [vmem:[#allocation2 + $0x140] sm:$0xff] %vm881, %v1225
        %1302 = vst.msk [vmem:[#allocation2 + $0x158] sm:$0xff] %vm881, %v1227
        %1303 = vst.msk [vmem:[#allocation2 + $0x170] sm:$0xff] %vm881, %v1229
        %1304 = vst.msk [vmem:[#allocation2 + $0x188] sm:$0xff] %vm881, %v1231
        %1305 = vst.msk [vmem:[#allocation2 + $0x1a0] sm:$0xff] %vm881, %v1233
        %1306 = vst.msk [vmem:[#allocation2 + $0x1b8] sm:$0xff] %vm881, %v1235
        %1307 = vst.msk [vmem:[#allocation2 + $0x1d0] sm:$0xff] %vm881, %v1237
        %1308 = vst.msk [vmem:[#allocation2 + $0x1e8] sm:$0xff] %vm881, %v1239
        %1309 = vst.msk [vmem:[#allocation2 + $0x200] sm:$0xff] %vm881, %v1241
        %1310 = vst.msk [vmem:[#allocation2 + $0x218] sm:$0xff] %vm881, %v1243
        %1311 = vst.msk [vmem:[#allocation2 + $0x230] sm:$0xff] %vm881, %v1245
        %1312 = vst.msk [vmem:[#allocation2 + $0x248] sm:$0xff] %vm881, %v1247
        %1313 = vst.msk [vmem:[#allocation2 + $0x260] sm:$0xff] %vm881, %v1249
        %1314 = vst.msk [vmem:[#allocation2 + $0x278] sm:$0xff] %vm881, %v1251
        %1315 = vst.msk [vmem:[#allocation2 + $0x290] sm:$0xff] %vm881, %v1253
        %1316 = vst.msk [vmem:[#allocation2 + $0x2a8] sm:$0xff] %vm881, %v1255
        %1317 = vst.msk [vmem:[#allocation2 + $0x2c0] sm:$0xff] %vm881, %v1257
        %1348 = vst.msk [vmem:[#allocation2 + $0x10] sm:$0xff] %vm192, %v616
        %vm1349 = vcmask 260096
        %1350 = vst.msk [vmem:[#allocation2 + $0x28] sm:$0x7f] %vm1349, %v615
        %1351 = vst.msk [vmem:[#allocation2 + $0x40] sm:$0xff] %vm192, %v619
        %1352 = vst.msk [vmem:[#allocation2 + $0x58] sm:$0x7f] %vm1349, %v618
        %1353 = vst.msk [vmem:[#allocation2 + $0x70] sm:$0xff] %vm192, %v622
        %1354 = vst.msk [vmem:[#allocation2 + $0x88] sm:$0x7f] %vm1349, %v621
        %1355 = vst.msk [vmem:[#allocation2 + $0xa0] sm:$0xff] %vm192, %v625
        %1356 = vst.msk [vmem:[#allocation2 + $0xb8] sm:$0x7f] %vm1349, %v624
        %1357 = vst.msk [vmem:[#allocation2 + $0xd0] sm:$0xff] %vm192, %v628
        %1358 = vst.msk [vmem:[#allocation2 + $0xe8] sm:$0x7f] %vm1349, %v627
        %1359 = vst.msk [vmem:[#allocation2 + $0x100] sm:$0xff] %vm192, %v631
        %1360 = vst.msk [vmem:[#allocation2 + $0x118] sm:$0x7f] %vm1349, %v630
        %1361 = vst.msk [vmem:[#allocation2 + $0x130] sm:$0xff] %vm192, %v634
        %1362 = vst.msk [vmem:[#allocation2 + $0x148] sm:$0x7f] %vm1349, %v633
        %1363 = vst.msk [vmem:[#allocation2 + $0x160] sm:$0xff] %vm192, %v637
        %1364 = vst.msk [vmem:[#allocation2 + $0x178] sm:$0x7f] %vm1349, %v636
        %1365 = vst.msk [vmem:[#allocation2 + $0x190] sm:$0xff] %vm192, %v640
        %1366 = vst.msk [vmem:[#allocation2 + $0x1a8] sm:$0x7f] %vm1349, %v639
        %1367 = vst.msk [vmem:[#allocation2 + $0x1c0] sm:$0xff] %vm192, %v643
        %1368 = vst.msk [vmem:[#allocation2 + $0x1d8] sm:$0x7f] %vm1349, %v642
        %1369 = vst.msk [vmem:[#allocation2 + $0x1f0] sm:$0xff] %vm192, %v646
        %1370 = vst.msk [vmem:[#allocation2 + $0x208] sm:$0x7f] %vm1349, %v645
        %1371 = vst.msk [vmem:[#allocation2 + $0x220] sm:$0xff] %vm192, %v649
        %1372 = vst.msk [vmem:[#allocation2 + $0x238] sm:$0x7f] %vm1349, %v648
        %1373 = vst.msk [vmem:[#allocation2 + $0x250] sm:$0xff] %vm192, %v652
        %1374 = vst.msk [vmem:[#allocation2 + $0x268] sm:$0x7f] %vm1349, %v651
        %1375 = vst.msk [vmem:[#allocation2 + $0x280] sm:$0xff] %vm192, %v655
        %1376 = vst.msk [vmem:[#allocation2 + $0x298] sm:$0x7f] %vm1349, %v654
        %1377 = vst.msk [vmem:[#allocation2 + $0x2b0] sm:$0xff] %vm192, %v947
        %1378 = vst.msk [vmem:[#allocation2 + $0x2c8] sm:$0x7f] %vm1349, %v946
        %v1379 = vld [vmem:[#allocation2] sm:$0xff]
        %v1380 = vld [vmem:[#allocation2 + $0x8] sm:$0xff]
        %v1381 = vld [vmem:[#allocation2 + $0x10] sm:$0xff]
        %v1382 = vld [vmem:[#allocation2 + $0x18] sm:$0xff]
        %v1383 = vld [vmem:[#allocation2 + $0x20] sm:$0xff]
        %v1384 = vld [vmem:[#allocation2 + $0x28] sm:$0xff]
        %v1385 = vld [vmem:[#allocation2 + $0x30] sm:$0xff]
        %v1386 = vld [vmem:[#allocation2 + $0x38] sm:$0xff]
        %v1387 = vld [vmem:[#allocation2 + $0x40] sm:$0xff]
        %v1388 = vld [vmem:[#allocation2 + $0x48] sm:$0xff]
        %v1389 = vld [vmem:[#allocation2 + $0x50] sm:$0xff]
        %v1390 = vld [vmem:[#allocation2 + $0x58] sm:$0xff]
        %v1391 = vld [vmem:[#allocation2 + $0x60] sm:$0xff]
        %v1392 = vld [vmem:[#allocation2 + $0x68] sm:$0xff]
        %v1393 = vld [vmem:[#allocation2 + $0x70] sm:$0xff]
        %v1394 = vld [vmem:[#allocation2 + $0x78] sm:$0xff]
        %v1395 = vld [vmem:[#allocation2 + $0x80] sm:$0xff]
        %v1396 = vld [vmem:[#allocation2 + $0x88] sm:$0xff]
        %v1397 = vld [vmem:[#allocation2 + $0x90] sm:$0xff]
        %v1398 = vld [vmem:[#allocation2 + $0x98] sm:$0xff]
        %v1399 = vld [vmem:[#allocation2 + $0xa0] sm:$0xff]
        %v1400 = vld [vmem:[#allocation2 + $0xa8] sm:$0xff]
        %v1401 = vld [vmem:[#allocation2 + $0xb0] sm:$0xff]
        %v1402 = vld [vmem:[#allocation2 + $0xb8] sm:$0xff]
        %v1403 = vld [vmem:[#allocation2 + $0xc0] sm:$0xff]
        %v1404 = vld [vmem:[#allocation2 + $0xc8] sm:$0xff]
        %v1405 = vld [vmem:[#allocation2 + $0xd0] sm:$0xff]
        %v1406 = vld [vmem:[#allocation2 + $0xd8] sm:$0xff]
        %v1407 = vld [vmem:[#allocation2 + $0xe0] sm:$0xff]
        %v1408 = vld [vmem:[#allocation2 + $0xe8] sm:$0xff]
        %v1409 = vld [vmem:[#allocation2 + $0xf0] sm:$0xff]
        %v1410 = vld [vmem:[#allocation2 + $0xf8] sm:$0xff]
        %v1411 = vld [vmem:[#allocation2 + $0x100] sm:$0xff]
        %v1412 = vld [vmem:[#allocation2 + $0x108] sm:$0xff]
        %v1413 = vld [vmem:[#allocation2 + $0x110] sm:$0xff]
        %v1414 = vld [vmem:[#allocation2 + $0x118] sm:$0xff]
        %v1415 = vld [vmem:[#allocation2 + $0x120] sm:$0xff]
        %v1416 = vld [vmem:[#allocation2 + $0x128] sm:$0xff]
        %v1417 = vld [vmem:[#allocation2 + $0x130] sm:$0xff]
        %v1418 = vld [vmem:[#allocation2 + $0x138] sm:$0xff]
        %v1419 = vld [vmem:[#allocation2 + $0x140] sm:$0xff]
        %v1420 = vld [vmem:[#allocation2 + $0x148] sm:$0xff]
        %v1421 = vld [vmem:[#allocation2 + $0x150] sm:$0xff]
        %v1422 = vld [vmem:[#allocation2 + $0x158] sm:$0xff]
        %v1423 = vld [vmem:[#allocation2 + $0x160] sm:$0xff]
        %v1424 = vld [vmem:[#allocation2 + $0x168] sm:$0xff]
        %v1425 = vld [vmem:[#allocation2 + $0x170] sm:$0xff]
        %v1426 = vld [vmem:[#allocation2 + $0x178] sm:$0xff]
        %v1427 = vld [vmem:[#allocation2 + $0x180] sm:$0xff]
        %v1428 = vld [vmem:[#allocation2 + $0x188] sm:$0xff]
        %v1429 = vld [vmem:[#allocation2 + $0x190] sm:$0xff]
        %v1430 = vld [vmem:[#allocation2 + $0x198] sm:$0xff]
        %v1431 = vld [vmem:[#allocation2 + $0x1a0] sm:$0xff]
        %v1432 = vld [vmem:[#allocation2 + $0x1a8] sm:$0xff]
        %v1433 = vld [vmem:[#allocation2 + $0x1b0] sm:$0xff]
        %v1434 = vld [vmem:[#allocation2 + $0x1b8] sm:$0xff]
        %v1435 = vld [vmem:[#allocation2 + $0x1c0] sm:$0xff]
        %v1436 = vld [vmem:[#allocation2 + $0x1c8] sm:$0xff]
        %v1437 = vld [vmem:[#allocation2 + $0x1d0] sm:$0xff]
        %v1438 = vld [vmem:[#allocation2 + $0x1d8] sm:$0xff]
        %v1439 = vld [vmem:[#allocation2 + $0x1e0] sm:$0xff]
        %v1440 = vld [vmem:[#allocation2 + $0x1e8] sm:$0xff]
        %v1441 = vld [vmem:[#allocation2 + $0x1f0] sm:$0xff]
        %v1442 = vld [vmem:[#allocation2 + $0x1f8] sm:$0xff]
        %v1443 = vld [vmem:[#allocation2 + $0x200] sm:$0xff]
        %v1444 = vld [vmem:[#allocation2 + $0x208] sm:$0xff]
        %v1445 = vld [vmem:[#allocation2 + $0x210] sm:$0xff]
        %v1446 = vld [vmem:[#allocation2 + $0x218] sm:$0xff]
        %v1447 = vld [vmem:[#allocation2 + $0x220] sm:$0xff]
        %v1448 = vld [vmem:[#allocation2 + $0x228] sm:$0xff]
        %v1449 = vld [vmem:[#allocation2 + $0x230] sm:$0xff]
        %v1450 = vld [vmem:[#allocation2 + $0x238] sm:$0xff]
        %v1451 = vld [vmem:[#allocation2 + $0x240] sm:$0xff]
        %v1452 = vld [vmem:[#allocation2 + $0x248] sm:$0xff]
        %v1453 = vld [vmem:[#allocation2 + $0x250] sm:$0xff]
        %v1454 = vld [vmem:[#allocation2 + $0x258] sm:$0xff]
        %v1455 = vld [vmem:[#allocation2 + $0x260] sm:$0xff]
        %v1456 = vld [vmem:[#allocation2 + $0x268] sm:$0xff]
        %v1457 = vld [vmem:[#allocation2 + $0x270] sm:$0xff]
        %v1458 = vld [vmem:[#allocation2 + $0x278] sm:$0xff]
        %v1459 = vld [vmem:[#allocation2 + $0x280] sm:$0xff]
        %v1460 = vld [vmem:[#allocation2 + $0x288] sm:$0xff]
        %v1461 = vld [vmem:[#allocation2 + $0x290] sm:$0xff]
        %v1462 = vld [vmem:[#allocation2 + $0x298] sm:$0xff]
        %v1463 = vld [vmem:[#allocation2 + $0x2a0] sm:$0xff]
        %v1464 = vld [vmem:[#allocation2 + $0x2a8] sm:$0xff]
        %v1465 = vld [vmem:[#allocation2 + $0x2b0] sm:$0xff]
        %v1466 = vld [vmem:[#allocation2 + $0x2b8] sm:$0xff]
        %v1467 = vld [vmem:[#allocation2 + $0x2c0] sm:$0xff]
        %v1468 = vld [vmem:[#allocation2 + $0x2c8] sm:$0xff]
        %v1469 = vld [vmem:[#allocation2 + $0x2d0] sm:$0xff]
        %v1470 = vld [vmem:[#allocation2 + $0x2d8] sm:$0xff]
        %v1471 = vld [vmem:[#allocation2 + $0x2e0] sm:$0xff]
        %v1472 = vld [vmem:[#allocation2 + $0x2e8] sm:$0xff]
        %v1473 = vld [vmem:[#allocation2 + $0x2f0] sm:$0xff]
        %v1474 = vld [vmem:[#allocation2 + $0x2f8] sm:$0xff]
        %v1475 = vpack.c.bf16 %v1382, %v1379
        %v1476 = vpack.c.bf16 %v1383, %v1380
        %v1477 = vpack.c.bf16 %v1384, %v1381
        %v1478 = vpack.c.bf16 %v1388, %v1385
        %v1479 = vpack.c.bf16 %v1389, %v1386
        %v1480 = vpack.c.bf16 %v1390, %v1387
        %v1481 = vpack.c.bf16 %v1394, %v1391
        %v1482 = vpack.c.bf16 %v1395, %v1392
        %v1483 = vpack.c.bf16 %v1396, %v1393
        %v1484 = vpack.c.bf16 %v1400, %v1397
        %v1485 = vpack.c.bf16 %v1401, %v1398
        %v1486 = vpack.c.bf16 %v1402, %v1399
        %v1487 = vpack.c.bf16 %v1406, %v1403
        %v1488 = vpack.c.bf16 %v1407, %v1404
        %v1489 = vpack.c.bf16 %v1408, %v1405
        %v1490 = vpack.c.bf16 %v1412, %v1409
        %v1491 = vpack.c.bf16 %v1413, %v1410
        %v1492 = vpack.c.bf16 %v1414, %v1411
        %v1493 = vpack.c.bf16 %v1418, %v1415
        %v1494 = vpack.c.bf16 %v1419, %v1416
        %v1495 = vpack.c.bf16 %v1420, %v1417
        %v1496 = vpack.c.bf16 %v1424, %v1421
        %v1497 = vpack.c.bf16 %v1425, %v1422
        %v1498 = vpack.c.bf16 %v1426, %v1423
        %v1499 = vpack.c.bf16 %v1430, %v1427
        %v1500 = vpack.c.bf16 %v1431, %v1428
        %v1501 = vpack.c.bf16 %v1432, %v1429
        %v1502 = vpack.c.bf16 %v1436, %v1433
        %v1503 = vpack.c.bf16 %v1437, %v1434
        %v1504 = vpack.c.bf16 %v1438, %v1435
        %v1505 = vpack.c.bf16 %v1442, %v1439
        %v1506 = vpack.c.bf16 %v1443, %v1440
        %v1507 = vpack.c.bf16 %v1444, %v1441
        %v1508 = vpack.c.bf16 %v1448, %v1445
        %v1509 = vpack.c.bf16 %v1449, %v1446
        %v1510 = vpack.c.bf16 %v1450, %v1447
        %v1511 = vpack.c.bf16 %v1454, %v1451
        %v1512 = vpack.c.bf16 %v1455, %v1452
        %v1513 = vpack.c.bf16 %v1456, %v1453
        %v1514 = vpack.c.bf16 %v1460, %v1457
        %v1515 = vpack.c.bf16 %v1461, %v1458
        %v1516 = vpack.c.bf16 %v1462, %v1459
        %v1517 = vpack.c.bf16 %v1466, %v1463
        %v1518 = vpack.c.bf16 %v1467, %v1464
        %v1519 = vpack.c.bf16 %v1468, %v1465
        %v1520 = vpack.c.bf16 %v1472, %v1469
        %v1521 = vpack.c.bf16 %v1473, %v1470
        %v1522 = vpack.c.bf16 %v1474, %v1471
        %v1523 = vld [vmem:[%s1] sm:$0xf]
        %v1524 = vld [vmem:[%s1 + $0x4] sm:$0xf]
        %v1525 = vld [vmem:[%s1 + $0x8] sm:$0xf]
        %v1526 = vld [vmem:[%s1 + $0xc] sm:$0xf]
        %v1527 = vld [vmem:[%s1 + $0x10] sm:$0xf]
        %v1528 = vld [vmem:[%s1 + $0x14] sm:$0xf]
        %v1529 = vld [vmem:[%s1 + $0x18] sm:$0xf]
        %v1530 = vld [vmem:[%s1 + $0x1c] sm:$0xf]
        %v1531 = vld [vmem:[%s1 + $0x20] sm:$0xf]
        %v1532 = vld [vmem:[%s1 + $0x24] sm:$0xf]
        %v1533 = vld [vmem:[%s1 + $0x28] sm:$0xf]
        %v1534 = vld [vmem:[%s1 + $0x2c] sm:$0xf]
        %v1535 = vld [vmem:[%s1 + $0x30] sm:$0xf]
        %v1536 = vld [vmem:[%s1 + $0x34] sm:$0xf]
        %v1537 = vld [vmem:[%s1 + $0x38] sm:$0xf]
        %v1538 = vld [vmem:[%s1 + $0x3c] sm:$0xf]
        %v1539 = vld [vmem:[%s1 + $0x40] sm:$0xf]
        %v1540 = vld [vmem:[%s1 + $0x44] sm:$0xf]
        %v1541 = vld [vmem:[%s1 + $0x48] sm:$0xf]
        %v1542 = vld [vmem:[%s1 + $0x4c] sm:$0xf]
        %v1543 = vld [vmem:[%s1 + $0x50] sm:$0xf]
        %v1544 = vld [vmem:[%s1 + $0x54] sm:$0xf]
        %v1545 = vld [vmem:[%s1 + $0x58] sm:$0xf]
        %v1546 = vld [vmem:[%s1 + $0x5c] sm:$0xf]
        %v1547 = vld [vmem:[%s1 + $0x60] sm:$0xf]
        %v1548 = vld [vmem:[%s1 + $0x64] sm:$0xf]
        %v1549 = vld [vmem:[%s1 + $0x68] sm:$0xf]
        %v1550 = vld [vmem:[%s1 + $0x6c] sm:$0xf]
        %v1551 = vld [vmem:[%s1 + $0x70] sm:$0xf]
        %v1552 = vld [vmem:[%s1 + $0x74] sm:$0xf]
        %v1553 = vld [vmem:[%s1 + $0x78] sm:$0xf]
        %v1554 = vld [vmem:[%s1 + $0x7c] sm:$0xf]
        %v1555 = vld [vmem:[%s1 + $0x80] sm:$0xf]
        %v1556 = vld [vmem:[%s1 + $0x84] sm:$0xf]
        %v1557 = vld [vmem:[%s1 + $0x88] sm:$0xf]
        %v1558 = vld [vmem:[%s1 + $0x8c] sm:$0xf]
        %v1559 = vld [vmem:[%s2] sm:$0x1]
        %v1561 = vlaneseq
        %v1562 = vshrl.u32 %v1561, 7
        %v1563 = vsub.s32 0, %v1562
        %v1564 = vrot.slane %v1559, %v1563
        %v1602 = vunpack.c.l.b16 %v1523
        %v1603 = vunpack.c.l.b16 %v1524
        %v1604 = vunpack.c.l.b16 %v1525
        %v1605 = vunpack.c.l.b16 %v1526
        %v1606 = vunpack.c.l.b16 %v1527
        %v1607 = vunpack.c.l.b16 %v1528
        %v1608 = vunpack.c.l.b16 %v1529
        %v1609 = vunpack.c.l.b16 %v1530
        %v1610 = vunpack.c.l.b16 %v1531
        %v1611 = vunpack.c.l.b16 %v1532
        %v1612 = vunpack.c.l.b16 %v1533
        %v1613 = vunpack.c.l.b16 %v1534
        %v1614 = vunpack.c.l.b16 %v1535
        %v1615 = vunpack.c.l.b16 %v1536
        %v1616 = vunpack.c.l.b16 %v1537
        %v1617 = vunpack.c.l.b16 %v1538
        %v1618 = vunpack.c.l.b16 %v1539
        %v1619 = vunpack.c.l.b16 %v1540
        %v1620 = vunpack.c.l.b16 %v1541
        %v1621 = vunpack.c.l.b16 %v1542
        %v1622 = vunpack.c.l.b16 %v1543
        %v1623 = vunpack.c.l.b16 %v1544
        %v1624 = vunpack.c.l.b16 %v1545
        %v1625 = vunpack.c.l.b16 %v1546
        %v1626 = vunpack.c.l.b16 %v1547
        %v1627 = vunpack.c.l.b16 %v1548
        %v1628 = vunpack.c.l.b16 %v1549
        %v1629 = vunpack.c.l.b16 %v1550
        %v1630 = vunpack.c.l.b16 %v1551
        %v1631 = vunpack.c.l.b16 %v1552
        %v1632 = vunpack.c.l.b16 %v1553
        %v1633 = vunpack.c.l.b16 %v1554
        %v1634 = vunpack.c.l.b16 %v1555
        %v1635 = vunpack.c.l.b16 %v1556
        %v1636 = vunpack.c.l.b16 %v1557
        %v1637 = vunpack.c.l.b16 %v1558
        %v1638 = vpack.c.b16 %v1603, %v1602
        %v1639 = vpack.c.b16 %v1605, %v1604
        %v1640 = vpack.c.b16 %v1607, %v1606
        %v1641 = vpack.c.b16 %v1609, %v1608
        %v1642 = vpack.c.b16 %v1611, %v1610
        %v1643 = vpack.c.b16 %v1613, %v1612
        %v1644 = vpack.c.b16 %v1615, %v1614
        %v1645 = vpack.c.b16 %v1617, %v1616
        %v1646 = vpack.c.b16 %v1619, %v1618
        %v1647 = vpack.c.b16 %v1621, %v1620
        %v1648 = vpack.c.b16 %v1623, %v1622
        %v1649 = vpack.c.b16 %v1625, %v1624
        %v1650 = vpack.c.b16 %v1627, %v1626
        %v1651 = vpack.c.b16 %v1629, %v1628
        %v1652 = vpack.c.b16 %v1631, %v1630
        %v1653 = vpack.c.b16 %v1633, %v1632
        %v1654 = vpack.c.b16 %v1635, %v1634
        %v1655 = vpack.c.b16 %v1637, %v1636
        %v1675 = vsel %vm192, %v1477, 0
        %v1678 = vsel %vm192, %v1480, 0
        %v1681 = vsel %vm192, %v1483, 0
        %v1684 = vsel %vm192, %v1486, 0
        %v1687 = vsel %vm192, %v1489, 0
        %v1690 = vsel %vm192, %v1492, 0
        %v1693 = vsel %vm192, %v1495, 0
        %v1696 = vsel %vm192, %v1498, 0
        %v1699 = vsel %vm192, %v1501, 0
        %v1702 = vsel %vm192, %v1504, 0
        %v1705 = vsel %vm192, %v1507, 0
        %v1708 = vsel %vm192, %v1510, 0
        %v1711 = vsel %vm192, %v1513, 0
        %v1714 = vsel %vm192, %v1516, 0
        %v1717 = vsel %vm192, %v1519, 0
        %v1720 = vsel %vm192, %v1522, 0
        %1722 = vmatprep.subr.bf16.mxu0 0
        %1723 = vmatpush1.bf16.msra.mxu0 %v1638
        %1724 = vmatprep.subr.bf16.mxu0 0
        %1725 = vmatpush1.bf16.msra.mxu0 %v1639
        %1726 = vmatprep.subr.bf16.mxu0 0
        %1727 = vmatpush1.bf16.msra.mxu0 %v1640
        %1728 = vmatprep.subr.bf16.mxu0 0
        %1729 = vmatpush1.bf16.msra.mxu0 %v1641
        %1730 = vmatprep.subr.bf16.mxu0 0
        %1731 = vmatpush1.bf16.msra.mxu0 %v1642
        %1732 = vmatprep.subr.bf16.mxu0 0
        %1733 = vmatpush1.bf16.msra.mxu0 %v1643
        %1734 = vmatprep.subr.bf16.mxu0 0
        %1735 = vmatpush1.bf16.msra.mxu0 %v1644
        %1736 = vmatprep.subr.bf16.mxu0 0
        %1737 = vmatpush1.bf16.msra.mxu0 %v1645
        %1738 = vmatprep.subr.bf16.mxu0 0
        %1739 = vmatpush1.bf16.msra.mxu0 %v1646
        %1740 = vmatprep.subr.bf16.mxu0 0
        %1741 = vmatpush1.bf16.msra.mxu0 %v1647
        %1742 = vmatprep.subr.bf16.mxu0 0
        %1743 = vmatpush1.bf16.msra.mxu0 %v1648
        %1744 = vmatprep.subr.bf16.mxu0 0
        %1745 = vmatpush1.bf16.msra.mxu0 %v1649
        %1746 = vmatprep.subr.bf16.mxu0 0
        %1747 = vmatpush1.bf16.msra.mxu0 %v1650
        %1748 = vmatprep.subr.bf16.mxu0 0
        %1749 = vmatpush1.bf16.msra.mxu0 %v1651
        %1750 = vmatprep.subr.bf16.mxu0 0
        %1751 = vmatpush1.bf16.msra.mxu0 %v1652
        %1752 = vmatprep.subr.bf16.mxu0 0
        %1753 = vmatpush1.bf16.msra.mxu0 %v1653
        %1754 = vmatprep.mubr.bf16.mxu0 %v1476
        %1755 = vmatmul.mubr.bf16.gmra.mrb[0].mxu0 %v1475
        %v1756 = vpop.f32.mrb[0].mxu0
        %v1757 = vadd.f32 %v1564, %v1756
        %v1758 = vpop.f32.mrb[0].mxu0
        %v1759 = vpop.f32.mrb[0].mxu0
        %v1760 = vadd.f32 %v1564, %v1759
        %v1761 = vpop.f32.mrb[0].mxu0
        %1762 = vmatprep.mubr.bf16.mxu0 %v1479
        %1763 = vmatmul.mubr.bf16.gmra.mrb[0].mxu0 %v1478
        %v1764 = vpop.f32.mrb[0].mxu0
        %v1765 = vadd.f32 %v1564, %v1764
        %v1766 = vpop.f32.mrb[0].mxu0
        %v1767 = vpop.f32.mrb[0].mxu0
        %v1768 = vadd.f32 %v1564, %v1767
        %v1769 = vpop.f32.mrb[0].mxu0
        %1770 = vmatprep.mubr.bf16.mxu0 %v1482
        %1771 = vmatmul.mubr.bf16.gmra.mrb[0].mxu0 %v1481
        %v1772 = vpop.f32.mrb[0].mxu0
        %v1773 = vadd.f32 %v1564, %v1772
        %v1774 = vpop.f32.mrb[0].mxu0
        %v1775 = vpop.f32.mrb[0].mxu0
        %v1776 = vadd.f32 %v1564, %v1775
        %v1777 = vpop.f32.mrb[0].mxu0
        %1778 = vmatprep.mubr.bf16.mxu0 %v1485
        %1779 = vmatmul.mubr.bf16.gmra.mrb[0].mxu0 %v1484
        %v1780 = vpop.f32.mrb[0].mxu0
        %v1781 = vadd.f32 %v1564, %v1780
        %v1782 = vpop.f32.mrb[0].mxu0
        %v1783 = vpop.f32.mrb[0].mxu0
        %v1784 = vadd.f32 %v1564, %v1783
        %v1785 = vpop.f32.mrb[0].mxu0
        %1786 = vmatprep.mubr.bf16.mxu0 %v1488
        %1787 = vmatmul.mubr.bf16.gmra.mrb[0].mxu0 %v1487
        %v1788 = vpop.f32.mrb[0].mxu0
        %v1789 = vadd.f32 %v1564, %v1788
        %v1790 = vpop.f32.mrb[0].mxu0
        %v1791 = vpop.f32.mrb[0].mxu0
        %v1792 = vadd.f32 %v1564, %v1791
        %v1793 = vpop.f32.mrb[0].mxu0
        %1794 = vmatprep.mubr.bf16.mxu0 %v1491
        %1795 = vmatmul.mubr.bf16.gmra.mrb[0].mxu0 %v1490
        %v1796 = vpop.f32.mrb[0].mxu0
        %v1797 = vadd.f32 %v1564, %v1796
        %v1798 = vpop.f32.mrb[0].mxu0
        %v1799 = vpop.f32.mrb[0].mxu0
        %v1800 = vadd.f32 %v1564, %v1799
        %v1801 = vpop.f32.mrb[0].mxu0
        %1802 = vmatprep.mubr.bf16.mxu0 %v1494
        %1803 = vmatmul.mubr.bf16.gmra.mrb[0].mxu0 %v1493
        %v1804 = vpop.f32.mrb[0].mxu0
        %v1805 = vadd.f32 %v1564, %v1804
        %v1806 = vpop.f32.mrb[0].mxu0
        %v1807 = vpop.f32.mrb[0].mxu0
        %v1808 = vadd.f32 %v1564, %v1807
        %v1809 = vpop.f32.mrb[0].mxu0
        %1810 = vmatprep.mubr.bf16.mxu0 %v1497
        %1811 = vmatmul.mubr.bf16.gmra.mrb[0].mxu0 %v1496
        %v1812 = vpop.f32.mrb[0].mxu0
        %v1813 = vadd.f32 %v1564, %v1812
        %v1814 = vpop.f32.mrb[0].mxu0
        %v1815 = vpop.f32.mrb[0].mxu0
        %v1816 = vadd.f32 %v1564, %v1815
        %v1817 = vpop.f32.mrb[0].mxu0
        %1818 = vmatprep.mubr.bf16.mxu0 %v1500
        %1819 = vmatmul.mubr.bf16.gmra.mrb[0].mxu0 %v1499
        %v1820 = vpop.f32.mrb[0].mxu0
        %v1821 = vadd.f32 %v1564, %v1820
        %v1822 = vpop.f32.mrb[0].mxu0
        %v1823 = vpop.f32.mrb[0].mxu0
        %v1824 = vadd.f32 %v1564, %v1823
        %v1825 = vpop.f32.mrb[0].mxu0
        %1826 = vmatprep.mubr.bf16.mxu0 %v1503
        %1827 = vmatmul.mubr.bf16.gmra.mrb[0].mxu0 %v1502
        %v1828 = vpop.f32.mrb[0].mxu0
        %v1829 = vadd.f32 %v1564, %v1828
        %v1830 = vpop.f32.mrb[0].mxu0
        %v1831 = vpop.f32.mrb[0].mxu0
        %v1832 = vadd.f32 %v1564, %v1831
        %v1833 = vpop.f32.mrb[0].mxu0
        %1834 = vmatprep.mubr.bf16.mxu0 %v1506
        %1835 = vmatmul.mubr.bf16.gmra.mrb[0].mxu0 %v1505
        %v1836 = vpop.f32.mrb[0].mxu0
        %v1837 = vadd.f32 %v1564, %v1836
        %v1838 = vpop.f32.mrb[0].mxu0
        %v1839 = vpop.f32.mrb[0].mxu0
        %v1840 = vadd.f32 %v1564, %v1839
        %v1841 = vpop.f32.mrb[0].mxu0
        %1842 = vmatprep.mubr.bf16.mxu0 %v1509
        %1843 = vmatmul.mubr.bf16.gmra.mrb[0].mxu0 %v1508
        %v1844 = vpop.f32.mrb[0].mxu0
        %v1845 = vadd.f32 %v1564, %v1844
        %v1846 = vpop.f32.mrb[0].mxu0
        %v1847 = vpop.f32.mrb[0].mxu0
        %v1848 = vadd.f32 %v1564, %v1847
        %v1849 = vpop.f32.mrb[0].mxu0
        %1850 = vmatprep.mubr.bf16.mxu0 %v1512
        %1851 = vmatmul.mubr.bf16.gmra.mrb[0].mxu0 %v1511
        %v1852 = vpop.f32.mrb[0].mxu0
        %v1853 = vadd.f32 %v1564, %v1852
        %v1854 = vpop.f32.mrb[0].mxu0
        %v1855 = vpop.f32.mrb[0].mxu0
        %v1856 = vadd.f32 %v1564, %v1855
        %v1857 = vpop.f32.mrb[0].mxu0
        %1858 = vmatprep.mubr.bf16.mxu0 %v1515
        %1859 = vmatmul.mubr.bf16.gmra.mrb[0].mxu0 %v1514
        %v1860 = vpop.f32.mrb[0].mxu0
        %v1861 = vadd.f32 %v1564, %v1860
        %v1862 = vpop.f32.mrb[0].mxu0
        %v1863 = vpop.f32.mrb[0].mxu0
        %v1864 = vadd.f32 %v1564, %v1863
        %v1865 = vpop.f32.mrb[0].mxu0
        %1866 = vmatprep.mubr.bf16.mxu0 %v1518
        %1867 = vmatmul.mubr.bf16.gmra.mrb[0].mxu0 %v1517
        %v1868 = vpop.f32.mrb[0].mxu0
        %v1869 = vadd.f32 %v1564, %v1868
        %v1870 = vpop.f32.mrb[0].mxu0
        %v1871 = vpop.f32.mrb[0].mxu0
        %v1872 = vadd.f32 %v1564, %v1871
        %v1873 = vpop.f32.mrb[0].mxu0
        %1874 = vmatprep.mubr.bf16.mxu0 %v1521
        %1875 = vmatmul.mubr.bf16.gmra.mrb[0].mxu0 %v1520
        %v1876 = vpop.f32.mrb[0].mxu0
        %v1877 = vadd.f32 %v1564, %v1876
        %v1878 = vpop.f32.mrb[0].mxu0
        %v1879 = vpop.f32.mrb[0].mxu0
        %v1880 = vadd.f32 %v1564, %v1879
        %v1881 = vpop.f32.mrb[0].mxu0
        %1882 = vdwg.mxu0
        %1883 = vmatprep.subr.bf16.mxu0 0
        %1884 = vmatpush1.bf16.msra.mxu0 %v1654
        %1885 = vmatprep.subr.bf16.mxu0 0
        %1886 = vmatpush1.bf16.msra.mxu0 %v1655
        %1887 = vmatprep.subr.bf16.mxu0 0
        %1888 = vmatpush1.bf16.msra.mxu0 0
        %1889 = vmatprep.subr.bf16.mxu0 0
        %1890 = vmatpush1.bf16.msra.mxu0 0
        %1891 = vmatprep.subr.bf16.mxu0 0
        %1892 = vmatpush1.bf16.msra.mxu0 0
        %1893 = vmatprep.subr.bf16.mxu0 0
        %1894 = vmatpush1.bf16.msra.mxu0 0
        %1895 = vmatprep.subr.bf16.mxu0 0
        %1896 = vmatpush1.bf16.msra.mxu0 0
        %1897 = vmatprep.subr.bf16.mxu0 0
        %1898 = vmatpush1.bf16.msra.mxu0 0
        %1899 = vmatprep.subr.bf16.mxu0 0
        %1900 = vmatpush1.bf16.msra.mxu0 0
        %1901 = vmatprep.subr.bf16.mxu0 0
        %1902 = vmatpush1.bf16.msra.mxu0 0
        %1903 = vmatprep.subr.bf16.mxu0 0
        %1904 = vmatpush1.bf16.msra.mxu0 0
        %1905 = vmatprep.subr.bf16.mxu0 0
        %1906 = vmatpush1.bf16.msra.mxu0 0
        %1907 = vmatprep.subr.bf16.mxu0 0
        %1908 = vmatpush1.bf16.msra.mxu0 0
        %1909 = vmatprep.subr.bf16.mxu0 0
        %1910 = vmatpush1.bf16.msra.mxu0 0
        %1911 = vmatprep.subr.bf16.mxu0 0
        %1912 = vmatpush1.bf16.msra.mxu0 0
        %1913 = vmatprep.subr.bf16.mxu0 0
        %1914 = vmatpush1.bf16.msra.mxu0 0
        %1915 = vmatprep.mubr.bf16.mxu0 0
        %1916 = vmatmul.mubr.bf16.gmra.mrb[0].mxu0 %v1675
        %v1917 = vpop.f32.mrb[0].mxu0
        %v1918 = vadd.f32 %v1757, %v1917
        %v1919 = vpop.f32.mrb[0].mxu0
        %v1920 = vpop.f32.mrb[0].mxu0
        %v1921 = vadd.f32 %v1760, %v1920
        %v1922 = vpop.f32.mrb[0].mxu0
        %1923 = vmatprep.mubr.bf16.mxu0 0
        %1924 = vmatmul.mubr.bf16.gmra.mrb[0].mxu0 %v1678
        %v1925 = vpop.f32.mrb[0].mxu0
        %v1926 = vadd.f32 %v1765, %v1925
        %v1927 = vpop.f32.mrb[0].mxu0
        %v1928 = vpop.f32.mrb[0].mxu0
        %v1929 = vadd.f32 %v1768, %v1928
        %v1930 = vpop.f32.mrb[0].mxu0
        %1931 = vmatprep.mubr.bf16.mxu0 0
        %1932 = vmatmul.mubr.bf16.gmra.mrb[0].mxu0 %v1681
        %v1933 = vpop.f32.mrb[0].mxu0
        %v1934 = vadd.f32 %v1773, %v1933
        %v1935 = vpop.f32.mrb[0].mxu0
        %v1936 = vpop.f32.mrb[0].mxu0
        %v1937 = vadd.f32 %v1776, %v1936
        %v1938 = vpop.f32.mrb[0].mxu0
        %1939 = vmatprep.mubr.bf16.mxu0 0
        %1940 = vmatmul.mubr.bf16.gmra.mrb[0].mxu0 %v1684
        %v1941 = vpop.f32.mrb[0].mxu0
        %v1942 = vadd.f32 %v1781, %v1941
        %v1943 = vpop.f32.mrb[0].mxu0
        %v1944 = vpop.f32.mrb[0].mxu0
        %v1945 = vadd.f32 %v1784, %v1944
        %v1946 = vpop.f32.mrb[0].mxu0
        %1947 = vmatprep.mubr.bf16.mxu0 0
        %1948 = vmatmul.mubr.bf16.gmra.mrb[0].mxu0 %v1687
        %v1949 = vpop.f32.mrb[0].mxu0
        %v1950 = vadd.f32 %v1789, %v1949
        %v1951 = vpop.f32.mrb[0].mxu0
        %v1952 = vpop.f32.mrb[0].mxu0
        %v1953 = vadd.f32 %v1792, %v1952
        %v1954 = vpop.f32.mrb[0].mxu0
        %1955 = vmatprep.mubr.bf16.mxu0 0
        %1956 = vmatmul.mubr.bf16.gmra.mrb[0].mxu0 %v1690
        %v1957 = vpop.f32.mrb[0].mxu0
        %v1958 = vadd.f32 %v1797, %v1957
        %v1959 = vpop.f32.mrb[0].mxu0
        %v1960 = vpop.f32.mrb[0].mxu0
        %v1961 = vadd.f32 %v1800, %v1960
        %v1962 = vpop.f32.mrb[0].mxu0
        %1963 = vmatprep.mubr.bf16.mxu0 0
        %1964 = vmatmul.mubr.bf16.gmra.mrb[0].mxu0 %v1693
        %v1965 = vpop.f32.mrb[0].mxu0
        %v1966 = vadd.f32 %v1805, %v1965
        %v1967 = vpop.f32.mrb[0].mxu0
        %v1968 = vpop.f32.mrb[0].mxu0
        %v1969 = vadd.f32 %v1808, %v1968
        %v1970 = vpop.f32.mrb[0].mxu0
        %1971 = vmatprep.mubr.bf16.mxu0 0
        %1972 = vmatmul.mubr.bf16.gmra.mrb[0].mxu0 %v1696
        %v1973 = vpop.f32.mrb[0].mxu0
        %v1974 = vadd.f32 %v1813, %v1973
        %v1975 = vpop.f32.mrb[0].mxu0
        %v1976 = vpop.f32.mrb[0].mxu0
        %v1977 = vadd.f32 %v1816, %v1976
        %v1978 = vpop.f32.mrb[0].mxu0
        %1979 = vmatprep.mubr.bf16.mxu0 0
        %1980 = vmatmul.mubr.bf16.gmra.mrb[0].mxu0 %v1699
        %v1981 = vpop.f32.mrb[0].mxu0
        %v1982 = vadd.f32 %v1821, %v1981
        %v1983 = vpop.f32.mrb[0].mxu0
        %v1984 = vpop.f32.mrb[0].mxu0
        %v1985 = vadd.f32 %v1824, %v1984
        %v1986 = vpop.f32.mrb[0].mxu0
        %1987 = vmatprep.mubr.bf16.mxu0 0
        %1988 = vmatmul.mubr.bf16.gmra.mrb[0].mxu0 %v1702
        %v1989 = vpop.f32.mrb[0].mxu0
        %v1990 = vadd.f32 %v1829, %v1989
        %v1991 = vpop.f32.mrb[0].mxu0
        %v1992 = vpop.f32.mrb[0].mxu0
        %v1993 = vadd.f32 %v1832, %v1992
        %v1994 = vpop.f32.mrb[0].mxu0
        %1995 = vmatprep.mubr.bf16.mxu0 0
        %1996 = vmatmul.mubr.bf16.gmra.mrb[0].mxu0 %v1705
        %v1997 = vpop.f32.mrb[0].mxu0
        %v1998 = vadd.f32 %v1837, %v1997
        %v1999 = vpop.f32.mrb[0].mxu0
        %v2000 = vpop.f32.mrb[0].mxu0
        %v2001 = vadd.f32 %v1840, %v2000
        %v2002 = vpop.f32.mrb[0].mxu0
        %2003 = vmatprep.mubr.bf16.mxu0 0
        %2004 = vmatmul.mubr.bf16.gmra.mrb[0].mxu0 %v1708
        %v2005 = vpop.f32.mrb[0].mxu0
        %v2006 = vadd.f32 %v1845, %v2005
        %v2007 = vpop.f32.mrb[0].mxu0
        %v2008 = vpop.f32.mrb[0].mxu0
        %v2009 = vadd.f32 %v1848, %v2008
        %v2010 = vpop.f32.mrb[0].mxu0
        %2011 = vmatprep.mubr.bf16.mxu0 0
        %2012 = vmatmul.mubr.bf16.gmra.mrb[0].mxu0 %v1711
        %v2013 = vpop.f32.mrb[0].mxu0
        %v2014 = vadd.f32 %v1853, %v2013
        %v2015 = vpop.f32.mrb[0].mxu0
        %v2016 = vpop.f32.mrb[0].mxu0
        %v2017 = vadd.f32 %v1856, %v2016
        %v2018 = vpop.f32.mrb[0].mxu0
        %2019 = vmatprep.mubr.bf16.mxu0 0
        %2020 = vmatmul.mubr.bf16.gmra.mrb[0].mxu0 %v1714
        %v2021 = vpop.f32.mrb[0].mxu0
        %v2022 = vadd.f32 %v1861, %v2021
        %v2023 = vpop.f32.mrb[0].mxu0
        %v2024 = vpop.f32.mrb[0].mxu0
        %v2025 = vadd.f32 %v1864, %v2024
        %v2026 = vpop.f32.mrb[0].mxu0
        %2027 = vmatprep.mubr.bf16.mxu0 0
        %2028 = vmatmul.mubr.bf16.gmra.mrb[0].mxu0 %v1717
        %v2029 = vpop.f32.mrb[0].mxu0
        %v2030 = vadd.f32 %v1869, %v2029
        %v2031 = vpop.f32.mrb[0].mxu0
        %v2032 = vpop.f32.mrb[0].mxu0
        %v2033 = vadd.f32 %v1872, %v2032
        %v2034 = vpop.f32.mrb[0].mxu0
        %2035 = vmatprep.mubr.bf16.mxu0 0
        %2036 = vmatmul.mubr.bf16.gmra.mrb[0].mxu0 %v1720
        %v2037 = vpop.f32.mrb[0].mxu0
        %v2038 = vadd.f32 %v1877, %v2037
        %v2039 = vpop.f32.mrb[0].mxu0
        %v2040 = vpop.f32.mrb[0].mxu0
        %v2041 = vadd.f32 %v1880, %v2040
        %v2042 = vpop.f32.mrb[0].mxu0
        %2043 = vdwg.mxu0
        %vm2044 = vcmp.ge.f32.partialorder %v1918, 0.0
        %vm2045 = vcmp.ge.f32.partialorder %v1921, 0.0
        %vm2046 = vcmp.ge.f32.partialorder %v1926, 0.0
        %vm2047 = vcmp.ge.f32.partialorder %v1929, 0.0
        %vm2048 = vcmp.ge.f32.partialorder %v1934, 0.0
        %vm2049 = vcmp.ge.f32.partialorder %v1937, 0.0
        %vm2050 = vcmp.ge.f32.partialorder %v1942, 0.0
        %vm2051 = vcmp.ge.f32.partialorder %v1945, 0.0
        %vm2052 = vcmp.ge.f32.partialorder %v1950, 0.0
        %vm2053 = vcmp.ge.f32.partialorder %v1953, 0.0
        %vm2054 = vcmp.ge.f32.partialorder %v1958, 0.0
        %vm2055 = vcmp.ge.f32.partialorder %v1961, 0.0
        %vm2056 = vcmp.ge.f32.partialorder %v1966, 0.0
        %vm2057 = vcmp.ge.f32.partialorder %v1969, 0.0
        %vm2058 = vcmp.ge.f32.partialorder %v1974, 0.0
        %vm2059 = vcmp.ge.f32.partialorder %v1977, 0.0
        %vm2060 = vcmp.ge.f32.partialorder %v1982, 0.0
        %vm2061 = vcmp.ge.f32.partialorder %v1985, 0.0
        %vm2062 = vcmp.ge.f32.partialorder %v1990, 0.0
        %vm2063 = vcmp.ge.f32.partialorder %v1993, 0.0
        %vm2064 = vcmp.ge.f32.partialorder %v1998, 0.0
        %vm2065 = vcmp.ge.f32.partialorder %v2001, 0.0
        %vm2066 = vcmp.ge.f32.partialorder %v2006, 0.0
        %vm2067 = vcmp.ge.f32.partialorder %v2009, 0.0
        %vm2068 = vcmp.ge.f32.partialorder %v2014, 0.0
        %vm2069 = vcmp.ge.f32.partialorder %v2017, 0.0
        %vm2070 = vcmp.ge.f32.partialorder %v2022, 0.0
        %vm2071 = vcmp.ge.f32.partialorder %v2025, 0.0
        %vm2072 = vcmp.ge.f32.partialorder %v2030, 0.0
        %vm2073 = vcmp.ge.f32.partialorder %v2033, 0.0
        %vm2074 = vcmp.ge.f32.partialorder %v2038, 0.0
        %vm2075 = vcmp.ge.f32.partialorder %v2041, 0.0
        %v2076 = vmul.f32 %v1918, 0.2
        %v2077 = vmul.f32 %v1921, 0.2
        %v2078 = vmul.f32 %v1926, 0.2
        %v2079 = vmul.f32 %v1929, 0.2
        %v2080 = vmul.f32 %v1934, 0.2
        %v2081 = vmul.f32 %v1937, 0.2
        %v2082 = vmul.f32 %v1942, 0.2
        %v2083 = vmul.f32 %v1945, 0.2
        %v2084 = vmul.f32 %v1950, 0.2
        %v2085 = vmul.f32 %v1953, 0.2
        %v2086 = vmul.f32 %v1958, 0.2
        %v2087 = vmul.f32 %v1961, 0.2
        %v2088 = vmul.f32 %v1966, 0.2
        %v2089 = vmul.f32 %v1969, 0.2
        %v2090 = vmul.f32 %v1974, 0.2
        %v2091 = vmul.f32 %v1977, 0.2
        %v2092 = vmul.f32 %v1982, 0.2
        %v2093 = vmul.f32 %v1985, 0.2
        %v2094 = vmul.f32 %v1990, 0.2
        %v2095 = vmul.f32 %v1993, 0.2
        %v2096 = vmul.f32 %v1998, 0.2
        %v2097 = vmul.f32 %v2001, 0.2
        %v2098 = vmul.f32 %v2006, 0.2
        %v2099 = vmul.f32 %v2009, 0.2
        %v2100 = vmul.f32 %v2014, 0.2
        %v2101 = vmul.f32 %v2017, 0.2
        %v2102 = vmul.f32 %v2022, 0.2
        %v2103 = vmul.f32 %v2025, 0.2
        %v2104 = vmul.f32 %v2030, 0.2
        %v2105 = vmul.f32 %v2033, 0.2
        %v2106 = vmul.f32 %v2038, 0.2
        %v2107 = vmul.f32 %v2041, 0.2
        %v2108 = vsel %vm2044, %v1918, %v2076
        %v2109 = vsel %vm2045, %v1921, %v2077
        %v2110 = vsel %vm2046, %v1926, %v2078
        %v2111 = vsel %vm2047, %v1929, %v2079
        %v2112 = vsel %vm2048, %v1934, %v2080
        %v2113 = vsel %vm2049, %v1937, %v2081
        %v2114 = vsel %vm2050, %v1942, %v2082
        %v2115 = vsel %vm2051, %v1945, %v2083
        %v2116 = vsel %vm2052, %v1950, %v2084
        %v2117 = vsel %vm2053, %v1953, %v2085
        %v2118 = vsel %vm2054, %v1958, %v2086
        %v2119 = vsel %vm2055, %v1961, %v2087
        %v2120 = vsel %vm2056, %v1966, %v2088
        %v2121 = vsel %vm2057, %v1969, %v2089
        %v2122 = vsel %vm2058, %v1974, %v2090
        %v2123 = vsel %vm2059, %v1977, %v2091
        %v2124 = vsel %vm2060, %v1982, %v2092
        %v2125 = vsel %vm2061, %v1985, %v2093
        %v2126 = vsel %vm2062, %v1990, %v2094
        %v2127 = vsel %vm2063, %v1993, %v2095
        %v2128 = vsel %vm2064, %v1998, %v2096
        %v2129 = vsel %vm2065, %v2001, %v2097
        %v2130 = vsel %vm2066, %v2006, %v2098
        %v2131 = vsel %vm2067, %v2009, %v2099
        %v2132 = vsel %vm2068, %v2014, %v2100
        %v2133 = vsel %vm2069, %v2017, %v2101
        %v2134 = vsel %vm2070, %v2022, %v2102
        %v2135 = vsel %vm2071, %v2025, %v2103
        %v2136 = vsel %vm2072, %v2030, %v2104
        %v2137 = vsel %vm2073, %v2033, %v2105
        %v2138 = vsel %vm2074, %v2038, %v2106
        %v2139 = vsel %vm2075, %v2041, %v2107
        %2140 = vst.msk [vmem:[%s188] sm:$0xff] %vm192, %v2108
        %2141 = vst.msk [vmem:[%s188 + $0x8] sm:$0xff] %vm192, %v2109
        %2142 = vst.msk [vmem:[%s188 + $0x10] sm:$0xff] %vm192, %v2110
        %2143 = vst.msk [vmem:[%s188 + $0x18] sm:$0xff] %vm192, %v2111
        %2144 = vst.msk [vmem:[%s188 + $0x20] sm:$0xff] %vm192, %v2112
        %2145 = vst.msk [vmem:[%s188 + $0x28] sm:$0xff] %vm192, %v2113
        %2146 = vst.msk [vmem:[%s188 + $0x30] sm:$0xff] %vm192, %v2114
        %2147 = vst.msk [vmem:[%s188 + $0x38] sm:$0xff] %vm192, %v2115
        %2148 = vst.msk [vmem:[%s188 + $0x40] sm:$0xff] %vm192, %v2116
        %2149 = vst.msk [vmem:[%s188 + $0x48] sm:$0xff] %vm192, %v2117
        %2150 = vst.msk [vmem:[%s188 + $0x50] sm:$0xff] %vm192, %v2118
        %2151 = vst.msk [vmem:[%s188 + $0x58] sm:$0xff] %vm192, %v2119
        %2152 = vst.msk [vmem:[%s188 + $0x60] sm:$0xff] %vm192, %v2120
        %2153 = vst.msk [vmem:[%s188 + $0x68] sm:$0xff] %vm192, %v2121
        %2154 = vst.msk [vmem:[%s188 + $0x70] sm:$0xff] %vm192, %v2122
        %2155 = vst.msk [vmem:[%s188 + $0x78] sm:$0xff] %vm192, %v2123
        %2156 = vst.msk [vmem:[%s188 + $0x80] sm:$0xff] %vm192, %v2124
        %2157 = vst.msk [vmem:[%s188 + $0x88] sm:$0xff] %vm192, %v2125
        %2158 = vst.msk [vmem:[%s188 + $0x90] sm:$0xff] %vm192, %v2126
        %2159 = vst.msk [vmem:[%s188 + $0x98] sm:$0xff] %vm192, %v2127
        %2160 = vst.msk [vmem:[%s188 + $0xa0] sm:$0xff] %vm192, %v2128
        %2161 = vst.msk [vmem:[%s188 + $0xa8] sm:$0xff] %vm192, %v2129
        %2162 = vst.msk [vmem:[%s188 + $0xb0] sm:$0xff] %vm192, %v2130
        %2163 = vst.msk [vmem:[%s188 + $0xb8] sm:$0xff] %vm192, %v2131
        %2164 = vst.msk [vmem:[%s188 + $0xc0] sm:$0xff] %vm192, %v2132
        %2165 = vst.msk [vmem:[%s188 + $0xc8] sm:$0xff] %vm192, %v2133
        %2166 = vst.msk [vmem:[%s188 + $0xd0] sm:$0xff] %vm192, %v2134
        %2167 = vst.msk [vmem:[%s188 + $0xd8] sm:$0xff] %vm192, %v2135
        %2168 = vst.msk [vmem:[%s188 + $0xe0] sm:$0xff] %vm192, %v2136
        %2169 = vst.msk [vmem:[%s188 + $0xe8] sm:$0xff] %vm192, %v2137
        %2170 = vst.msk [vmem:[%s188 + $0xf0] sm:$0xff] %vm192, %v2138
        %2171 = vst.msk [vmem:[%s188 + $0xf8] sm:$0xff] %vm192, %v2139
        %s2172 = sand.u32 %s96, 1
        %s2173 = scalar_lea.sflag [#allocation5], %s2172
        %s2174 = sand.u32 %s96, 1
        %s2175 = smul.addr %s2174, 256
        %s2176 = scalar_lea.vmem [#allocation6], %s2175
        // Predicated region
        $region37: #{tpu_custom_call.1} parent=31 // pred_check
          %p2177 = pneg %p106
        $region38: #{tpu_custom_call.1} parent=31 // pred_check_branch
          %2179 = sbr.rel (%p2177) target = $region40
        $region39: #{tpu_custom_call.1} parent=31 // pred_region
          %s2181 = ssub.s32 4096, 4096
          %2182 = vsyncadd %s2173, %s2181
          %s2183 = smul.addr %s20, 32
          %s2184 = smul.addr %s2183, 128
          %s2185 = scalar_lea.hbm %s3, %s2184
          %s2186 = sshll.u32 %s2176, 4
          %s2187 = int_to_ptr.vmem [resolvable:$true] %s2186
          %2192 = dma.vmem_to_hbm [thread:$0]  %s2187, 4096, %s2185, %s2173, 128, 128, 8
        $region40: #{tpu_custom_call.1} parent=31 // pred_fallthru
          _
      $region32: #{tpu_custom_call.1} parent=5 // pred_fallthru
        _
      %p2193 = scmp.le.s32.totalorder 2, %s15
      // Predicated region
      $region41: #{tpu_custom_call.1} parent=5 // pred_check
        %p2194 = pneg %p2193
      $region42: #{tpu_custom_call.1} parent=5 // pred_check_branch
        %2196 = sbr.rel (%p2194) target = $region44
      $region43: #{tpu_custom_call.1} parent=5 // pred_region
        %s2197 = ssub.s32 %s15, 2
        // Predicated region
        $region45: #{tpu_custom_call.1} parent=43 // pred_check
          %p2198 = pneg %p112
        $region46: #{tpu_custom_call.1} parent=43 // pred_check_branch
          %2200 = sbr.rel (%p2198) target = $region48
        $region47: #{tpu_custom_call.1} parent=43 // pred_region
          %s2201 = sand.u32 %s97, 1
          %s2202 = scalar_lea.sflag [#allocation5], %s2201
          %s2203 = sand.u32 %s97, 1
          %s2204 = smul.addr %s2203, 256
          %s2205 = scalar_lea.vmem [#allocation6], %s2204
          %2206 = dma.done %s2202, 4096
        $region48: #{tpu_custom_call.1} parent=43 // pred_fallthru
          _
      $region44: #{tpu_custom_call.1} parent=5 // pred_fallthru
        _
    $region6: #{tpu_custom_call.1} parent=1 // loop_footer
      %s19 = sadd.s32 1, %s15
    $region7: #{tpu_custom_call.1} parent=1 // loop_footer_branch
      %14 = sbr.rel target = $region3
    $region8: #{tpu_custom_call.1} parent=1 // loop_exit
      _
    %2207 = vsyncpa [#allocation4], 1
    %s2208 = scalar_lea.sflag [#allocation4], 1
    %2209 = vsyncpa %s2208, 1
    %2210 = vsyncpa [#allocation5], 1
    %s2211 = scalar_lea.sflag [#allocation5], 1
    %2212 = vsyncpa %s2211, 1

</llo_original>
